<compile_context>
chip_gen: v7x
topology: tpu7x:2x2x1
jax: 0.10.0
libtpu: 0.0.40
codegen_flags: <defaults>
</compile_context>

<pallas_src>
import jax
import jax.numpy as jnp
from jax.experimental import pallas as pl
from jax.experimental.pallas import tpu as pltpu

LANES = 128          # pad all channel/feature dims to one full lane tile
NUM_CLASSES = 10
KSIZE = 5


def _vmem():
    return pl.BlockSpec(memory_space=pltpu.MemorySpace.VMEM)


# ------------------------------ Pallas kernels ------------------------------ #

def conv_pool_relu_kernel(p_ref, w_ref, b_ref, o_ref):
    """conv (im2col matmul) + 2x2 max-pool + ReLU, lane-dense output.

    p_ref: (4*R, K) bf16 -- the 4 pool sub-positions stacked along rows (f outermost)
    w_ref: (K, 128) bf16 -- Cout zero-padded to 128 lanes
    b_ref: (1, 128) f32
    o_ref: (R, 128) f32
    """
    r = jnp.dot(p_ref[...], w_ref[...], preferred_element_type=jnp.float32)  # one MXU push
    R = o_ref.shape[0]
    m = jnp.maximum(jnp.maximum(r[0:R], r[R:2 * R]),
                    jnp.maximum(r[2 * R:3 * R], r[3 * R:4 * R]))             # VPU max-pool
    o_ref[...] = jnp.maximum(m + b_ref[...], 0.0)


def conv2_mlp_kernel(p_ref, w2_ref, b2_ref, wf1_ref, bf1_ref, wf2_ref, bf2_ref,
                     logp_ref, h_ref):
    """Fused conv2+pool+relu -> flatten -> fc1+relu -> fc2 -> log_softmax.

    p_ref:   (4*S*B, 250) bf16, rows ordered (pool-pos f, spatial s=ph*5+pw, batch b)
    w2_ref:  (250, 128) bf16     b2_ref:  (1, 128) f32
    wf1_ref: (S*128, 128) bf16 (rows permuted so the NHWC flatten == view(-1, 500))
    bf1_ref: (1, 128) f32
    wf2_ref: (128, 128) bf16     bf2_ref: (1, 128) f32
    logp_ref: (B, 128) f32 (cols >= NUM_CLASSES are padding)
    h_ref:    (B, 128) f32 (cols >= 50 are padding)
    """
    B = h_ref.shape[0]
    R = p_ref.shape[0] // 4            # = S * B
    S = R // B

    # conv2 (+ Dropout2d identity, eval mode) as one tall matmul, then pool+bias+relu.
    r = jnp.dot(p_ref[...], w2_ref[...], preferred_element_type=jnp.float32)  # (4R,128)
    m = jnp.maximum(jnp.maximum(r[0:R], r[R:2 * R]),
                    jnp.maximum(r[2 * R:3 * R], r[3 * R:4 * R]))              # (S*B,128)
    y2 = jnp.maximum(m + b2_ref[...], 0.0)                                    # rows (s, b)

    # Flatten: lane-concat of the S spatial positions -> x_flat[b, s*128 + c] = y2[s*B+b, c]
    x_flat = jnp.concatenate([y2[s * B:(s + 1) * B, :] for s in range(S)], axis=1)

    h = jnp.dot(x_flat.astype(jnp.bfloat16), wf1_ref[...],
                preferred_element_type=jnp.float32) + bf1_ref[...]
    h = jnp.maximum(h, 0.0)
    h_ref[...] = h                                                            # x2 output

    # TODO(synk): F.dropout between fc1 and fc2 is stochastic; identity (eval mode) here.
    logits = jnp.dot(h.astype(jnp.bfloat16), wf2_ref[...],
                     preferred_element_type=jnp.float32) + bf2_ref[...]
    col = jax.lax.broadcasted_iota(jnp.int32, logits.shape, 1)
    logits = jnp.where(col < NUM_CLASSES, logits, -1e30)      # mask padded lanes
    mx = jnp.max(logits, axis=-1, keepdims=True)
    sh = logits - mx
    lse = jnp.log(jnp.sum(jnp.exp(sh), axis=-1, keepdims=True))
    logp_ref[...] = sh - lse


# --------------------------------- JAX glue --------------------------------- #

def _im2col_nhwc(x, k):
    """(B,H,W,C) -> (B,Ho,Wo,C*k*k) with K index = c*k*k + kh*k + kw (PyTorch order)."""
    B, H, W, C = x.shape
    Ho, Wo = H - k + 1, W - k + 1
    cols = jnp.stack([x[:, kh:kh + Ho, kw:kw + Wo, :]
                      for kh in range(k) for kw in range(k)], axis=-1)  # (B,Ho,Wo,C,k*k)
    return cols.reshape(B, Ho, Wo, C * k * k), Ho, Wo


def _pool_patch_rows(cols, row_order):
    """Stack the 4 sub-positions of each 2x2 pool window along rows -> (4*B*Hp*Wp, K).

    row_order="bs": rows inside each block are (b, ph, pw); "sb": (ph, pw, b)."""
    B, Ho, Wo, K = cols.shape
    Hp, Wp = Ho // 2, Wo // 2
    blocks = []
    for di in (0, 1):
        for dj in (0, 1):
            blk = cols[:, di::2, dj::2, :]                  # (B, Hp, Wp, K)
            if row_order == "sb":
                blk = blk.transpose(1, 2, 0, 3)             # (Hp, Wp, B, K)
            blocks.append(blk.reshape(B * Hp * Wp, K))
    return jnp.concatenate(blocks, axis=0), Hp, Wp


def _pad_cols(m, cols=LANES):
    out = jnp.zeros((m.shape[0], cols), m.dtype)
    return out.at[:, :m.shape[1]].set(m)


def net_forward(x_nchw, params):
    """x: (B, 1, 32, 32) NCHW f32.  Returns (log_softmax(fc2) (B,10), x2=relu(fc1) (B,50))."""
    w1, b1, w2, b2, wf1, bf1, wf2, bf2 = params
    B = x_nchw.shape[0]
    k = KSIZE

    # NHWC activations throughout (C=1 here, so this is effectively a free reshape).
    x = jnp.transpose(x_nchw, (0, 2, 3, 1))

    # ---- trace-time weight packing: lane-dense (pad Cout->128), bf16 for the MXU ----
    w1p = _pad_cols(w1.reshape(10, 1 * k * k).T).astype(jnp.bfloat16)     # (25, 128)
    b1p = _pad_cols(b1.reshape(1, 10))                                    # (1, 128) f32
    w2p = _pad_cols(w2.reshape(20, 10 * k * k).T).astype(jnp.bfloat16)    # (250, 128)
    b2p = _pad_cols(b2.reshape(1, 20))
    # fc1 rows permuted so it consumes the NHWC-flattened (s-major, channel-on-lanes)
    # activation in exactly PyTorch's view(-1, 500) (index = c*25 + s) order.
    wf1_scj = wf1.reshape(50, 20, 25).transpose(2, 1, 0)                  # (s, c, j)
    wf1p = jnp.zeros((25, LANES, LANES), jnp.float32)
    wf1p = wf1p.at[:, :20, :50].set(wf1_scj).reshape(25 * LANES, LANES).astype(jnp.bfloat16)
    bf1p = _pad_cols(bf1.reshape(1, 50))
    wf2p = jnp.zeros((LANES, LANES), jnp.float32).at[:50, :10].set(wf2.T).astype(jnp.bfloat16)
    bf2p = _pad_cols(bf2.reshape(1, 10))

    # ---- conv1 (1->10, k=5) + max_pool2d(2) + relu ----
    cols1, _, _ = _im2col_nhwc(x, k)                       # (B, 28, 28, 25)
    p1, hp1, wp1 = _pool_patch_rows(cols1, "bs")           # (4*B*14*14, 25), rows (f, b, ph, pw)
    R1 = B * hp1 * wp1
    y1 = pl.pallas_call(
        conv_pool_relu_kernel,
        out_shape=jax.ShapeDtypeStruct((R1, LANES), jnp.float32),
        in_specs=[_vmem()] * 3,
        out_specs=_vmem(),
        cost_estimate=pl.CostEstimate(
            flops=2 * 4 * R1 * 25 * LANES,
            transcendentals=0,
            bytes_accessed=p1.size * 2 + w1p.size * 2 + b1p.size * 4 + R1 * LANES * 4),
    )(p1.astype(jnp.bfloat16), w1p, b1p)
    y1 = y1.reshape(B, hp1, wp1, LANES)[..., :10]          # NHWC (B,14,14,10), no transpose

    # ---- conv2 + Dropout2d(identity) + pool + relu + flatten + fc1 + relu + fc2
    #      + log_softmax, all in one fused pallas_call ----
    cols2, _, _ = _im2col_nhwc(y1, k)                      # (B, 10, 10, 250)
    p2, hp2, wp2 = _pool_patch_rows(cols2, "sb")           # (4*25*B, 250), rows (f, s, b)
    R2 = B * hp2 * wp2
    logp, h = pl.pallas_call(
        conv2_mlp_kernel,
        out_shape=(jax.ShapeDtypeStruct((B, LANES), jnp.float32),   # log-probs (padded)
                   jax.ShapeDtypeStruct((B, LANES), jnp.float32)),  # x2 = relu(fc1) (padded)
        in_specs=[_vmem()] * 7,
        out_specs=(_vmem(), _vmem()),
        cost_estimate=pl.CostEstimate(
            flops=(2 * 4 * R2 * 250 * LANES
                   + 2 * B * (hp2 * wp2 * LANES) * LANES
                   + 2 * B * LANES * LANES),
            transcendentals=B * LANES,
            bytes_accessed=(p2.size * 2 + w2p.size * 2 + wf1p.size * 2 + wf2p.size * 2
                            + (b2p.size + bf1p.size + bf2p.size) * 4
                            + 2 * B * LANES * 4)),
    )(p2.astype(jnp.bfloat16), w2p, b2p, wf1p, bf1p, wf2p, bf2p)

    return logp[:, :NUM_CLASSES], h[:, :50]


# ----------------------------------- main ------------------------------------ #

if __name__ == "__main__":
    key = jax.random.PRNGKey(0)
    ks = jax.random.split(key, 9)
    # Deterministic synthetic parameters (shapes from Net.__init__).
    w1 = 0.10 * jax.random.normal(ks[0], (10, 1, 5, 5), jnp.float32)
    b1 = 0.10 * jax.random.normal(ks[1], (10,), jnp.float32)
    w2 = 0.05 * jax.random.normal(ks[2], (20, 10, 5, 5), jnp.float32)
    b2 = 0.10 * jax.random.normal(ks[3], (20,), jnp.float32)
    wf1 = 0.05 * jax.random.normal(ks[4], (50, 500), jnp.float32)   # PyTorch (out, in)
    bf1 = 0.10 * jax.random.normal(ks[5], (50,), jnp.float32)
    wf2 = 0.10 * jax.random.normal(ks[6], (10, 50), jnp.float32)
    bf2 = 0.10 * jax.random.normal(ks[7], (10,), jnp.float32)

    # Input: fc1(500) implies 32x32 spatial (((32-4)/2 - 4)/2 = 5; 20*5*5 = 500).
    x = jax.random.normal(ks[8], (2, 1, 32, 32), jnp.float32)

    params = (w1, b1, w2, b2, wf1, bf1, wf2, bf2)
    logp, x2 = jax.jit(net_forward)(x, params)
    jax.block_until_ready((logp, x2))

    assert logp.shape == (2, 10) and x2.shape == (2, 50)
    assert bool(jnp.all(jnp.isfinite(logp))) and bool(jnp.all(x2 >= 0.0))
    # log_softmax rows must exp-sum to 1
    assert bool(jnp.allclose(jnp.sum(jnp.exp(logp), axis=-1), 1.0, atol=1e-5))
    print("KERNEL_OK")
</pallas_src>

<mosaic_0001>
module attributes {stable_mosaic.version = 11 : i64} {
  func.func @conv_pool_relu_kernel(%arg0: memref<1568x25xbf16, #tpu.memory_space<vmem>>, %arg1: memref<25x128xbf16, #tpu.memory_space<vmem>>, %arg2: memref<1x128xf32, #tpu.memory_space<vmem>>, %arg3: memref<392x128xf32, #tpu.memory_space<vmem>>) attributes {dimension_semantics = [], scalar_prefetch = 0 : i64, scratch_operands = 0 : i64, tpu.core_type = #tpu.core_type<tc>} {
    %c0 = arith.constant 0 : index
    %c0_0 = arith.constant 0 : index
    %0 = vector.load %arg0[%c0, %c0_0] : memref<1568x25xbf16, #tpu.memory_space<vmem>>, vector<1568x25xbf16>
    %c0_1 = arith.constant 0 : index
    %c0_2 = arith.constant 0 : index
    %1 = vector.load %arg1[%c0_1, %c0_2] : memref<25x128xbf16, #tpu.memory_space<vmem>>, vector<25x128xbf16>
    %cst = arith.constant dense<0.000000e+00> : vector<1568x128xf32>
    %2 = tpu.matmul %0, %1, %cst {dimension_numbers = #tpu.dot_dimension_numbers<[1], [0], [0], [1], [0, 0, 1, 1], [], []>} : vector<1568x25xbf16>, vector<25x128xbf16>, vector<1568x128xf32> -> vector<1568x128xf32>
    %3 = vector.extract_strided_slice %2 {offsets = [0, 0], sizes = [392, 128], strides = [1, 1]} : vector<1568x128xf32> to vector<392x128xf32>
    %4 = vector.extract_strided_slice %2 {offsets = [392, 0], sizes = [392, 128], strides = [1, 1]} : vector<1568x128xf32> to vector<392x128xf32>
    %5 = arith.maximumf %3, %4 : vector<392x128xf32>
    %6 = vector.extract_strided_slice %2 {offsets = [784, 0], sizes = [392, 128], strides = [1, 1]} : vector<1568x128xf32> to vector<392x128xf32>
    %7 = vector.extract_strided_slice %2 {offsets = [1176, 0], sizes = [392, 128], strides = [1, 1]} : vector<1568x128xf32> to vector<392x128xf32>
    %8 = arith.maximumf %6, %7 : vector<392x128xf32>
    %9 = arith.maximumf %5, %8 : vector<392x128xf32>
    %c0_3 = arith.constant 0 : index
    %c0_4 = arith.constant 0 : index
    %10 = vector.load %arg2[%c0_3, %c0_4] : memref<1x128xf32, #tpu.memory_space<vmem>>, vector<1x128xf32>
    %11 = vector.broadcast %10 : vector<1x128xf32> to vector<392x128xf32>
    %12 = arith.addf %9, %11 : vector<392x128xf32>
    %cst_5 = arith.constant 0.000000e+00 : f32
    %13 = vector.broadcast %cst_5 : f32 to vector<392x128xf32>
    %14 = arith.maximumf %12, %13 : vector<392x128xf32>
    %c0_6 = arith.constant 0 : index
    %c0_7 = arith.constant 0 : index
    %15 = vector.load %arg3[%c0_6, %c0_7] : memref<392x128xf32, #tpu.memory_space<vmem>>, vector<392x128xf32>
    tpu.vector_store %arg3[%c0_6, %c0_7], %14 {strides = array<i32>} : memref<392x128xf32, #tpu.memory_space<vmem>>, vector<392x128xf32>,
    return
  }
}

module attributes {stable_mosaic.version = 11 : i64} {
  func.func @conv2_mlp_kernel(%arg0: memref<200x250xbf16, #tpu.memory_space<vmem>>, %arg1: memref<250x128xbf16, #tpu.memory_space<vmem>>, %arg2: memref<1x128xf32, #tpu.memory_space<vmem>>, %arg3: memref<3200x128xbf16, #tpu.memory_space<vmem>>, %arg4: memref<1x128xf32, #tpu.memory_space<vmem>>, %arg5: memref<128x128xbf16, #tpu.memory_space<vmem>>, %arg6: memref<1x128xf32, #tpu.memory_space<vmem>>, %arg7: memref<2x128xf32, #tpu.memory_space<vmem>>, %arg8: memref<2x128xf32, #tpu.memory_space<vmem>>) attributes {dimension_semantics = [], scalar_prefetch = 0 : i64, scratch_operands = 0 : i64, tpu.core_type = #tpu.core_type<tc>} {
    %c0 = arith.constant 0 : index
    %c0_0 = arith.constant 0 : index
    %0 = vector.load %arg0[%c0, %c0_0] : memref<200x250xbf16, #tpu.memory_space<vmem>>, vector<200x250xbf16>
    %c0_1 = arith.constant 0 : index
    %c0_2 = arith.constant 0 : index
    %1 = vector.load %arg1[%c0_1, %c0_2] : memref<250x128xbf16, #tpu.memory_space<vmem>>, vector<250x128xbf16>
    %cst = arith.constant dense<0.000000e+00> : vector<200x128xf32>
    %2 = tpu.matmul %0, %1, %cst {dimension_numbers = #tpu.dot_dimension_numbers<[1], [0], [0], [1], [0, 0, 1, 1], [], []>} : vector<200x250xbf16>, vector<250x128xbf16>, vector<200x128xf32> -> vector<200x128xf32>
    %3 = vector.extract_strided_slice %2 {offsets = [0, 0], sizes = [50, 128], strides = [1, 1]} : vector<200x128xf32> to vector<50x128xf32>
    %4 = vector.extract_strided_slice %2 {offsets = [50, 0], sizes = [50, 128], strides = [1, 1]} : vector<200x128xf32> to vector<50x128xf32>
    %5 = arith.maximumf %3, %4 : vector<50x128xf32>
    %6 = vector.extract_strided_slice %2 {offsets = [100, 0], sizes = [50, 128], strides = [1, 1]} : vector<200x128xf32> to vector<50x128xf32>
    %7 = vector.extract_strided_slice %2 {offsets = [150, 0], sizes = [50, 128], strides = [1, 1]} : vector<200x128xf32> to vector<50x128xf32>
    %8 = arith.maximumf %6, %7 : vector<50x128xf32>
    %9 = arith.maximumf %5, %8 : vector<50x128xf32>
    %c0_3 = arith.constant 0 : index
    %c0_4 = arith.constant 0 : index
    %10 = vector.load %arg2[%c0_3, %c0_4] : memref<1x128xf32, #tpu.memory_space<vmem>>, vector<1x128xf32>
    %11 = vector.broadcast %10 : vector<1x128xf32> to vector<50x128xf32>
    %12 = arith.addf %9, %11 : vector<50x128xf32>
    %cst_5 = arith.constant 0.000000e+00 : f32
    %13 = vector.broadcast %cst_5 : f32 to vector<50x128xf32>
    %14 = arith.maximumf %12, %13 : vector<50x128xf32>
    %15 = vector.extract_strided_slice %14 {offsets = [0, 0], sizes = [2, 128], strides = [1, 1]} : vector<50x128xf32> to vector<2x128xf32>
    %16 = vector.extract_strided_slice %14 {offsets = [2, 0], sizes = [2, 128], strides = [1, 1]} : vector<50x128xf32> to vector<2x128xf32>
    %17 = vector.extract_strided_slice %14 {offsets = [4, 0], sizes = [2, 128], strides = [1, 1]} : vector<50x128xf32> to vector<2x128xf32>
    %18 = vector.extract_strided_slice %14 {offsets = [6, 0], sizes = [2, 128], strides = [1, 1]} : vector<50x128xf32> to vector<2x128xf32>
    %19 = vector.extract_strided_slice %14 {offsets = [8, 0], sizes = [2, 128], strides = [1, 1]} : vector<50x128xf32> to vector<2x128xf32>
    %20 = vector.extract_strided_slice %14 {offsets = [10, 0], sizes = [2, 128], strides = [1, 1]} : vector<50x128xf32> to vector<2x128xf32>
    %21 = vector.extract_strided_slice %14 {offsets = [12, 0], sizes = [2, 128], strides = [1, 1]} : vector<50x128xf32> to vector<2x128xf32>
    %22 = vector.extract_strided_slice %14 {offsets = [14, 0], sizes = [2, 128], strides = [1, 1]} : vector<50x128xf32> to vector<2x128xf32>
    %23 = vector.extract_strided_slice %14 {offsets = [16, 0], sizes = [2, 128], strides = [1, 1]} : vector<50x128xf32> to vector<2x128xf32>
    %24 = vector.extract_strided_slice %14 {offsets = [18, 0], sizes = [2, 128], strides = [1, 1]} : vector<50x128xf32> to vector<2x128xf32>
    %25 = vector.extract_strided_slice %14 {offsets = [20, 0], sizes = [2, 128], strides = [1, 1]} : vector<50x128xf32> to vector<2x128xf32>
    %26 = vector.extract_strided_slice %14 {offsets = [22, 0], sizes = [2, 128], strides = [1, 1]} : vector<50x128xf32> to vector<2x128xf32>
    %27 = vector.extract_strided_slice %14 {offsets = [24, 0], sizes = [2, 128], strides = [1, 1]} : vector<50x128xf32> to vector<2x128xf32>
    %28 = vector.extract_strided_slice %14 {offsets = [26, 0], sizes = [2, 128], strides = [1, 1]} : vector<50x128xf32> to vector<2x128xf32>
    %29 = vector.extract_strided_slice %14 {offsets = [28, 0], sizes = [2, 128], strides = [1, 1]} : vector<50x128xf32> to vector<2x128xf32>
    %30 = vector.extract_strided_slice %14 {offsets = [30, 0], sizes = [2, 128], strides = [1, 1]} : vector<50x128xf32> to vector<2x128xf32>
    %31 = vector.extract_strided_slice %14 {offsets = [32, 0], sizes = [2, 128], strides = [1, 1]} : vector<50x128xf32> to vector<2x128xf32>
    %32 = vector.extract_strided_slice %14 {offsets = [34, 0], sizes = [2, 128], strides = [1, 1]} : vector<50x128xf32> to vector<2x128xf32>
    %33 = vector.extract_strided_slice %14 {offsets = [36, 0], sizes = [2, 128], strides = [1, 1]} : vector<50x128xf32> to vector<2x128xf32>
    %34 = vector.extract_strided_slice %14 {offsets = [38, 0], sizes = [2, 128], strides = [1, 1]} : vector<50x128xf32> to vector<2x128xf32>
    %35 = vector.extract_strided_slice %14 {offsets = [40, 0], sizes = [2, 128], strides = [1, 1]} : vector<50x128xf32> to vector<2x128xf32>
    %36 = vector.extract_strided_slice %14 {offsets = [42, 0], sizes = [2, 128], strides = [1, 1]} : vector<50x128xf32> to vector<2x128xf32>
    %37 = vector.extract_strided_slice %14 {offsets = [44, 0], sizes = [2, 128], strides = [1, 1]} : vector<50x128xf32> to vector<2x128xf32>
    %38 = vector.extract_strided_slice %14 {offsets = [46, 0], sizes = [2, 128], strides = [1, 1]} : vector<50x128xf32> to vector<2x128xf32>
    %39 = vector.extract_strided_slice %14 {offsets = [48, 0], sizes = [2, 128], strides = [1, 1]} : vector<50x128xf32> to vector<2x128xf32>
    %40 = tpu.concatenate %15, %16, %17, %18, %19, %20, %21, %22, %23, %24, %25, %26, %27, %28, %29, %30 in 1 : vector<2x128xf32>, vector<2x128xf32>, vector<2x128xf32>, vector<2x128xf32>, vector<2x128xf32>, vector<2x128xf32>, vector<2x128xf32>, vector<2x128xf32>, vector<2x128xf32>, vector<2x128xf32>, vector<2x128xf32>, vector<2x128xf32>, vector<2x128xf32>, vector<2x128xf32>, vector<2x128xf32>, vector<2x128xf32> -> vector<2x2048xf32>
    %41 = tpu.concatenate %31, %32, %33, %34, %35, %36, %37, %38, %39 in 1 : vector<2x128xf32>, vector<2x128xf32>, vector<2x128xf32>, vector<2x128xf32>, vector<2x128xf32>, vector<2x128xf32>, vector<2x128xf32>, vector<2x128xf32>, vector<2x128xf32> -> vector<2x1152xf32>
    %42 = tpu.concatenate %40, %41 in 1 : vector<2x2048xf32>, vector<2x1152xf32> -> vector<2x3200xf32>
    %43 = arith.truncf %42 : vector<2x3200xf32> to vector<2x3200xbf16>
    %c0_6 = arith.constant 0 : index
    %c0_7 = arith.constant 0 : index
    %44 = vector.load %arg3[%c0_6, %c0_7] : memref<3200x128xbf16, #tpu.memory_space<vmem>>, vector<3200x128xbf16>
    %cst_8 = arith.constant dense<0.000000e+00> : vector<2x128xf32>
    %45 = tpu.matmul %43, %44, %cst_8 {dimension_numbers = #tpu.dot_dimension_numbers<[1], [0], [0], [1], [0, 0, 1, 1], [], []>} : vector<2x3200xbf16>, vector<3200x128xbf16>, vector<2x128xf32> -> vector<2x128xf32>
    %c0_9 = arith.constant 0 : index
    %c0_10 = arith.constant 0 : index
    %46 = vector.load %arg4[%c0_9, %c0_10] : memref<1x128xf32, #tpu.memory_space<vmem>>, vector<1x128xf32>
    %47 = vector.broadcast %46 : vector<1x128xf32> to vector<2x128xf32>
    %48 = arith.addf %45, %47 : vector<2x128xf32>
    %cst_11 = arith.constant 0.000000e+00 : f32
    %49 = vector.broadcast %cst_11 : f32 to vector<2x128xf32>
    %50 = arith.maximumf %48, %49 : vector<2x128xf32>
    %c0_12 = arith.constant 0 : index
    %c0_13 = arith.constant 0 : index
    %51 = vector.load %arg8[%c0_12, %c0_13] : memref<2x128xf32, #tpu.memory_space<vmem>>, vector<2x128xf32>
    tpu.vector_store %arg8[%c0_12, %c0_13], %50 {strides = array<i32>} : memref<2x128xf32, #tpu.memory_space<vmem>>, vector<2x128xf32>,
    %52 = arith.truncf %50 : vector<2x128xf32> to vector<2x128xbf16>
    %c0_14 = arith.constant 0 : index
    %c0_15 = arith.constant 0 : index
    %53 = vector.load %arg5[%c0_14, %c0_15] : memref<128x128xbf16, #tpu.memory_space<vmem>>, vector<128x128xbf16>
    %cst_16 = arith.constant dense<0.000000e+00> : vector<2x128xf32>
    %54 = tpu.matmul %52, %53, %cst_16 {dimension_numbers = #tpu.dot_dimension_numbers<[1], [0], [0], [1], [0, 0, 1, 1], [], []>} : vector<2x128xbf16>, vector<128x128xbf16>, vector<2x128xf32> -> vector<2x128xf32>
    %c0_17 = arith.constant 0 : index
    %c0_18 = arith.constant 0 : index
    %55 = vector.load %arg6[%c0_17, %c0_18] : memref<1x128xf32, #tpu.memory_space<vmem>>, vector<1x128xf32>
    %56 = vector.broadcast %55 : vector<1x128xf32> to vector<2x128xf32>
    %57 = arith.addf %54, %56 : vector<2x128xf32>
    %58 = tpu.iota {dimensions = array<i32: 1>} : vector<2x128xi32>
    %c10_i32 = arith.constant 10 : i32
    %59 = vector.broadcast %c10_i32 : i32 to vector<2x128xi32>
    %60 = arith.cmpi slt, %58, %59 : vector<2x128xi32>
    %cst_19 = arith.constant -1.000000e+30 : f32
    %61 = vector.broadcast %cst_19 : f32 to vector<2x128xf32>
    %62 = arith.select %60, %57, %61 : vector<2x128xi1>, vector<2x128xf32>
    %cst_20 = arith.constant dense<0xFF800000> : vector<2xf32>
    %63 = vector.multi_reduction <maximumf>, %62, %cst_20 [1] : vector<2x128xf32> to vector<2xf32>
    %64 = vector.shape_cast %63 : vector<2xf32> to vector<2x1xf32>
    %65 = vector.broadcast %64 : vector<2x1xf32> to vector<2x128xf32>
    %66 = arith.subf %62, %65 : vector<2x128xf32>
    %67 = math.exp %66 : vector<2x128xf32>
    %cst_21 = arith.constant dense<0.000000e+00> : vector<2xf32>
    %68 = vector.multi_reduction <add>, %67, %cst_21 [1] : vector<2x128xf32> to vector<2xf32>
    %69 = vector.shape_cast %68 : vector<2xf32> to vector<2x1xf32>
    %70 = math.log %69 : vector<2x1xf32>
    %71 = vector.broadcast %70 : vector<2x1xf32> to vector<2x128xf32>
    %72 = arith.subf %66, %71 : vector<2x128xf32>
    %c0_22 = arith.constant 0 : index
    %c0_23 = arith.constant 0 : index
    %73 = vector.load %arg7[%c0_22, %c0_23] : memref<2x128xf32, #tpu.memory_space<vmem>>, vector<2x128xf32>
    tpu.vector_store %arg7[%c0_22, %c0_23], %72 {strides = array<i32>} : memref<2x128xf32, #tpu.memory_space<vmem>>, vector<2x128xf32>,
    return
  }
}

</mosaic_0001>

<llo_original>
// kernel: net_forward.2
$region0: #{net_forward.2}
  #allocation0 [shape = 'u32[]', space=smem, size = 0x4, offset = 0x4, fixed_abs, tag = 'smem constant byte address 0x4 - core index']
  #allocation1 [shape = 'u32[144,128]{1,0:T(1,128)}', space=vmem, size = 0x12000, scoped, tag = 'internal scratch']
  %s0 = inlined_call_operand.vmem [shape: bf16[1568,25], index: 0, kind: input, shape index: {}]
  %s1 = inlined_call_operand.vmem [shape: bf16[25,128], index: 1, kind: input, shape index: {}]
  %s2 = inlined_call_operand.vmem [shape: f32[1,128], index: 2, kind: input, shape index: {}]
  %s3 = inlined_call_operand.vmem [shape: f32[392,128], index: 3, kind: output, shape index: {}]
  %s4 = sld [smem:[#allocation0]]
  $region22: #{net_forward.2} parent=0
    _
  %s6 = ssub.s32 1, %s4
  %s7 = scalar_select 0, %s6, %s4
  // Predicated region
  $region2: #{net_forward.2} parent=0 // pred_check
    _
  $region3: #{net_forward.2} parent=0 // pred_check_branch
    %9 = sbr.rel (0) target = $region5
  $region4: #{net_forward.2} parent=0 // pred_region
    _
  $region5: #{net_forward.2} parent=0 // pred_fallthru
    _
  // Predicated region
  $region6: #{net_forward.2} parent=0 // pred_check
    _
  $region7: #{net_forward.2} parent=0 // pred_check_branch
    %11 = sbr.rel (0) target = $region9
  $region8: #{net_forward.2} parent=0 // pred_region
    _
  $region9: #{net_forward.2} parent=0 // pred_fallthru
    _
  // Predicated region
  $region10: #{net_forward.2} parent=0 // pred_check
    _
  $region11: #{net_forward.2} parent=0 // pred_check_branch
    %13 = sbr.rel (0) target = $region13
  $region12: #{net_forward.2} parent=0 // pred_region
    _
  $region13: #{net_forward.2} parent=0 // pred_fallthru
    _
  %v15 = vld [vmem:[%s0] sm:$0xf]
  %v16 = vld [vmem:[%s0 + $0x4] sm:$0xf]
  %v17 = vld [vmem:[%s0 + $0x8] sm:$0xf]
  %v18 = vld [vmem:[%s0 + $0xc] sm:$0xf]
  %v19 = vld [vmem:[%s0 + $0x10] sm:$0xf]
  %v20 = vld [vmem:[%s0 + $0x14] sm:$0xf]
  %v21 = vld [vmem:[%s0 + $0x18] sm:$0xf]
  %v22 = vld [vmem:[%s0 + $0x1c] sm:$0xf]
  %v23 = vld [vmem:[%s0 + $0x20] sm:$0xf]
  %v24 = vld [vmem:[%s0 + $0x24] sm:$0xf]
  %v25 = vld [vmem:[%s0 + $0x28] sm:$0xf]
  %v26 = vld [vmem:[%s0 + $0x2c] sm:$0xf]
  %v27 = vld [vmem:[%s0 + $0x30] sm:$0xf]
  %v28 = vld [vmem:[%s0 + $0x34] sm:$0xf]
  %v29 = vld [vmem:[%s0 + $0x38] sm:$0xf]
  %v30 = vld [vmem:[%s0 + $0x3c] sm:$0xf]
  %v31 = vld [vmem:[%s0 + $0x40] sm:$0xf]
  %v32 = vld [vmem:[%s0 + $0x44] sm:$0xf]
  %v33 = vld [vmem:[%s0 + $0x48] sm:$0xf]
  %v34 = vld [vmem:[%s0 + $0x4c] sm:$0xf]
  %v35 = vld [vmem:[%s0 + $0x50] sm:$0xf]
  %v36 = vld [vmem:[%s0 + $0x54] sm:$0xf]
  %v37 = vld [vmem:[%s0 + $0x58] sm:$0xf]
  %v38 = vld [vmem:[%s0 + $0x5c] sm:$0xf]
  %v39 = vld [vmem:[%s0 + $0x60] sm:$0xf]
  %v40 = vld [vmem:[%s0 + $0x64] sm:$0xf]
  %v41 = vld [vmem:[%s0 + $0x68] sm:$0xf]
  %v42 = vld [vmem:[%s0 + $0x6c] sm:$0xf]
  %v43 = vld [vmem:[%s0 + $0x70] sm:$0xf]
  %v44 = vld [vmem:[%s0 + $0x74] sm:$0xf]
  %v45 = vld [vmem:[%s0 + $0x78] sm:$0xf]
  %v46 = vld [vmem:[%s0 + $0x7c] sm:$0xf]
  %v47 = vld [vmem:[%s0 + $0x80] sm:$0xf]
  %v48 = vld [vmem:[%s0 + $0x84] sm:$0xf]
  %v49 = vld [vmem:[%s0 + $0x88] sm:$0xf]
  %v50 = vld [vmem:[%s0 + $0x8c] sm:$0xf]
  %v51 = vld [vmem:[%s0 + $0x90] sm:$0xf]
  %v52 = vld [vmem:[%s0 + $0x94] sm:$0xf]
  %v53 = vld [vmem:[%s0 + $0x98] sm:$0xf]
  %v54 = vld [vmem:[%s0 + $0x9c] sm:$0xf]
  %v55 = vld [vmem:[%s0 + $0xa0] sm:$0xf]
  %v56 = vld [vmem:[%s0 + $0xa4] sm:$0xf]
  %v57 = vld [vmem:[%s0 + $0xa8] sm:$0xf]
  %v58 = vld [vmem:[%s0 + $0xac] sm:$0xf]
  %v59 = vld [vmem:[%s0 + $0xb0] sm:$0xf]
  %v60 = vld [vmem:[%s0 + $0xb4] sm:$0xf]
  %v61 = vld [vmem:[%s0 + $0xb8] sm:$0xf]
  %v62 = vld [vmem:[%s0 + $0xbc] sm:$0xf]
  %v63 = vld [vmem:[%s0 + $0xc0] sm:$0xf]
  %v64 = vld [vmem:[%s0 + $0xc4] sm:$0xf]
  %v65 = vld [vmem:[%s0 + $0xc8] sm:$0xf]
  %v66 = vld [vmem:[%s0 + $0xcc] sm:$0xf]
  %v67 = vld [vmem:[%s0 + $0xd0] sm:$0xf]
  %v68 = vld [vmem:[%s0 + $0xd4] sm:$0xf]
  %v69 = vld [vmem:[%s0 + $0xd8] sm:$0xf]
  %v70 = vld [vmem:[%s0 + $0xdc] sm:$0xf]
  %v71 = vld [vmem:[%s0 + $0xe0] sm:$0xf]
  %v72 = vld [vmem:[%s0 + $0xe4] sm:$0xf]
  %v73 = vld [vmem:[%s0 + $0xe8] sm:$0xf]
  %v74 = vld [vmem:[%s0 + $0xec] sm:$0xf]
  %v75 = vld [vmem:[%s0 + $0xf0] sm:$0xf]
  %v76 = vld [vmem:[%s0 + $0xf4] sm:$0xf]
  %v77 = vld [vmem:[%s0 + $0xf8] sm:$0xf]
  %v78 = vld [vmem:[%s0 + $0xfc] sm:$0xf]
  %v79 = vld [vmem:[%s0 + $0x100] sm:$0xf]
  %v80 = vld [vmem:[%s0 + $0x104] sm:$0xf]
  %v81 = vld [vmem:[%s0 + $0x108] sm:$0xf]
  %v82 = vld [vmem:[%s0 + $0x10c] sm:$0xf]
  %v83 = vld [vmem:[%s0 + $0x110] sm:$0xf]
  %v84 = vld [vmem:[%s0 + $0x114] sm:$0xf]
  %v85 = vld [vmem:[%s0 + $0x118] sm:$0xf]
  %v86 = vld [vmem:[%s0 + $0x11c] sm:$0xf]
  %v87 = vld [vmem:[%s0 + $0x120] sm:$0xf]
  %v88 = vld [vmem:[%s0 + $0x124] sm:$0xf]
  %v89 = vld [vmem:[%s0 + $0x128] sm:$0xf]
  %v90 = vld [vmem:[%s0 + $0x12c] sm:$0xf]
  %v91 = vld [vmem:[%s0 + $0x130] sm:$0xf]
  %v92 = vld [vmem:[%s0 + $0x134] sm:$0xf]
  %v93 = vld [vmem:[%s0 + $0x138] sm:$0xf]
  %v94 = vld [vmem:[%s0 + $0x13c] sm:$0xf]
  %v95 = vld [vmem:[%s0 + $0x140] sm:$0xf]
  %v96 = vld [vmem:[%s0 + $0x144] sm:$0xf]
  %v97 = vld [vmem:[%s0 + $0x148] sm:$0xf]
  %v98 = vld [vmem:[%s0 + $0x14c] sm:$0xf]
  %v99 = vld [vmem:[%s0 + $0x150] sm:$0xf]
  %v100 = vld [vmem:[%s0 + $0x154] sm:$0xf]
  %v101 = vld [vmem:[%s0 + $0x158] sm:$0xf]
  %v102 = vld [vmem:[%s0 + $0x15c] sm:$0xf]
  %v103 = vld [vmem:[%s0 + $0x160] sm:$0xf]
  %v104 = vld [vmem:[%s0 + $0x164] sm:$0xf]
  %v105 = vld [vmem:[%s0 + $0x168] sm:$0xf]
  %v106 = vld [vmem:[%s0 + $0x16c] sm:$0xf]
  %v107 = vld [vmem:[%s0 + $0x170] sm:$0xf]
  %v108 = vld [vmem:[%s0 + $0x174] sm:$0xf]
  %v109 = vld [vmem:[%s0 + $0x178] sm:$0xf]
  %v110 = vld [vmem:[%s0 + $0x17c] sm:$0xf]
  %v111 = vld [vmem:[%s0 + $0x180] sm:$0xf]
  %v112 = vld [vmem:[%s0 + $0x184] sm:$0xf]
  %v113 = vld [vmem:[%s0 + $0x188] sm:$0xf]
  %v114 = vld [vmem:[%s0 + $0x18c] sm:$0xf]
  %v115 = vld [vmem:[%s0 + $0x190] sm:$0xf]
  %v116 = vld [vmem:[%s0 + $0x194] sm:$0xf]
  %v117 = vld [vmem:[%s0 + $0x198] sm:$0xf]
  %v118 = vld [vmem:[%s0 + $0x19c] sm:$0xf]
  %v119 = vld [vmem:[%s0 + $0x1a0] sm:$0xf]
  %v120 = vld [vmem:[%s0 + $0x1a4] sm:$0xf]
  %v121 = vld [vmem:[%s0 + $0x1a8] sm:$0xf]
  %v122 = vld [vmem:[%s0 + $0x1ac] sm:$0xf]
  %v123 = vld [vmem:[%s0 + $0x1b0] sm:$0xf]
  %v124 = vld [vmem:[%s0 + $0x1b4] sm:$0xf]
  %v125 = vld [vmem:[%s0 + $0x1b8] sm:$0xf]
  %v126 = vld [vmem:[%s0 + $0x1bc] sm:$0xf]
  %v127 = vld [vmem:[%s0 + $0x1c0] sm:$0xf]
  %v128 = vld [vmem:[%s0 + $0x1c4] sm:$0xf]
  %v129 = vld [vmem:[%s0 + $0x1c8] sm:$0xf]
  %v130 = vld [vmem:[%s0 + $0x1cc] sm:$0xf]
  %v131 = vld [vmem:[%s0 + $0x1d0] sm:$0xf]
  %v132 = vld [vmem:[%s0 + $0x1d4] sm:$0xf]
  %v133 = vld [vmem:[%s0 + $0x1d8] sm:$0xf]
  %v134 = vld [vmem:[%s0 + $0x1dc] sm:$0xf]
  %v135 = vld [vmem:[%s0 + $0x1e0] sm:$0xf]
  %v136 = vld [vmem:[%s0 + $0x1e4] sm:$0xf]
  %v137 = vld [vmem:[%s0 + $0x1e8] sm:$0xf]
  %v138 = vld [vmem:[%s0 + $0x1ec] sm:$0xf]
  %v139 = vld [vmem:[%s0 + $0x1f0] sm:$0xf]
  %v140 = vld [vmem:[%s0 + $0x1f4] sm:$0xf]
  %v141 = vld [vmem:[%s0 + $0x1f8] sm:$0xf]
  %v142 = vld [vmem:[%s0 + $0x1fc] sm:$0xf]
  %v143 = vld [vmem:[%s0 + $0x200] sm:$0xf]
  %v144 = vld [vmem:[%s0 + $0x204] sm:$0xf]
  %v145 = vld [vmem:[%s0 + $0x208] sm:$0xf]
  %v146 = vld [vmem:[%s0 + $0x20c] sm:$0xf]
  %v147 = vld [vmem:[%s0 + $0x210] sm:$0xf]
  %v148 = vld [vmem:[%s0 + $0x214] sm:$0xf]
  %v149 = vld [vmem:[%s0 + $0x218] sm:$0xf]
  %v150 = vld [vmem:[%s0 + $0x21c] sm:$0xf]
  %v151 = vld [vmem:[%s0 + $0x220] sm:$0xf]
  %v152 = vld [vmem:[%s0 + $0x224] sm:$0xf]
  %v153 = vld [vmem:[%s0 + $0x228] sm:$0xf]
  %v154 = vld [vmem:[%s0 + $0x22c] sm:$0xf]
  %v155 = vld [vmem:[%s0 + $0x230] sm:$0xf]
  %v156 = vld [vmem:[%s0 + $0x234] sm:$0xf]
  %v157 = vld [vmem:[%s0 + $0x238] sm:$0xf]
  %v158 = vld [vmem:[%s0 + $0x23c] sm:$0xf]
  %v159 = vld [vmem:[%s0 + $0x240] sm:$0xf]
  %v160 = vld [vmem:[%s0 + $0x244] sm:$0xf]
  %v161 = vld [vmem:[%s0 + $0x248] sm:$0xf]
  %v162 = vld [vmem:[%s0 + $0x24c] sm:$0xf]
  %v163 = vld [vmem:[%s0 + $0x250] sm:$0xf]
  %v164 = vld [vmem:[%s0 + $0x254] sm:$0xf]
  %v165 = vld [vmem:[%s0 + $0x258] sm:$0xf]
  %v166 = vld [vmem:[%s0 + $0x25c] sm:$0xf]
  %v167 = vld [vmem:[%s0 + $0x260] sm:$0xf]
  %v168 = vld [vmem:[%s0 + $0x264] sm:$0xf]
  %v169 = vld [vmem:[%s0 + $0x268] sm:$0xf]
  %v170 = vld [vmem:[%s0 + $0x26c] sm:$0xf]
  %v171 = vld [vmem:[%s0 + $0x270] sm:$0xf]
  %v172 = vld [vmem:[%s0 + $0x274] sm:$0xf]
  %v173 = vld [vmem:[%s0 + $0x278] sm:$0xf]
  %v174 = vld [vmem:[%s0 + $0x27c] sm:$0xf]
  %v175 = vld [vmem:[%s0 + $0x280] sm:$0xf]
  %v176 = vld [vmem:[%s0 + $0x284] sm:$0xf]
  %v177 = vld [vmem:[%s0 + $0x288] sm:$0xf]
  %v178 = vld [vmem:[%s0 + $0x28c] sm:$0xf]
  %v179 = vld [vmem:[%s0 + $0x290] sm:$0xf]
  %v180 = vld [vmem:[%s0 + $0x294] sm:$0xf]
  %v181 = vld [vmem:[%s0 + $0x298] sm:$0xf]
  %v182 = vld [vmem:[%s0 + $0x29c] sm:$0xf]
  %v183 = vld [vmem:[%s0 + $0x2a0] sm:$0xf]
  %v184 = vld [vmem:[%s0 + $0x2a4] sm:$0xf]
  %v185 = vld [vmem:[%s0 + $0x2a8] sm:$0xf]
  %v186 = vld [vmem:[%s0 + $0x2ac] sm:$0xf]
  %v187 = vld [vmem:[%s0 + $0x2b0] sm:$0xf]
  %v188 = vld [vmem:[%s0 + $0x2b4] sm:$0xf]
  %v189 = vld [vmem:[%s0 + $0x2b8] sm:$0xf]
  %v190 = vld [vmem:[%s0 + $0x2bc] sm:$0xf]
  %v191 = vld [vmem:[%s0 + $0x2c0] sm:$0xf]
  %v192 = vld [vmem:[%s0 + $0x2c4] sm:$0xf]
  %v193 = vld [vmem:[%s0 + $0x2c8] sm:$0xf]
  %v194 = vld [vmem:[%s0 + $0x2cc] sm:$0xf]
  %v195 = vld [vmem:[%s0 + $0x2d0] sm:$0xf]
  %v196 = vld [vmem:[%s0 + $0x2d4] sm:$0xf]
  %v197 = vld [vmem:[%s0 + $0x2d8] sm:$0xf]
  %v198 = vld [vmem:[%s0 + $0x2dc] sm:$0xf]
  %v199 = vld [vmem:[%s0 + $0x2e0] sm:$0xf]
  %v200 = vld [vmem:[%s0 + $0x2e4] sm:$0xf]
  %v201 = vld [vmem:[%s0 + $0x2e8] sm:$0xf]
  %v202 = vld [vmem:[%s0 + $0x2ec] sm:$0xf]
  %v203 = vld [vmem:[%s0 + $0x2f0] sm:$0xf]
  %v204 = vld [vmem:[%s0 + $0x2f4] sm:$0xf]
  %v205 = vld [vmem:[%s0 + $0x2f8] sm:$0xf]
  %v206 = vld [vmem:[%s0 + $0x2fc] sm:$0xf]
  %v207 = vld [vmem:[%s0 + $0x300] sm:$0xf]
  %v208 = vld [vmem:[%s0 + $0x304] sm:$0xf]
  %v209 = vld [vmem:[%s0 + $0x308] sm:$0xf]
  %v210 = vld [vmem:[%s0 + $0x30c] sm:$0xf]
  %v211 = vld [vmem:[%s1] sm:$0xf]
  %v212 = vld [vmem:[%s1 + $0x4] sm:$0xf]
  %v213 = vld [vmem:[%s1 + $0x8] sm:$0xf]
  %v214 = vld [vmem:[%s1 + $0xc] sm:$0x1]
  %v411 = vunpack.c.l.b16 %v15
  %v412 = vunpack.c.l.b16 %v16
  %v413 = vunpack.c.l.b16 %v17
  %v414 = vunpack.c.l.b16 %v18
  %v415 = vunpack.c.l.b16 %v19
  %v416 = vunpack.c.l.b16 %v20
  %v417 = vunpack.c.l.b16 %v21
  %v418 = vunpack.c.l.b16 %v22
  %v419 = vunpack.c.l.b16 %v23
  %v420 = vunpack.c.l.b16 %v24
  %v421 = vunpack.c.l.b16 %v25
  %v422 = vunpack.c.l.b16 %v26
  %v423 = vunpack.c.l.b16 %v27
  %v424 = vunpack.c.l.b16 %v28
  %v425 = vunpack.c.l.b16 %v29
  %v426 = vunpack.c.l.b16 %v30
  %v427 = vunpack.c.l.b16 %v31
  %v428 = vunpack.c.l.b16 %v32
  %v429 = vunpack.c.l.b16 %v33
  %v430 = vunpack.c.l.b16 %v34
  %v431 = vunpack.c.l.b16 %v35
  %v432 = vunpack.c.l.b16 %v36
  %v433 = vunpack.c.l.b16 %v37
  %v434 = vunpack.c.l.b16 %v38
  %v435 = vunpack.c.l.b16 %v39
  %v436 = vunpack.c.l.b16 %v40
  %v437 = vunpack.c.l.b16 %v41
  %v438 = vunpack.c.l.b16 %v42
  %v439 = vunpack.c.l.b16 %v43
  %v440 = vunpack.c.l.b16 %v44
  %v441 = vunpack.c.l.b16 %v45
  %v442 = vunpack.c.l.b16 %v46
  %v443 = vunpack.c.l.b16 %v47
  %v444 = vunpack.c.l.b16 %v48
  %v445 = vunpack.c.l.b16 %v49
  %v446 = vunpack.c.l.b16 %v50
  %v447 = vunpack.c.l.b16 %v51
  %v448 = vunpack.c.l.b16 %v52
  %v449 = vunpack.c.l.b16 %v53
  %v450 = vunpack.c.l.b16 %v54
  %v451 = vunpack.c.l.b16 %v55
  %v452 = vunpack.c.l.b16 %v56
  %v453 = vunpack.c.l.b16 %v57
  %v454 = vunpack.c.l.b16 %v58
  %v455 = vunpack.c.l.b16 %v59
  %v456 = vunpack.c.l.b16 %v60
  %v457 = vunpack.c.l.b16 %v61
  %v458 = vunpack.c.l.b16 %v62
  %v459 = vunpack.c.l.b16 %v63
  %v460 = vunpack.c.l.b16 %v64
  %v461 = vunpack.c.l.b16 %v65
  %v462 = vunpack.c.l.b16 %v66
  %v463 = vunpack.c.l.b16 %v67
  %v464 = vunpack.c.l.b16 %v68
  %v465 = vunpack.c.l.b16 %v69
  %v466 = vunpack.c.l.b16 %v70
  %v467 = vunpack.c.l.b16 %v71
  %v468 = vunpack.c.l.b16 %v72
  %v469 = vunpack.c.l.b16 %v73
  %v470 = vunpack.c.l.b16 %v74
  %v471 = vunpack.c.l.b16 %v75
  %v472 = vunpack.c.l.b16 %v76
  %v473 = vunpack.c.l.b16 %v77
  %v474 = vunpack.c.l.b16 %v78
  %v475 = vunpack.c.l.b16 %v79
  %v476 = vunpack.c.l.b16 %v80
  %v477 = vunpack.c.l.b16 %v81
  %v478 = vunpack.c.l.b16 %v82
  %v479 = vunpack.c.l.b16 %v83
  %v480 = vunpack.c.l.b16 %v84
  %v481 = vunpack.c.l.b16 %v85
  %v482 = vunpack.c.l.b16 %v86
  %v483 = vunpack.c.l.b16 %v87
  %v484 = vunpack.c.l.b16 %v88
  %v485 = vunpack.c.l.b16 %v89
  %v486 = vunpack.c.l.b16 %v90
  %v487 = vunpack.c.l.b16 %v91
  %v488 = vunpack.c.l.b16 %v92
  %v489 = vunpack.c.l.b16 %v93
  %v490 = vunpack.c.l.b16 %v94
  %v491 = vunpack.c.l.b16 %v95
  %v492 = vunpack.c.l.b16 %v96
  %v493 = vunpack.c.l.b16 %v97
  %v494 = vunpack.c.l.b16 %v98
  %v495 = vunpack.c.l.b16 %v99
  %v496 = vunpack.c.l.b16 %v100
  %v497 = vunpack.c.l.b16 %v101
  %v498 = vunpack.c.l.b16 %v102
  %v499 = vunpack.c.l.b16 %v103
  %v500 = vunpack.c.l.b16 %v104
  %v501 = vunpack.c.l.b16 %v105
  %v502 = vunpack.c.l.b16 %v106
  %v503 = vunpack.c.l.b16 %v107
  %v504 = vunpack.c.l.b16 %v108
  %v505 = vunpack.c.l.b16 %v109
  %v506 = vunpack.c.l.b16 %v110
  %v507 = vunpack.c.l.b16 %v111
  %v508 = vunpack.c.l.b16 %v112
  %v509 = vunpack.c.l.b16 %v113
  %v510 = vunpack.c.l.b16 %v114
  %v511 = vunpack.c.l.b16 %v115
  %v512 = vunpack.c.l.b16 %v116
  %v513 = vunpack.c.l.b16 %v117
  %v514 = vunpack.c.l.b16 %v118
  %v515 = vunpack.c.l.b16 %v119
  %v516 = vunpack.c.l.b16 %v120
  %v517 = vunpack.c.l.b16 %v121
  %v518 = vunpack.c.l.b16 %v122
  %v519 = vunpack.c.l.b16 %v123
  %v520 = vunpack.c.l.b16 %v124
  %v521 = vunpack.c.l.b16 %v125
  %v522 = vunpack.c.l.b16 %v126
  %v523 = vunpack.c.l.b16 %v127
  %v524 = vunpack.c.l.b16 %v128
  %v525 = vunpack.c.l.b16 %v129
  %v526 = vunpack.c.l.b16 %v130
  %v527 = vunpack.c.l.b16 %v131
  %v528 = vunpack.c.l.b16 %v132
  %v529 = vunpack.c.l.b16 %v133
  %v530 = vunpack.c.l.b16 %v134
  %v531 = vunpack.c.l.b16 %v135
  %v532 = vunpack.c.l.b16 %v136
  %v533 = vunpack.c.l.b16 %v137
  %v534 = vunpack.c.l.b16 %v138
  %v535 = vunpack.c.l.b16 %v139
  %v536 = vunpack.c.l.b16 %v140
  %v537 = vunpack.c.l.b16 %v141
  %v538 = vunpack.c.l.b16 %v142
  %v539 = vunpack.c.l.b16 %v143
  %v540 = vunpack.c.l.b16 %v144
  %v541 = vunpack.c.l.b16 %v145
  %v542 = vunpack.c.l.b16 %v146
  %v543 = vunpack.c.l.b16 %v147
  %v544 = vunpack.c.l.b16 %v148
  %v545 = vunpack.c.l.b16 %v149
  %v546 = vunpack.c.l.b16 %v150
  %v547 = vunpack.c.l.b16 %v151
  %v548 = vunpack.c.l.b16 %v152
  %v549 = vunpack.c.l.b16 %v153
  %v550 = vunpack.c.l.b16 %v154
  %v551 = vunpack.c.l.b16 %v155
  %v552 = vunpack.c.l.b16 %v156
  %v553 = vunpack.c.l.b16 %v157
  %v554 = vunpack.c.l.b16 %v158
  %v555 = vunpack.c.l.b16 %v159
  %v556 = vunpack.c.l.b16 %v160
  %v557 = vunpack.c.l.b16 %v161
  %v558 = vunpack.c.l.b16 %v162
  %v559 = vunpack.c.l.b16 %v163
  %v560 = vunpack.c.l.b16 %v164
  %v561 = vunpack.c.l.b16 %v165
  %v562 = vunpack.c.l.b16 %v166
  %v563 = vunpack.c.l.b16 %v167
  %v564 = vunpack.c.l.b16 %v168
  %v565 = vunpack.c.l.b16 %v169
  %v566 = vunpack.c.l.b16 %v170
  %v567 = vunpack.c.l.b16 %v171
  %v568 = vunpack.c.l.b16 %v172
  %v569 = vunpack.c.l.b16 %v173
  %v570 = vunpack.c.l.b16 %v174
  %v571 = vunpack.c.l.b16 %v175
  %v572 = vunpack.c.l.b16 %v176
  %v573 = vunpack.c.l.b16 %v177
  %v574 = vunpack.c.l.b16 %v178
  %v575 = vunpack.c.l.b16 %v179
  %v576 = vunpack.c.l.b16 %v180
  %v577 = vunpack.c.l.b16 %v181
  %v578 = vunpack.c.l.b16 %v182
  %v579 = vunpack.c.l.b16 %v183
  %v580 = vunpack.c.l.b16 %v184
  %v581 = vunpack.c.l.b16 %v185
  %v582 = vunpack.c.l.b16 %v186
  %v583 = vunpack.c.l.b16 %v187
  %v584 = vunpack.c.l.b16 %v188
  %v585 = vunpack.c.l.b16 %v189
  %v586 = vunpack.c.l.b16 %v190
  %v587 = vunpack.c.l.b16 %v191
  %v588 = vunpack.c.l.b16 %v192
  %v589 = vunpack.c.l.b16 %v193
  %v590 = vunpack.c.l.b16 %v194
  %v591 = vunpack.c.l.b16 %v195
  %v592 = vunpack.c.l.b16 %v196
  %v593 = vunpack.c.l.b16 %v197
  %v594 = vunpack.c.l.b16 %v198
  %v595 = vunpack.c.l.b16 %v199
  %v596 = vunpack.c.l.b16 %v200
  %v597 = vunpack.c.l.b16 %v201
  %v598 = vunpack.c.l.b16 %v202
  %v599 = vunpack.c.l.b16 %v203
  %v600 = vunpack.c.l.b16 %v204
  %v601 = vunpack.c.l.b16 %v205
  %v602 = vunpack.c.l.b16 %v206
  %v603 = vunpack.c.l.b16 %v207
  %v604 = vunpack.c.l.b16 %v208
  %v605 = vunpack.c.l.b16 %v209
  %v606 = vunpack.c.l.b16 %v210
  %v607 = vpack.c.b16 %v412, %v411
  %v608 = vpack.c.b16 %v414, %v413
  %v609 = vpack.c.b16 %v416, %v415
  %v610 = vpack.c.b16 %v418, %v417
  %v611 = vpack.c.b16 %v420, %v419
  %v612 = vpack.c.b16 %v422, %v421
  %v613 = vpack.c.b16 %v424, %v423
  %v614 = vpack.c.b16 %v426, %v425
  %v615 = vpack.c.b16 %v428, %v427
  %v616 = vpack.c.b16 %v430, %v429
  %v617 = vpack.c.b16 %v432, %v431
  %v618 = vpack.c.b16 %v434, %v433
  %v619 = vpack.c.b16 %v436, %v435
  %v620 = vpack.c.b16 %v438, %v437
  %v621 = vpack.c.b16 %v440, %v439
  %v622 = vpack.c.b16 %v442, %v441
  %v623 = vpack.c.b16 %v444, %v443
  %v624 = vpack.c.b16 %v446, %v445
  %v625 = vpack.c.b16 %v448, %v447
  %v626 = vpack.c.b16 %v450, %v449
  %v627 = vpack.c.b16 %v452, %v451
  %v628 = vpack.c.b16 %v454, %v453
  %v629 = vpack.c.b16 %v456, %v455
  %v630 = vpack.c.b16 %v458, %v457
  %v631 = vpack.c.b16 %v460, %v459
  %v632 = vpack.c.b16 %v462, %v461
  %v633 = vpack.c.b16 %v464, %v463
  %v634 = vpack.c.b16 %v466, %v465
  %v635 = vpack.c.b16 %v468, %v467
  %v636 = vpack.c.b16 %v470, %v469
  %v637 = vpack.c.b16 %v472, %v471
  %v638 = vpack.c.b16 %v474, %v473
  %v639 = vpack.c.b16 %v476, %v475
  %v640 = vpack.c.b16 %v478, %v477
  %v641 = vpack.c.b16 %v480, %v479
  %v642 = vpack.c.b16 %v482, %v481
  %v643 = vpack.c.b16 %v484, %v483
  %v644 = vpack.c.b16 %v486, %v485
  %v645 = vpack.c.b16 %v488, %v487
  %v646 = vpack.c.b16 %v490, %v489
  %v647 = vpack.c.b16 %v492, %v491
  %v648 = vpack.c.b16 %v494, %v493
  %v649 = vpack.c.b16 %v496, %v495
  %v650 = vpack.c.b16 %v498, %v497
  %v651 = vpack.c.b16 %v500, %v499
  %v652 = vpack.c.b16 %v502, %v501
  %v653 = vpack.c.b16 %v504, %v503
  %v654 = vpack.c.b16 %v506, %v505
  %v655 = vpack.c.b16 %v508, %v507
  %v656 = vpack.c.b16 %v510, %v509
  %v657 = vpack.c.b16 %v512, %v511
  %v658 = vpack.c.b16 %v514, %v513
  %v659 = vpack.c.b16 %v516, %v515
  %v660 = vpack.c.b16 %v518, %v517
  %v661 = vpack.c.b16 %v520, %v519
  %v662 = vpack.c.b16 %v522, %v521
  %v663 = vpack.c.b16 %v524, %v523
  %v664 = vpack.c.b16 %v526, %v525
  %v665 = vpack.c.b16 %v528, %v527
  %v666 = vpack.c.b16 %v530, %v529
  %v667 = vpack.c.b16 %v532, %v531
  %v668 = vpack.c.b16 %v534, %v533
  %v669 = vpack.c.b16 %v536, %v535
  %v670 = vpack.c.b16 %v538, %v537
  %v671 = vpack.c.b16 %v540, %v539
  %v672 = vpack.c.b16 %v542, %v541
  %v673 = vpack.c.b16 %v544, %v543
  %v674 = vpack.c.b16 %v546, %v545
  %v675 = vpack.c.b16 %v548, %v547
  %v676 = vpack.c.b16 %v550, %v549
  %v677 = vpack.c.b16 %v552, %v551
  %v678 = vpack.c.b16 %v554, %v553
  %v679 = vpack.c.b16 %v556, %v555
  %v680 = vpack.c.b16 %v558, %v557
  %v681 = vpack.c.b16 %v560, %v559
  %v682 = vpack.c.b16 %v562, %v561
  %v683 = vpack.c.b16 %v564, %v563
  %v684 = vpack.c.b16 %v566, %v565
  %v685 = vpack.c.b16 %v568, %v567
  %v686 = vpack.c.b16 %v570, %v569
  %v687 = vpack.c.b16 %v572, %v571
  %v688 = vpack.c.b16 %v574, %v573
  %v689 = vpack.c.b16 %v576, %v575
  %v690 = vpack.c.b16 %v578, %v577
  %v691 = vpack.c.b16 %v580, %v579
  %v692 = vpack.c.b16 %v582, %v581
  %v693 = vpack.c.b16 %v584, %v583
  %v694 = vpack.c.b16 %v586, %v585
  %v695 = vpack.c.b16 %v588, %v587
  %v696 = vpack.c.b16 %v590, %v589
  %v697 = vpack.c.b16 %v592, %v591
  %v698 = vpack.c.b16 %v594, %v593
  %v699 = vpack.c.b16 %v596, %v595
  %v700 = vpack.c.b16 %v598, %v597
  %v701 = vpack.c.b16 %v600, %v599
  %v702 = vpack.c.b16 %v602, %v601
  %v703 = vpack.c.b16 %v604, %v603
  %v704 = vpack.c.b16 %v606, %v605
  %v709 = vunpack.c.l.b16 %v211
  %v710 = vunpack.c.l.b16 %v212
  %v711 = vunpack.c.l.b16 %v213
  %v712 = vunpack.c.l.b16 %v214
  %v713 = vpack.c.b16 %v710, %v709
  %v714 = vpack.c.b16 %v712, %v711
  %vm716 = vcmask 203776
  %v718 = vsel %vm716, %v607, 0
  %v721 = vsel %vm716, %v608, 0
  %v724 = vsel %vm716, %v609, 0
  %v727 = vsel %vm716, %v610, 0
  %v730 = vsel %vm716, %v611, 0
  %v733 = vsel %vm716, %v612, 0
  %v736 = vsel %vm716, %v613, 0
  %v739 = vsel %vm716, %v614, 0
  %v742 = vsel %vm716, %v615, 0
  %v745 = vsel %vm716, %v616, 0
  %v748 = vsel %vm716, %v617, 0
  %v751 = vsel %vm716, %v618, 0
  %v754 = vsel %vm716, %v619, 0
  %v757 = vsel %vm716, %v620, 0
  %v760 = vsel %vm716, %v621, 0
  %v763 = vsel %vm716, %v622, 0
  %v766 = vsel %vm716, %v623, 0
  %v769 = vsel %vm716, %v624, 0
  %v772 = vsel %vm716, %v625, 0
  %v775 = vsel %vm716, %v626, 0
  %v778 = vsel %vm716, %v627, 0
  %v781 = vsel %vm716, %v628, 0
  %v784 = vsel %vm716, %v629, 0
  %v787 = vsel %vm716, %v630, 0
  %v790 = vsel %vm716, %v631, 0
  %v793 = vsel %vm716, %v632, 0
  %v796 = vsel %vm716, %v633, 0
  %v799 = vsel %vm716, %v634, 0
  %v802 = vsel %vm716, %v635, 0
  %v805 = vsel %vm716, %v636, 0
  %v808 = vsel %vm716, %v637, 0
  %v811 = vsel %vm716, %v638, 0
  %v814 = vsel %vm716, %v639, 0
  %v817 = vsel %vm716, %v640, 0
  %v820 = vsel %vm716, %v641, 0
  %v823 = vsel %vm716, %v642, 0
  %v826 = vsel %vm716, %v643, 0
  %v829 = vsel %vm716, %v644, 0
  %v832 = vsel %vm716, %v645, 0
  %v835 = vsel %vm716, %v646, 0
  %v838 = vsel %vm716, %v647, 0
  %v841 = vsel %vm716, %v648, 0
  %v844 = vsel %vm716, %v649, 0
  %v847 = vsel %vm716, %v650, 0
  %v850 = vsel %vm716, %v651, 0
  %v853 = vsel %vm716, %v652, 0
  %v856 = vsel %vm716, %v653, 0
  %v859 = vsel %vm716, %v654, 0
  %v862 = vsel %vm716, %v655, 0
  %v865 = vsel %vm716, %v656, 0
  %v868 = vsel %vm716, %v657, 0
  %v871 = vsel %vm716, %v658, 0
  %v874 = vsel %vm716, %v659, 0
  %v877 = vsel %vm716, %v660, 0
  %v880 = vsel %vm716, %v661, 0
  %v883 = vsel %vm716, %v662, 0
  %v886 = vsel %vm716, %v663, 0
  %v889 = vsel %vm716, %v664, 0
  %v892 = vsel %vm716, %v665, 0
  %v895 = vsel %vm716, %v666, 0
  %v898 = vsel %vm716, %v667, 0
  %v901 = vsel %vm716, %v668, 0
  %v904 = vsel %vm716, %v669, 0
  %v907 = vsel %vm716, %v670, 0
  %v910 = vsel %vm716, %v671, 0
  %v913 = vsel %vm716, %v672, 0
  %v916 = vsel %vm716, %v673, 0
  %v919 = vsel %vm716, %v674, 0
  %v922 = vsel %vm716, %v675, 0
  %v925 = vsel %vm716, %v676, 0
  %v928 = vsel %vm716, %v677, 0
  %v931 = vsel %vm716, %v678, 0
  %v934 = vsel %vm716, %v679, 0
  %v937 = vsel %vm716, %v680, 0
  %v940 = vsel %vm716, %v681, 0
  %v943 = vsel %vm716, %v682, 0
  %v946 = vsel %vm716, %v683, 0
  %v949 = vsel %vm716, %v684, 0
  %v952 = vsel %vm716, %v685, 0
  %v955 = vsel %vm716, %v686, 0
  %v958 = vsel %vm716, %v687, 0
  %v961 = vsel %vm716, %v688, 0
  %v964 = vsel %vm716, %v689, 0
  %v967 = vsel %vm716, %v690, 0
  %v970 = vsel %vm716, %v691, 0
  %v973 = vsel %vm716, %v692, 0
  %v976 = vsel %vm716, %v693, 0
  %v979 = vsel %vm716, %v694, 0
  %v982 = vsel %vm716, %v695, 0
  %v985 = vsel %vm716, %v696, 0
  %v988 = vsel %vm716, %v697, 0
  %v991 = vsel %vm716, %v698, 0
  %v994 = vsel %vm716, %v699, 0
  %v997 = vsel %vm716, %v700, 0
  %v1000 = vsel %vm716, %v701, 0
  %v1003 = vsel %vm716, %v702, 0
  %v1006 = vsel %vm716, %v703, 0
  %v1009 = vsel %vm716, %v704, 0
  %vm1011 = vcmask 1043456
  %vm1012 = vcmask 1044480
  %v1013 = vsel %vm1011, 4294967295, 65535
  %v1014 = vsel %vm1012, %v1013, 0
  %v1016 = vand.u32 %v714, %v1014
  %1018 = vmatprep.subr.bf16.mxu0 0
  %1019 = vmatpush1.bf16.msra.mxu0 %v713
  %1020 = vmatprep.subr.bf16.mxu0 0
  %1021 = vmatpush1.bf16.msra.mxu0 %v1016
  %1022 = vmatprep.subr.bf16.mxu0 0
  %1023 = vmatpush1.bf16.msra.mxu0 0
  %1024 = vmatprep.subr.bf16.mxu0 0
  %1025 = vmatpush1.bf16.msra.mxu0 0
  %1026 = vmatprep.subr.bf16.mxu0 0
  %1027 = vmatpush1.bf16.msra.mxu0 0
  %1028 = vmatprep.subr.bf16.mxu0 0
  %1029 = vmatpush1.bf16.msra.mxu0 0
  %1030 = vmatprep.subr.bf16.mxu0 0
  %1031 = vmatpush1.bf16.msra.mxu0 0
  %1032 = vmatprep.subr.bf16.mxu0 0
  %1033 = vmatpush1.bf16.msra.mxu0 0
  %1034 = vmatprep.subr.bf16.mxu0 0
  %1035 = vmatpush1.bf16.msra.mxu0 0
  %1036 = vmatprep.subr.bf16.mxu0 0
  %1037 = vmatpush1.bf16.msra.mxu0 0
  %1038 = vmatprep.subr.bf16.mxu0 0
  %1039 = vmatpush1.bf16.msra.mxu0 0
  %1040 = vmatprep.subr.bf16.mxu0 0
  %1041 = vmatpush1.bf16.msra.mxu0 0
  %1042 = vmatprep.subr.bf16.mxu0 0
  %1043 = vmatpush1.bf16.msra.mxu0 0
  %1044 = vmatprep.subr.bf16.mxu0 0
  %1045 = vmatpush1.bf16.msra.mxu0 0
  %1046 = vmatprep.subr.bf16.mxu0 0
  %1047 = vmatpush1.bf16.msra.mxu0 0
  %1048 = vmatprep.subr.bf16.mxu0 0
  %1049 = vmatpush1.bf16.msra.mxu0 0
  %1050 = vmatprep.mubr.bf16.mxu0 0
  %1051 = vmatmul.mubr.bf16.gmra.mrb[0].mxu0 %v718
  %v1052 = vpop.f32.mrb[0].mxu0
  %v1053 = vadd.f32 0.0, %v1052
  %v1054 = vpop.f32.mrb[0].mxu0
  %v1055 = vpop.f32.mrb[0].mxu0
  %v1056 = vadd.f32 0.0, %v1055
  %v1057 = vpop.f32.mrb[0].mxu0
  %1058 = vmatprep.mubr.bf16.mxu0 0
  %1059 = vmatmul.mubr.bf16.gmra.mrb[0].mxu0 %v721
  %v1060 = vpop.f32.mrb[0].mxu0
  %v1061 = vadd.f32 0.0, %v1060
  %v1062 = vpop.f32.mrb[0].mxu0
  %v1063 = vpop.f32.mrb[0].mxu0
  %v1064 = vadd.f32 0.0, %v1063
  %v1065 = vpop.f32.mrb[0].mxu0
  %1066 = vmatprep.mubr.bf16.mxu0 0
  %1067 = vmatmul.mubr.bf16.gmra.mrb[0].mxu0 %v724
  %v1068 = vpop.f32.mrb[0].mxu0
  %v1069 = vadd.f32 0.0, %v1068
  %v1070 = vpop.f32.mrb[0].mxu0
  %v1071 = vpop.f32.mrb[0].mxu0
  %v1072 = vadd.f32 0.0, %v1071
  %v1073 = vpop.f32.mrb[0].mxu0
  %1074 = vmatprep.mubr.bf16.mxu0 0
  %1075 = vmatmul.mubr.bf16.gmra.mrb[0].mxu0 %v727
  %v1076 = vpop.f32.mrb[0].mxu0
  %v1077 = vadd.f32 0.0, %v1076
  %v1078 = vpop.f32.mrb[0].mxu0
  %v1079 = vpop.f32.mrb[0].mxu0
  %v1080 = vadd.f32 0.0, %v1079
  %v1081 = vpop.f32.mrb[0].mxu0
  %1082 = vmatprep.mubr.bf16.mxu0 0
  %1083 = vmatmul.mubr.bf16.gmra.mrb[0].mxu0 %v730
  %v1084 = vpop.f32.mrb[0].mxu0
  %v1085 = vadd.f32 0.0, %v1084
  %v1086 = vpop.f32.mrb[0].mxu0
  %v1087 = vpop.f32.mrb[0].mxu0
  %v1088 = vadd.f32 0.0, %v1087
  %v1089 = vpop.f32.mrb[0].mxu0
  %1090 = vmatprep.mubr.bf16.mxu0 0
  %1091 = vmatmul.mubr.bf16.gmra.mrb[0].mxu0 %v733
  %v1092 = vpop.f32.mrb[0].mxu0
  %v1093 = vadd.f32 0.0, %v1092
  %v1094 = vpop.f32.mrb[0].mxu0
  %v1095 = vpop.f32.mrb[0].mxu0
  %v1096 = vadd.f32 0.0, %v1095
  %v1097 = vpop.f32.mrb[0].mxu0
  %1098 = vmatprep.mubr.bf16.mxu0 0
  %1099 = vmatmul.mubr.bf16.gmra.mrb[0].mxu0 %v736
  %v1100 = vpop.f32.mrb[0].mxu0
  %v1101 = vadd.f32 0.0, %v1100
  %v1102 = vpop.f32.mrb[0].mxu0
  %v1103 = vpop.f32.mrb[0].mxu0
  %v1104 = vadd.f32 0.0, %v1103
  %v1105 = vpop.f32.mrb[0].mxu0
  %1106 = vmatprep.mubr.bf16.mxu0 0
  %1107 = vmatmul.mubr.bf16.gmra.mrb[0].mxu0 %v739
  %v1108 = vpop.f32.mrb[0].mxu0
  %v1109 = vadd.f32 0.0, %v1108
  %v1110 = vpop.f32.mrb[0].mxu0
  %v1111 = vpop.f32.mrb[0].mxu0
  %v1112 = vadd.f32 0.0, %v1111
  %v1113 = vpop.f32.mrb[0].mxu0
  %1114 = vmatprep.mubr.bf16.mxu0 0
  %1115 = vmatmul.mubr.bf16.gmra.mrb[0].mxu0 %v742
  %v1116 = vpop.f32.mrb[0].mxu0
  %v1117 = vadd.f32 0.0, %v1116
  %v1118 = vpop.f32.mrb[0].mxu0
  %v1119 = vpop.f32.mrb[0].mxu0
  %v1120 = vadd.f32 0.0, %v1119
  %v1121 = vpop.f32.mrb[0].mxu0
  %1122 = vmatprep.mubr.bf16.mxu0 0
  %1123 = vmatmul.mubr.bf16.gmra.mrb[0].mxu0 %v745
  %v1124 = vpop.f32.mrb[0].mxu0
  %v1125 = vadd.f32 0.0, %v1124
  %v1126 = vpop.f32.mrb[0].mxu0
  %v1127 = vpop.f32.mrb[0].mxu0
  %v1128 = vadd.f32 0.0, %v1127
  %v1129 = vpop.f32.mrb[0].mxu0
  %1130 = vmatprep.mubr.bf16.mxu0 0
  %1131 = vmatmul.mubr.bf16.gmra.mrb[0].mxu0 %v748
  %v1132 = vpop.f32.mrb[0].mxu0
  %v1133 = vadd.f32 0.0, %v1132
  %v1134 = vpop.f32.mrb[0].mxu0
  %v1135 = vpop.f32.mrb[0].mxu0
  %v1136 = vadd.f32 0.0, %v1135
  %v1137 = vpop.f32.mrb[0].mxu0
  %1138 = vmatprep.mubr.bf16.mxu0 0
  %1139 = vmatmul.mubr.bf16.gmra.mrb[0].mxu0 %v751
  %v1140 = vpop.f32.mrb[0].mxu0
  %v1141 = vadd.f32 0.0, %v1140
  %v1142 = vpop.f32.mrb[0].mxu0
  %v1143 = vpop.f32.mrb[0].mxu0
  %v1144 = vadd.f32 0.0, %v1143
  %v1145 = vpop.f32.mrb[0].mxu0
  %1146 = vmatprep.mubr.bf16.mxu0 0
  %1147 = vmatmul.mubr.bf16.gmra.mrb[0].mxu0 %v754
  %v1148 = vpop.f32.mrb[0].mxu0
  %v1149 = vadd.f32 0.0, %v1148
  %v1150 = vpop.f32.mrb[0].mxu0
  %v1151 = vpop.f32.mrb[0].mxu0
  %v1152 = vadd.f32 0.0, %v1151
  %v1153 = vpop.f32.mrb[0].mxu0
  %1154 = vmatprep.mubr.bf16.mxu0 0
  %1155 = vmatmul.mubr.bf16.gmra.mrb[0].mxu0 %v757
  %v1156 = vpop.f32.mrb[0].mxu0
  %v1157 = vadd.f32 0.0, %v1156
  %v1158 = vpop.f32.mrb[0].mxu0
  %v1159 = vpop.f32.mrb[0].mxu0
  %v1160 = vadd.f32 0.0, %v1159
  %v1161 = vpop.f32.mrb[0].mxu0
  %1162 = vmatprep.mubr.bf16.mxu0 0
  %1163 = vmatmul.mubr.bf16.gmra.mrb[0].mxu0 %v760
  %v1164 = vpop.f32.mrb[0].mxu0
  %v1165 = vadd.f32 0.0, %v1164
  %v1166 = vpop.f32.mrb[0].mxu0
  %v1167 = vpop.f32.mrb[0].mxu0
  %v1168 = vadd.f32 0.0, %v1167
  %v1169 = vpop.f32.mrb[0].mxu0
  %1170 = vmatprep.mubr.bf16.mxu0 0
  %1171 = vmatmul.mubr.bf16.gmra.mrb[0].mxu0 %v763
  %v1172 = vpop.f32.mrb[0].mxu0
  %v1173 = vadd.f32 0.0, %v1172
  %v1174 = vpop.f32.mrb[0].mxu0
  %v1175 = vpop.f32.mrb[0].mxu0
  %v1176 = vadd.f32 0.0, %v1175
  %v1177 = vpop.f32.mrb[0].mxu0
  %1178 = vmatprep.mubr.bf16.mxu0 0
  %1179 = vmatmul.mubr.bf16.gmra.mrb[0].mxu0 %v766
  %v1180 = vpop.f32.mrb[0].mxu0
  %v1181 = vadd.f32 0.0, %v1180
  %v1182 = vpop.f32.mrb[0].mxu0
  %v1183 = vpop.f32.mrb[0].mxu0
  %v1184 = vadd.f32 0.0, %v1183
  %v1185 = vpop.f32.mrb[0].mxu0
  %1186 = vmatprep.mubr.bf16.mxu0 0
  %1187 = vmatmul.mubr.bf16.gmra.mrb[0].mxu0 %v769
  %v1188 = vpop.f32.mrb[0].mxu0
  %v1189 = vadd.f32 0.0, %v1188
  %v1190 = vpop.f32.mrb[0].mxu0
  %v1191 = vpop.f32.mrb[0].mxu0
  %v1192 = vadd.f32 0.0, %v1191
  %v1193 = vpop.f32.mrb[0].mxu0
  %1194 = vmatprep.mubr.bf16.mxu0 0
  %1195 = vmatmul.mubr.bf16.gmra.mrb[0].mxu0 %v772
  %v1196 = vpop.f32.mrb[0].mxu0
  %v1197 = vadd.f32 0.0, %v1196
  %v1198 = vpop.f32.mrb[0].mxu0
  %v1199 = vpop.f32.mrb[0].mxu0
  %v1200 = vadd.f32 0.0, %v1199
  %v1201 = vpop.f32.mrb[0].mxu0
  %1202 = vmatprep.mubr.bf16.mxu0 0
  %1203 = vmatmul.mubr.bf16.gmra.mrb[0].mxu0 %v775
  %v1204 = vpop.f32.mrb[0].mxu0
  %v1205 = vadd.f32 0.0, %v1204
  %v1206 = vpop.f32.mrb[0].mxu0
  %v1207 = vpop.f32.mrb[0].mxu0
  %v1208 = vadd.f32 0.0, %v1207
  %v1209 = vpop.f32.mrb[0].mxu0
  %1210 = vmatprep.mubr.bf16.mxu0 0
  %1211 = vmatmul.mubr.bf16.gmra.mrb[0].mxu0 %v778
  %v1212 = vpop.f32.mrb[0].mxu0
  %v1213 = vadd.f32 0.0, %v1212
  %v1214 = vpop.f32.mrb[0].mxu0
  %v1215 = vpop.f32.mrb[0].mxu0
  %v1216 = vadd.f32 0.0, %v1215
  %v1217 = vpop.f32.mrb[0].mxu0
  %1218 = vmatprep.mubr.bf16.mxu0 0
  %1219 = vmatmul.mubr.bf16.gmra.mrb[0].mxu0 %v781
  %v1220 = vpop.f32.mrb[0].mxu0
  %v1221 = vadd.f32 0.0, %v1220
  %v1222 = vpop.f32.mrb[0].mxu0
  %v1223 = vpop.f32.mrb[0].mxu0
  %v1224 = vadd.f32 0.0, %v1223
  %v1225 = vpop.f32.mrb[0].mxu0
  %1226 = vmatprep.mubr.bf16.mxu0 0
  %1227 = vmatmul.mubr.bf16.gmra.mrb[0].mxu0 %v784
  %v1228 = vpop.f32.mrb[0].mxu0
  %v1229 = vadd.f32 0.0, %v1228
  %v1230 = vpop.f32.mrb[0].mxu0
  %v1231 = vpop.f32.mrb[0].mxu0
  %v1232 = vadd.f32 0.0, %v1231
  %v1233 = vpop.f32.mrb[0].mxu0
  %1234 = vmatprep.mubr.bf16.mxu0 0
  %1235 = vmatmul.mubr.bf16.gmra.mrb[0].mxu0 %v787
  %v1236 = vpop.f32.mrb[0].mxu0
  %v1237 = vadd.f32 0.0, %v1236
  %v1238 = vpop.f32.mrb[0].mxu0
  %v1239 = vpop.f32.mrb[0].mxu0
  %v1240 = vadd.f32 0.0, %v1239
  %v1241 = vpop.f32.mrb[0].mxu0
  %1242 = vmatprep.mubr.bf16.mxu0 0
  %1243 = vmatmul.mubr.bf16.gmra.mrb[0].mxu0 %v790
  %v1244 = vpop.f32.mrb[0].mxu0
  %v1245 = vadd.f32 0.0, %v1244
  %v1246 = vpop.f32.mrb[0].mxu0
  %v1247 = vpop.f32.mrb[0].mxu0
  %v1248 = vadd.f32 0.0, %v1247
  %v1249 = vpop.f32.mrb[0].mxu0
  %1250 = vmatprep.mubr.bf16.mxu0 0
  %1251 = vmatmul.mubr.bf16.gmra.mrb[0].mxu0 %v793
  %v1252 = vpop.f32.mrb[0].mxu0
  %v1253 = vadd.f32 0.0, %v1252
  %v1254 = vpop.f32.mrb[0].mxu0
  %v1255 = vpop.f32.mrb[0].mxu0
  %v1256 = vadd.f32 0.0, %v1255
  %v1257 = vpop.f32.mrb[0].mxu0
  %1258 = vmatprep.mubr.bf16.mxu0 0
  %1259 = vmatmul.mubr.bf16.gmra.mrb[0].mxu0 %v796
  %v1260 = vpop.f32.mrb[0].mxu0
  %v1261 = vadd.f32 0.0, %v1260
  %v1262 = vpop.f32.mrb[0].mxu0
  %v1263 = vpop.f32.mrb[0].mxu0
  %v1264 = vadd.f32 0.0, %v1263
  %v1265 = vpop.f32.mrb[0].mxu0
  %1266 = vmatprep.mubr.bf16.mxu0 0
  %1267 = vmatmul.mubr.bf16.gmra.mrb[0].mxu0 %v799
  %v1268 = vpop.f32.mrb[0].mxu0
  %v1269 = vadd.f32 0.0, %v1268
  %v1270 = vpop.f32.mrb[0].mxu0
  %v1271 = vpop.f32.mrb[0].mxu0
  %v1272 = vadd.f32 0.0, %v1271
  %v1273 = vpop.f32.mrb[0].mxu0
  %1274 = vmatprep.mubr.bf16.mxu0 0
  %1275 = vmatmul.mubr.bf16.gmra.mrb[0].mxu0 %v802
  %v1276 = vpop.f32.mrb[0].mxu0
  %v1277 = vadd.f32 0.0, %v1276
  %v1278 = vpop.f32.mrb[0].mxu0
  %v1279 = vpop.f32.mrb[0].mxu0
  %v1280 = vadd.f32 0.0, %v1279
  %v1281 = vpop.f32.mrb[0].mxu0
  %1282 = vmatprep.mubr.bf16.mxu0 0
  %1283 = vmatmul.mubr.bf16.gmra.mrb[0].mxu0 %v805
  %v1284 = vpop.f32.mrb[0].mxu0
  %v1285 = vadd.f32 0.0, %v1284
  %v1286 = vpop.f32.mrb[0].mxu0
  %v1287 = vpop.f32.mrb[0].mxu0
  %v1288 = vadd.f32 0.0, %v1287
  %v1289 = vpop.f32.mrb[0].mxu0
  %1290 = vmatprep.mubr.bf16.mxu0 0
  %1291 = vmatmul.mubr.bf16.gmra.mrb[0].mxu0 %v808
  %v1292 = vpop.f32.mrb[0].mxu0
  %v1293 = vadd.f32 0.0, %v1292
  %v1294 = vpop.f32.mrb[0].mxu0
  %v1295 = vpop.f32.mrb[0].mxu0
  %v1296 = vadd.f32 0.0, %v1295
  %v1297 = vpop.f32.mrb[0].mxu0
  %1298 = vmatprep.mubr.bf16.mxu0 0
  %1299 = vmatmul.mubr.bf16.gmra.mrb[0].mxu0 %v811
  %v1300 = vpop.f32.mrb[0].mxu0
  %v1301 = vadd.f32 0.0, %v1300
  %v1302 = vpop.f32.mrb[0].mxu0
  %v1303 = vpop.f32.mrb[0].mxu0
  %v1304 = vadd.f32 0.0, %v1303
  %v1305 = vpop.f32.mrb[0].mxu0
  %1306 = vmatprep.mubr.bf16.mxu0 0
  %1307 = vmatmul.mubr.bf16.gmra.mrb[0].mxu0 %v814
  %v1308 = vpop.f32.mrb[0].mxu0
  %v1309 = vadd.f32 0.0, %v1308
  %v1310 = vpop.f32.mrb[0].mxu0
  %v1311 = vpop.f32.mrb[0].mxu0
  %v1312 = vadd.f32 0.0, %v1311
  %v1313 = vpop.f32.mrb[0].mxu0
  %1314 = vmatprep.mubr.bf16.mxu0 0
  %1315 = vmatmul.mubr.bf16.gmra.mrb[0].mxu0 %v817
  %v1316 = vpop.f32.mrb[0].mxu0
  %v1317 = vadd.f32 0.0, %v1316
  %v1318 = vpop.f32.mrb[0].mxu0
  %v1319 = vpop.f32.mrb[0].mxu0
  %v1320 = vadd.f32 0.0, %v1319
  %v1321 = vpop.f32.mrb[0].mxu0
  %1322 = vmatprep.mubr.bf16.mxu0 0
  %1323 = vmatmul.mubr.bf16.gmra.mrb[0].mxu0 %v820
  %v1324 = vpop.f32.mrb[0].mxu0
  %v1325 = vadd.f32 0.0, %v1324
  %v1326 = vpop.f32.mrb[0].mxu0
  %v1327 = vpop.f32.mrb[0].mxu0
  %v1328 = vadd.f32 0.0, %v1327
  %v1329 = vpop.f32.mrb[0].mxu0
  %1330 = vmatprep.mubr.bf16.mxu0 0
  %1331 = vmatmul.mubr.bf16.gmra.mrb[0].mxu0 %v823
  %v1332 = vpop.f32.mrb[0].mxu0
  %v1333 = vadd.f32 0.0, %v1332
  %v1334 = vpop.f32.mrb[0].mxu0
  %v1335 = vpop.f32.mrb[0].mxu0
  %v1336 = vadd.f32 0.0, %v1335
  %v1337 = vpop.f32.mrb[0].mxu0
  %1338 = vmatprep.mubr.bf16.mxu0 0
  %1339 = vmatmul.mubr.bf16.gmra.mrb[0].mxu0 %v826
  %v1340 = vpop.f32.mrb[0].mxu0
  %v1341 = vadd.f32 0.0, %v1340
  %v1342 = vpop.f32.mrb[0].mxu0
  %v1343 = vpop.f32.mrb[0].mxu0
  %v1344 = vadd.f32 0.0, %v1343
  %v1345 = vpop.f32.mrb[0].mxu0
  %1346 = vmatprep.mubr.bf16.mxu0 0
  %1347 = vmatmul.mubr.bf16.gmra.mrb[0].mxu0 %v829
  %v1348 = vpop.f32.mrb[0].mxu0
  %v1349 = vadd.f32 0.0, %v1348
  %v1350 = vpop.f32.mrb[0].mxu0
  %v1351 = vpop.f32.mrb[0].mxu0
  %v1352 = vadd.f32 0.0, %v1351
  %v1353 = vpop.f32.mrb[0].mxu0
  %1354 = vmatprep.mubr.bf16.mxu0 0
  %1355 = vmatmul.mubr.bf16.gmra.mrb[0].mxu0 %v832
  %v1356 = vpop.f32.mrb[0].mxu0
  %v1357 = vadd.f32 0.0, %v1356
  %v1358 = vpop.f32.mrb[0].mxu0
  %v1359 = vpop.f32.mrb[0].mxu0
  %v1360 = vadd.f32 0.0, %v1359
  %v1361 = vpop.f32.mrb[0].mxu0
  %1362 = vmatprep.mubr.bf16.mxu0 0
  %1363 = vmatmul.mubr.bf16.gmra.mrb[0].mxu0 %v835
  %v1364 = vpop.f32.mrb[0].mxu0
  %v1365 = vadd.f32 0.0, %v1364
  %v1366 = vpop.f32.mrb[0].mxu0
  %v1367 = vpop.f32.mrb[0].mxu0
  %v1368 = vadd.f32 0.0, %v1367
  %v1369 = vpop.f32.mrb[0].mxu0
  %1370 = vmatprep.mubr.bf16.mxu0 0
  %1371 = vmatmul.mubr.bf16.gmra.mrb[0].mxu0 %v838
  %v1372 = vpop.f32.mrb[0].mxu0
  %v1373 = vadd.f32 0.0, %v1372
  %v1374 = vpop.f32.mrb[0].mxu0
  %v1375 = vpop.f32.mrb[0].mxu0
  %v1376 = vadd.f32 0.0, %v1375
  %v1377 = vpop.f32.mrb[0].mxu0
  %1378 = vmatprep.mubr.bf16.mxu0 0
  %1379 = vmatmul.mubr.bf16.gmra.mrb[0].mxu0 %v841
  %v1380 = vpop.f32.mrb[0].mxu0
  %v1381 = vadd.f32 0.0, %v1380
  %v1382 = vpop.f32.mrb[0].mxu0
  %v1383 = vpop.f32.mrb[0].mxu0
  %v1384 = vadd.f32 0.0, %v1383
  %v1385 = vpop.f32.mrb[0].mxu0
  %1386 = vmatprep.mubr.bf16.mxu0 0
  %1387 = vmatmul.mubr.bf16.gmra.mrb[0].mxu0 %v844
  %v1388 = vpop.f32.mrb[0].mxu0
  %v1389 = vadd.f32 0.0, %v1388
  %v1390 = vpop.f32.mrb[0].mxu0
  %v1391 = vpop.f32.mrb[0].mxu0
  %v1392 = vadd.f32 0.0, %v1391
  %v1393 = vpop.f32.mrb[0].mxu0
  %1394 = vmatprep.mubr.bf16.mxu0 0
  %1395 = vmatmul.mubr.bf16.gmra.mrb[0].mxu0 %v847
  %v1396 = vpop.f32.mrb[0].mxu0
  %v1397 = vadd.f32 0.0, %v1396
  %v1398 = vpop.f32.mrb[0].mxu0
  %v1399 = vpop.f32.mrb[0].mxu0
  %v1400 = vadd.f32 0.0, %v1399
  %v1401 = vpop.f32.mrb[0].mxu0
  %1402 = vmatprep.mubr.bf16.mxu0 0
  %1403 = vmatmul.mubr.bf16.gmra.mrb[0].mxu0 %v850
  %v1404 = vpop.f32.mrb[0].mxu0
  %v1405 = vadd.f32 0.0, %v1404
  %v1406 = vpop.f32.mrb[0].mxu0
  %v1407 = vpop.f32.mrb[0].mxu0
  %v1408 = vadd.f32 0.0, %v1407
  %v1409 = vpop.f32.mrb[0].mxu0
  %1410 = vmatprep.mubr.bf16.mxu0 0
  %1411 = vmatmul.mubr.bf16.gmra.mrb[0].mxu0 %v853
  %v1412 = vpop.f32.mrb[0].mxu0
  %v1413 = vadd.f32 0.0, %v1412
  %v1414 = vpop.f32.mrb[0].mxu0
  %v1415 = vpop.f32.mrb[0].mxu0
  %v1416 = vadd.f32 0.0, %v1415
  %v1417 = vpop.f32.mrb[0].mxu0
  %1418 = vmatprep.mubr.bf16.mxu0 0
  %1419 = vmatmul.mubr.bf16.gmra.mrb[0].mxu0 %v856
  %v1420 = vpop.f32.mrb[0].mxu0
  %v1421 = vadd.f32 0.0, %v1420
  %v1422 = vpop.f32.mrb[0].mxu0
  %v1423 = vpop.f32.mrb[0].mxu0
  %v1424 = vadd.f32 0.0, %v1423
  %v1425 = vpop.f32.mrb[0].mxu0
  %1426 = vmatprep.mubr.bf16.mxu0 0
  %1427 = vmatmul.mubr.bf16.gmra.mrb[0].mxu0 %v859
  %v1428 = vpop.f32.mrb[0].mxu0
  %v1429 = vadd.f32 0.0, %v1428
  %v1430 = vpop.f32.mrb[0].mxu0
  %v1431 = vpop.f32.mrb[0].mxu0
  %v1432 = vadd.f32 0.0, %v1431
  %v1433 = vpop.f32.mrb[0].mxu0
  %1434 = vmatprep.mubr.bf16.mxu0 0
  %1435 = vmatmul.mubr.bf16.gmra.mrb[0].mxu0 %v862
  %v1436 = vpop.f32.mrb[0].mxu0
  %v1437 = vadd.f32 0.0, %v1436
  %v1438 = vpop.f32.mrb[0].mxu0
  %v1439 = vpop.f32.mrb[0].mxu0
  %v1440 = vadd.f32 0.0, %v1439
  %v1441 = vpop.f32.mrb[0].mxu0
  %1442 = vmatprep.mubr.bf16.mxu0 0
  %1443 = vmatmul.mubr.bf16.gmra.mrb[0].mxu0 %v865
  %v1444 = vpop.f32.mrb[0].mxu0
  %v1445 = vadd.f32 0.0, %v1444
  %v1446 = vpop.f32.mrb[0].mxu0
  %v1447 = vpop.f32.mrb[0].mxu0
  %v1448 = vadd.f32 0.0, %v1447
  %v1449 = vpop.f32.mrb[0].mxu0
  %1450 = vmatprep.mubr.bf16.mxu0 0
  %1451 = vmatmul.mubr.bf16.gmra.mrb[0].mxu0 %v868
  %v1452 = vpop.f32.mrb[0].mxu0
  %v1453 = vadd.f32 0.0, %v1452
  %v1454 = vpop.f32.mrb[0].mxu0
  %v1455 = vpop.f32.mrb[0].mxu0
  %v1456 = vadd.f32 0.0, %v1455
  %v1457 = vpop.f32.mrb[0].mxu0
  %1458 = vmatprep.mubr.bf16.mxu0 0
  %1459 = vmatmul.mubr.bf16.gmra.mrb[0].mxu0 %v871
  %v1460 = vpop.f32.mrb[0].mxu0
  %v1461 = vadd.f32 0.0, %v1460
  %v1462 = vpop.f32.mrb[0].mxu0
  %v1463 = vpop.f32.mrb[0].mxu0
  %v1464 = vadd.f32 0.0, %v1463
  %v1465 = vpop.f32.mrb[0].mxu0
  %1466 = vmatprep.mubr.bf16.mxu0 0
  %1467 = vmatmul.mubr.bf16.gmra.mrb[0].mxu0 %v874
  %v1468 = vpop.f32.mrb[0].mxu0
  %v1469 = vadd.f32 0.0, %v1468
  %v1470 = vpop.f32.mrb[0].mxu0
  %v1471 = vpop.f32.mrb[0].mxu0
  %v1472 = vadd.f32 0.0, %v1471
  %v1473 = vpop.f32.mrb[0].mxu0
  %1474 = vmatprep.mubr.bf16.mxu0 0
  %1475 = vmatmul.mubr.bf16.gmra.mrb[0].mxu0 %v877
  %v1476 = vpop.f32.mrb[0].mxu0
  %v1477 = vadd.f32 0.0, %v1476
  %v1478 = vpop.f32.mrb[0].mxu0
  %v1479 = vpop.f32.mrb[0].mxu0
  %v1480 = vadd.f32 0.0, %v1479
  %v1481 = vpop.f32.mrb[0].mxu0
  %1482 = vmatprep.mubr.bf16.mxu0 0
  %1483 = vmatmul.mubr.bf16.gmra.mrb[0].mxu0 %v880
  %v1484 = vpop.f32.mrb[0].mxu0
  %v1485 = vadd.f32 0.0, %v1484
  %v1486 = vpop.f32.mrb[0].mxu0
  %v1487 = vpop.f32.mrb[0].mxu0
  %v1488 = vadd.f32 0.0, %v1487
  %v1489 = vpop.f32.mrb[0].mxu0
  %1490 = vmatprep.mubr.bf16.mxu0 0
  %1491 = vmatmul.mubr.bf16.gmra.mrb[0].mxu0 %v883
  %v1492 = vpop.f32.mrb[0].mxu0
  %v1493 = vadd.f32 0.0, %v1492
  %v1494 = vpop.f32.mrb[0].mxu0
  %v1495 = vpop.f32.mrb[0].mxu0
  %v1496 = vadd.f32 0.0, %v1495
  %v1497 = vpop.f32.mrb[0].mxu0
  %1498 = vmatprep.mubr.bf16.mxu0 0
  %1499 = vmatmul.mubr.bf16.gmra.mrb[0].mxu0 %v886
  %v1500 = vpop.f32.mrb[0].mxu0
  %v1501 = vadd.f32 0.0, %v1500
  %v1502 = vpop.f32.mrb[0].mxu0
  %v1503 = vpop.f32.mrb[0].mxu0
  %v1504 = vadd.f32 0.0, %v1503
  %v1505 = vpop.f32.mrb[0].mxu0
  %1506 = vmatprep.mubr.bf16.mxu0 0
  %1507 = vmatmul.mubr.bf16.gmra.mrb[0].mxu0 %v889
  %v1508 = vpop.f32.mrb[0].mxu0
  %v1509 = vadd.f32 0.0, %v1508
  %v1510 = vpop.f32.mrb[0].mxu0
  %v1511 = vpop.f32.mrb[0].mxu0
  %v1512 = vadd.f32 0.0, %v1511
  %v1513 = vpop.f32.mrb[0].mxu0
  %1514 = vmatprep.mubr.bf16.mxu0 0
  %1515 = vmatmul.mubr.bf16.gmra.mrb[0].mxu0 %v892
  %v1516 = vpop.f32.mrb[0].mxu0
  %v1517 = vadd.f32 0.0, %v1516
  %v1518 = vpop.f32.mrb[0].mxu0
  %v1519 = vpop.f32.mrb[0].mxu0
  %v1520 = vadd.f32 0.0, %v1519
  %v1521 = vpop.f32.mrb[0].mxu0
  %1522 = vmatprep.mubr.bf16.mxu0 0
  %1523 = vmatmul.mubr.bf16.gmra.mrb[0].mxu0 %v895
  %v1524 = vpop.f32.mrb[0].mxu0
  %v1525 = vadd.f32 0.0, %v1524
  %v1526 = vpop.f32.mrb[0].mxu0
  %v1527 = vpop.f32.mrb[0].mxu0
  %v1528 = vadd.f32 0.0, %v1527
  %v1529 = vpop.f32.mrb[0].mxu0
  %1530 = vmatprep.mubr.bf16.mxu0 0
  %1531 = vmatmul.mubr.bf16.gmra.mrb[0].mxu0 %v898
  %v1532 = vpop.f32.mrb[0].mxu0
  %v1533 = vadd.f32 0.0, %v1532
  %v1534 = vpop.f32.mrb[0].mxu0
  %v1535 = vpop.f32.mrb[0].mxu0
  %v1536 = vadd.f32 0.0, %v1535
  %v1537 = vpop.f32.mrb[0].mxu0
  %1538 = vmatprep.mubr.bf16.mxu0 0
  %1539 = vmatmul.mubr.bf16.gmra.mrb[0].mxu0 %v901
  %v1540 = vpop.f32.mrb[0].mxu0
  %v1541 = vadd.f32 0.0, %v1540
  %v1542 = vpop.f32.mrb[0].mxu0
  %v1543 = vpop.f32.mrb[0].mxu0
  %v1544 = vadd.f32 0.0, %v1543
  %v1545 = vpop.f32.mrb[0].mxu0
  %1546 = vmatprep.mubr.bf16.mxu0 0
  %1547 = vmatmul.mubr.bf16.gmra.mrb[0].mxu0 %v904
  %v1548 = vpop.f32.mrb[0].mxu0
  %v1549 = vadd.f32 0.0, %v1548
  %v1550 = vpop.f32.mrb[0].mxu0
  %v1551 = vpop.f32.mrb[0].mxu0
  %v1552 = vadd.f32 0.0, %v1551
  %v1553 = vpop.f32.mrb[0].mxu0
  %1554 = vmatprep.mubr.bf16.mxu0 0
  %1555 = vmatmul.mubr.bf16.gmra.mrb[0].mxu0 %v907
  %v1556 = vpop.f32.mrb[0].mxu0
  %v1557 = vadd.f32 0.0, %v1556
  %v1558 = vpop.f32.mrb[0].mxu0
  %v1559 = vpop.f32.mrb[0].mxu0
  %v1560 = vadd.f32 0.0, %v1559
  %v1561 = vpop.f32.mrb[0].mxu0
  %1562 = vmatprep.mubr.bf16.mxu0 0
  %1563 = vmatmul.mubr.bf16.gmra.mrb[0].mxu0 %v910
  %v1564 = vpop.f32.mrb[0].mxu0
  %v1565 = vadd.f32 0.0, %v1564
  %v1566 = vpop.f32.mrb[0].mxu0
  %v1567 = vpop.f32.mrb[0].mxu0
  %v1568 = vadd.f32 0.0, %v1567
  %v1569 = vpop.f32.mrb[0].mxu0
  %1570 = vmatprep.mubr.bf16.mxu0 0
  %1571 = vmatmul.mubr.bf16.gmra.mrb[0].mxu0 %v913
  %v1572 = vpop.f32.mrb[0].mxu0
  %v1573 = vadd.f32 0.0, %v1572
  %v1574 = vpop.f32.mrb[0].mxu0
  %v1575 = vpop.f32.mrb[0].mxu0
  %v1576 = vadd.f32 0.0, %v1575
  %v1577 = vpop.f32.mrb[0].mxu0
  %1578 = vmatprep.mubr.bf16.mxu0 0
  %1579 = vmatmul.mubr.bf16.gmra.mrb[0].mxu0 %v916
  %v1580 = vpop.f32.mrb[0].mxu0
  %v1581 = vadd.f32 0.0, %v1580
  %v1582 = vpop.f32.mrb[0].mxu0
  %v1583 = vpop.f32.mrb[0].mxu0
  %v1584 = vadd.f32 0.0, %v1583
  %v1585 = vpop.f32.mrb[0].mxu0
  %1586 = vmatprep.mubr.bf16.mxu0 0
  %1587 = vmatmul.mubr.bf16.gmra.mrb[0].mxu0 %v919
  %v1588 = vpop.f32.mrb[0].mxu0
  %v1589 = vadd.f32 0.0, %v1588
  %v1590 = vpop.f32.mrb[0].mxu0
  %v1591 = vpop.f32.mrb[0].mxu0
  %v1592 = vadd.f32 0.0, %v1591
  %v1593 = vpop.f32.mrb[0].mxu0
  %1594 = vmatprep.mubr.bf16.mxu0 0
  %1595 = vmatmul.mubr.bf16.gmra.mrb[0].mxu0 %v922
  %v1596 = vpop.f32.mrb[0].mxu0
  %v1597 = vadd.f32 0.0, %v1596
  %v1598 = vpop.f32.mrb[0].mxu0
  %v1599 = vpop.f32.mrb[0].mxu0
  %v1600 = vadd.f32 0.0, %v1599
  %v1601 = vpop.f32.mrb[0].mxu0
  %1602 = vmatprep.mubr.bf16.mxu0 0
  %1603 = vmatmul.mubr.bf16.gmra.mrb[0].mxu0 %v925
  %v1604 = vpop.f32.mrb[0].mxu0
  %v1605 = vadd.f32 0.0, %v1604
  %v1606 = vpop.f32.mrb[0].mxu0
  %v1607 = vpop.f32.mrb[0].mxu0
  %v1608 = vadd.f32 0.0, %v1607
  %v1609 = vpop.f32.mrb[0].mxu0
  %1610 = vmatprep.mubr.bf16.mxu0 0
  %1611 = vmatmul.mubr.bf16.gmra.mrb[0].mxu0 %v928
  %v1612 = vpop.f32.mrb[0].mxu0
  %v1613 = vadd.f32 0.0, %v1612
  %v1614 = vpop.f32.mrb[0].mxu0
  %v1615 = vpop.f32.mrb[0].mxu0
  %v1616 = vadd.f32 0.0, %v1615
  %v1617 = vpop.f32.mrb[0].mxu0
  %1618 = vmatprep.mubr.bf16.mxu0 0
  %1619 = vmatmul.mubr.bf16.gmra.mrb[0].mxu0 %v931
  %v1620 = vpop.f32.mrb[0].mxu0
  %v1621 = vadd.f32 0.0, %v1620
  %v1622 = vpop.f32.mrb[0].mxu0
  %v1623 = vpop.f32.mrb[0].mxu0
  %v1624 = vadd.f32 0.0, %v1623
  %v1625 = vpop.f32.mrb[0].mxu0
  %1626 = vmatprep.mubr.bf16.mxu0 0
  %1627 = vmatmul.mubr.bf16.gmra.mrb[0].mxu0 %v934
  %v1628 = vpop.f32.mrb[0].mxu0
  %v1629 = vadd.f32 0.0, %v1628
  %v1630 = vpop.f32.mrb[0].mxu0
  %v1631 = vpop.f32.mrb[0].mxu0
  %v1632 = vadd.f32 0.0, %v1631
  %v1633 = vpop.f32.mrb[0].mxu0
  %1634 = vmatprep.mubr.bf16.mxu0 0
  %1635 = vmatmul.mubr.bf16.gmra.mrb[0].mxu0 %v937
  %v1636 = vpop.f32.mrb[0].mxu0
  %v1637 = vadd.f32 0.0, %v1636
  %v1638 = vpop.f32.mrb[0].mxu0
  %v1639 = vpop.f32.mrb[0].mxu0
  %v1640 = vadd.f32 0.0, %v1639
  %v1641 = vpop.f32.mrb[0].mxu0
  %1642 = vmatprep.mubr.bf16.mxu0 0
  %1643 = vmatmul.mubr.bf16.gmra.mrb[0].mxu0 %v940
  %v1644 = vpop.f32.mrb[0].mxu0
  %v1645 = vadd.f32 0.0, %v1644
  %v1646 = vpop.f32.mrb[0].mxu0
  %v1647 = vpop.f32.mrb[0].mxu0
  %v1648 = vadd.f32 0.0, %v1647
  %v1649 = vpop.f32.mrb[0].mxu0
  %1650 = vmatprep.mubr.bf16.mxu0 0
  %1651 = vmatmul.mubr.bf16.gmra.mrb[0].mxu0 %v943
  %v1652 = vpop.f32.mrb[0].mxu0
  %v1653 = vadd.f32 0.0, %v1652
  %v1654 = vpop.f32.mrb[0].mxu0
  %v1655 = vpop.f32.mrb[0].mxu0
  %v1656 = vadd.f32 0.0, %v1655
  %v1657 = vpop.f32.mrb[0].mxu0
  %1658 = vmatprep.mubr.bf16.mxu0 0
  %1659 = vmatmul.mubr.bf16.gmra.mrb[0].mxu0 %v946
  %v1660 = vpop.f32.mrb[0].mxu0
  %v1661 = vadd.f32 0.0, %v1660
  %v1662 = vpop.f32.mrb[0].mxu0
  %v1663 = vpop.f32.mrb[0].mxu0
  %v1664 = vadd.f32 0.0, %v1663
  %v1665 = vpop.f32.mrb[0].mxu0
  %1666 = vmatprep.mubr.bf16.mxu0 0
  %1667 = vmatmul.mubr.bf16.gmra.mrb[0].mxu0 %v949
  %v1668 = vpop.f32.mrb[0].mxu0
  %v1669 = vadd.f32 0.0, %v1668
  %v1670 = vpop.f32.mrb[0].mxu0
  %v1671 = vpop.f32.mrb[0].mxu0
  %v1672 = vadd.f32 0.0, %v1671
  %v1673 = vpop.f32.mrb[0].mxu0
  %1674 = vmatprep.mubr.bf16.mxu0 0
  %1675 = vmatmul.mubr.bf16.gmra.mrb[0].mxu0 %v952
  %v1676 = vpop.f32.mrb[0].mxu0
  %v1677 = vadd.f32 0.0, %v1676
  %v1678 = vpop.f32.mrb[0].mxu0
  %v1679 = vpop.f32.mrb[0].mxu0
  %v1680 = vadd.f32 0.0, %v1679
  %v1681 = vpop.f32.mrb[0].mxu0
  %1682 = vmatprep.mubr.bf16.mxu0 0
  %1683 = vmatmul.mubr.bf16.gmra.mrb[0].mxu0 %v955
  %v1684 = vpop.f32.mrb[0].mxu0
  %v1685 = vadd.f32 0.0, %v1684
  %v1686 = vpop.f32.mrb[0].mxu0
  %v1687 = vpop.f32.mrb[0].mxu0
  %v1688 = vadd.f32 0.0, %v1687
  %v1689 = vpop.f32.mrb[0].mxu0
  %1690 = vmatprep.mubr.bf16.mxu0 0
  %1691 = vmatmul.mubr.bf16.gmra.mrb[0].mxu0 %v958
  %v1692 = vpop.f32.mrb[0].mxu0
  %v1693 = vadd.f32 0.0, %v1692
  %v1694 = vpop.f32.mrb[0].mxu0
  %v1695 = vpop.f32.mrb[0].mxu0
  %v1696 = vadd.f32 0.0, %v1695
  %v1697 = vpop.f32.mrb[0].mxu0
  %1698 = vmatprep.mubr.bf16.mxu0 0
  %1699 = vmatmul.mubr.bf16.gmra.mrb[0].mxu0 %v961
  %v1700 = vpop.f32.mrb[0].mxu0
  %v1701 = vadd.f32 0.0, %v1700
  %v1702 = vpop.f32.mrb[0].mxu0
  %v1703 = vpop.f32.mrb[0].mxu0
  %v1704 = vadd.f32 0.0, %v1703
  %v1705 = vpop.f32.mrb[0].mxu0
  %1706 = vmatprep.mubr.bf16.mxu0 0
  %1707 = vmatmul.mubr.bf16.gmra.mrb[0].mxu0 %v964
  %v1708 = vpop.f32.mrb[0].mxu0
  %v1709 = vadd.f32 0.0, %v1708
  %v1710 = vpop.f32.mrb[0].mxu0
  %v1711 = vpop.f32.mrb[0].mxu0
  %v1712 = vadd.f32 0.0, %v1711
  %v1713 = vpop.f32.mrb[0].mxu0
  %1714 = vmatprep.mubr.bf16.mxu0 0
  %1715 = vmatmul.mubr.bf16.gmra.mrb[0].mxu0 %v967
  %v1716 = vpop.f32.mrb[0].mxu0
  %v1717 = vadd.f32 0.0, %v1716
  %v1718 = vpop.f32.mrb[0].mxu0
  %v1719 = vpop.f32.mrb[0].mxu0
  %v1720 = vadd.f32 0.0, %v1719
  %v1721 = vpop.f32.mrb[0].mxu0
  %1722 = vmatprep.mubr.bf16.mxu0 0
  %1723 = vmatmul.mubr.bf16.gmra.mrb[0].mxu0 %v970
  %v1724 = vpop.f32.mrb[0].mxu0
  %v1725 = vadd.f32 0.0, %v1724
  %v1726 = vpop.f32.mrb[0].mxu0
  %v1727 = vpop.f32.mrb[0].mxu0
  %v1728 = vadd.f32 0.0, %v1727
  %v1729 = vpop.f32.mrb[0].mxu0
  %1730 = vmatprep.mubr.bf16.mxu0 0
  %1731 = vmatmul.mubr.bf16.gmra.mrb[0].mxu0 %v973
  %v1732 = vpop.f32.mrb[0].mxu0
  %v1733 = vadd.f32 0.0, %v1732
  %v1734 = vpop.f32.mrb[0].mxu0
  %v1735 = vpop.f32.mrb[0].mxu0
  %v1736 = vadd.f32 0.0, %v1735
  %v1737 = vpop.f32.mrb[0].mxu0
  %1738 = vmatprep.mubr.bf16.mxu0 0
  %1739 = vmatmul.mubr.bf16.gmra.mrb[0].mxu0 %v976
  %v1740 = vpop.f32.mrb[0].mxu0
  %v1741 = vadd.f32 0.0, %v1740
  %v1742 = vpop.f32.mrb[0].mxu0
  %v1743 = vpop.f32.mrb[0].mxu0
  %v1744 = vadd.f32 0.0, %v1743
  %v1745 = vpop.f32.mrb[0].mxu0
  %1746 = vmatprep.mubr.bf16.mxu0 0
  %1747 = vmatmul.mubr.bf16.gmra.mrb[0].mxu0 %v979
  %v1748 = vpop.f32.mrb[0].mxu0
  %v1749 = vadd.f32 0.0, %v1748
  %v1750 = vpop.f32.mrb[0].mxu0
  %v1751 = vpop.f32.mrb[0].mxu0
  %v1752 = vadd.f32 0.0, %v1751
  %v1753 = vpop.f32.mrb[0].mxu0
  %1754 = vmatprep.mubr.bf16.mxu0 0
  %1755 = vmatmul.mubr.bf16.gmra.mrb[0].mxu0 %v982
  %v1756 = vpop.f32.mrb[0].mxu0
  %v1757 = vadd.f32 0.0, %v1756
  %v1758 = vpop.f32.mrb[0].mxu0
  %v1759 = vpop.f32.mrb[0].mxu0
  %v1760 = vadd.f32 0.0, %v1759
  %v1761 = vpop.f32.mrb[0].mxu0
  %1762 = vmatprep.mubr.bf16.mxu0 0
  %1763 = vmatmul.mubr.bf16.gmra.mrb[0].mxu0 %v985
  %v1764 = vpop.f32.mrb[0].mxu0
  %v1765 = vadd.f32 0.0, %v1764
  %v1766 = vpop.f32.mrb[0].mxu0
  %v1767 = vpop.f32.mrb[0].mxu0
  %v1768 = vadd.f32 0.0, %v1767
  %v1769 = vpop.f32.mrb[0].mxu0
  %1770 = vmatprep.mubr.bf16.mxu0 0
  %1771 = vmatmul.mubr.bf16.gmra.mrb[0].mxu0 %v988
  %v1772 = vpop.f32.mrb[0].mxu0
  %v1773 = vadd.f32 0.0, %v1772
  %v1774 = vpop.f32.mrb[0].mxu0
  %v1775 = vpop.f32.mrb[0].mxu0
  %v1776 = vadd.f32 0.0, %v1775
  %v1777 = vpop.f32.mrb[0].mxu0
  %1778 = vmatprep.mubr.bf16.mxu0 0
  %1779 = vmatmul.mubr.bf16.gmra.mrb[0].mxu0 %v991
  %v1780 = vpop.f32.mrb[0].mxu0
  %v1781 = vadd.f32 0.0, %v1780
  %v1782 = vpop.f32.mrb[0].mxu0
  %v1783 = vpop.f32.mrb[0].mxu0
  %v1784 = vadd.f32 0.0, %v1783
  %v1785 = vpop.f32.mrb[0].mxu0
  %1786 = vmatprep.mubr.bf16.mxu0 0
  %1787 = vmatmul.mubr.bf16.gmra.mrb[0].mxu0 %v994
  %v1788 = vpop.f32.mrb[0].mxu0
  %v1789 = vadd.f32 0.0, %v1788
  %v1790 = vpop.f32.mrb[0].mxu0
  %v1791 = vpop.f32.mrb[0].mxu0
  %v1792 = vadd.f32 0.0, %v1791
  %v1793 = vpop.f32.mrb[0].mxu0
  %1794 = vmatprep.mubr.bf16.mxu0 0
  %1795 = vmatmul.mubr.bf16.gmra.mrb[0].mxu0 %v997
  %v1796 = vpop.f32.mrb[0].mxu0
  %v1797 = vadd.f32 0.0, %v1796
  %v1798 = vpop.f32.mrb[0].mxu0
  %v1799 = vpop.f32.mrb[0].mxu0
  %v1800 = vadd.f32 0.0, %v1799
  %v1801 = vpop.f32.mrb[0].mxu0
  %1802 = vmatprep.mubr.bf16.mxu0 0
  %1803 = vmatmul.mubr.bf16.gmra.mrb[0].mxu0 %v1000
  %v1804 = vpop.f32.mrb[0].mxu0
  %v1805 = vadd.f32 0.0, %v1804
  %v1806 = vpop.f32.mrb[0].mxu0
  %v1807 = vpop.f32.mrb[0].mxu0
  %v1808 = vadd.f32 0.0, %v1807
  %v1809 = vpop.f32.mrb[0].mxu0
  %1810 = vmatprep.mubr.bf16.mxu0 0
  %1811 = vmatmul.mubr.bf16.gmra.mrb[0].mxu0 %v1003
  %v1812 = vpop.f32.mrb[0].mxu0
  %v1813 = vadd.f32 0.0, %v1812
  %v1814 = vpop.f32.mrb[0].mxu0
  %v1815 = vpop.f32.mrb[0].mxu0
  %v1816 = vadd.f32 0.0, %v1815
  %v1817 = vpop.f32.mrb[0].mxu0
  %1818 = vmatprep.mubr.bf16.mxu0 0
  %1819 = vmatmul.mubr.bf16.gmra.mrb[0].mxu0 %v1006
  %v1820 = vpop.f32.mrb[0].mxu0
  %v1821 = vadd.f32 0.0, %v1820
  %v1822 = vpop.f32.mrb[0].mxu0
  %v1823 = vpop.f32.mrb[0].mxu0
  %v1824 = vadd.f32 0.0, %v1823
  %v1825 = vpop.f32.mrb[0].mxu0
  %1826 = vmatprep.mubr.bf16.mxu0 0
  %1827 = vmatmul.mubr.bf16.gmra.mrb[0].mxu0 %v1009
  %v1828 = vpop.f32.mrb[0].mxu0
  %v1829 = vadd.f32 0.0, %v1828
  %v1830 = vpop.f32.mrb[0].mxu0
  %v1831 = vpop.f32.mrb[0].mxu0
  %v1832 = vadd.f32 0.0, %v1831
  %v1833 = vpop.f32.mrb[0].mxu0
  %1834 = vdwg.mxu0
  %v1835 = vmax.f32 %v1053, %v1248
  %v1836 = vmax.f32 %v1056, %v1253
  %v1837 = vmax.f32 %v1061, %v1256
  %v1838 = vmax.f32 %v1064, %v1261
  %v1839 = vmax.f32 %v1069, %v1264
  %v1840 = vmax.f32 %v1072, %v1269
  %v1841 = vmax.f32 %v1077, %v1272
  %v1842 = vmax.f32 %v1080, %v1277
  %v1843 = vmax.f32 %v1085, %v1280
  %v1844 = vmax.f32 %v1088, %v1285
  %v1845 = vmax.f32 %v1093, %v1288
  %v1846 = vmax.f32 %v1096, %v1293
  %v1847 = vmax.f32 %v1101, %v1296
  %v1848 = vmax.f32 %v1104, %v1301
  %v1849 = vmax.f32 %v1109, %v1304
  %v1850 = vmax.f32 %v1112, %v1309
  %v1851 = vmax.f32 %v1117, %v1312
  %v1852 = vmax.f32 %v1120, %v1317
  %v1853 = vmax.f32 %v1125, %v1320
  %v1854 = vmax.f32 %v1128, %v1325
  %v1855 = vmax.f32 %v1133, %v1328
  %v1856 = vmax.f32 %v1136, %v1333
  %v1857 = vmax.f32 %v1141, %v1336
  %v1858 = vmax.f32 %v1144, %v1341
  %v1859 = vmax.f32 %v1149, %v1344
  %v1860 = vmax.f32 %v1152, %v1349
  %v1861 = vmax.f32 %v1157, %v1352
  %v1862 = vmax.f32 %v1160, %v1357
  %v1863 = vmax.f32 %v1165, %v1360
  %v1864 = vmax.f32 %v1168, %v1365
  %v1865 = vmax.f32 %v1173, %v1368
  %v1866 = vmax.f32 %v1176, %v1373
  %v1867 = vmax.f32 %v1181, %v1376
  %v1868 = vmax.f32 %v1184, %v1381
  %v1869 = vmax.f32 %v1189, %v1384
  %v1870 = vmax.f32 %v1192, %v1389
  %v1871 = vmax.f32 %v1197, %v1392
  %v1872 = vmax.f32 %v1200, %v1397
  %v1873 = vmax.f32 %v1205, %v1400
  %v1874 = vmax.f32 %v1208, %v1405
  %v1875 = vmax.f32 %v1213, %v1408
  %v1876 = vmax.f32 %v1216, %v1413
  %v1877 = vmax.f32 %v1221, %v1416
  %v1878 = vmax.f32 %v1224, %v1421
  %v1879 = vmax.f32 %v1229, %v1424
  %v1880 = vmax.f32 %v1232, %v1429
  %v1881 = vmax.f32 %v1237, %v1432
  %v1882 = vmax.f32 %v1240, %v1437
  %v1883 = vmax.f32 %v1245, %v1440
  %v1884 = vmax.f32 %v1445, %v1640
  %v1885 = vmax.f32 %v1448, %v1645
  %v1886 = vmax.f32 %v1453, %v1648
  %v1887 = vmax.f32 %v1456, %v1653
  %v1888 = vmax.f32 %v1461, %v1656
  %v1889 = vmax.f32 %v1464, %v1661
  %v1890 = vmax.f32 %v1469, %v1664
  %v1891 = vmax.f32 %v1472, %v1669
  %v1892 = vmax.f32 %v1477, %v1672
  %v1893 = vmax.f32 %v1480, %v1677
  %v1894 = vmax.f32 %v1485, %v1680
  %v1895 = vmax.f32 %v1488, %v1685
  %v1896 = vmax.f32 %v1493, %v1688
  %v1897 = vmax.f32 %v1496, %v1693
  %v1898 = vmax.f32 %v1501, %v1696
  %v1899 = vmax.f32 %v1504, %v1701
  %v1900 = vmax.f32 %v1509, %v1704
  %v1901 = vmax.f32 %v1512, %v1709
  %v1902 = vmax.f32 %v1517, %v1712
  %v1903 = vmax.f32 %v1520, %v1717
  %v1904 = vmax.f32 %v1525, %v1720
  %v1905 = vmax.f32 %v1528, %v1725
  %v1906 = vmax.f32 %v1533, %v1728
  %v1907 = vmax.f32 %v1536, %v1733
  %v1908 = vmax.f32 %v1541, %v1736
  %v1909 = vmax.f32 %v1544, %v1741
  %v1910 = vmax.f32 %v1549, %v1744
  %v1911 = vmax.f32 %v1552, %v1749
  %v1912 = vmax.f32 %v1557, %v1752
  %v1913 = vmax.f32 %v1560, %v1757
  %v1914 = vmax.f32 %v1565, %v1760
  %v1915 = vmax.f32 %v1568, %v1765
  %v1916 = vmax.f32 %v1573, %v1768
  %v1917 = vmax.f32 %v1576, %v1773
  %v1918 = vmax.f32 %v1581, %v1776
  %v1919 = vmax.f32 %v1584, %v1781
  %v1920 = vmax.f32 %v1589, %v1784
  %v1921 = vmax.f32 %v1592, %v1789
  %v1922 = vmax.f32 %v1597, %v1792
  %v1923 = vmax.f32 %v1600, %v1797
  %v1924 = vmax.f32 %v1605, %v1800
  %v1925 = vmax.f32 %v1608, %v1805
  %v1926 = vmax.f32 %v1613, %v1808
  %v1927 = vmax.f32 %v1616, %v1813
  %v1928 = vmax.f32 %v1621, %v1816
  %v1929 = vmax.f32 %v1624, %v1821
  %v1930 = vmax.f32 %v1629, %v1824
  %v1931 = vmax.f32 %v1632, %v1829
  %v1932 = vmax.f32 %v1637, %v1832
  %v1933 = vmax.f32 %v1835, %v1884
  %v1934 = vmax.f32 %v1836, %v1885
  %v1935 = vmax.f32 %v1837, %v1886
  %v1936 = vmax.f32 %v1838, %v1887
  %v1937 = vmax.f32 %v1839, %v1888
  %v1938 = vmax.f32 %v1840, %v1889
  %v1939 = vmax.f32 %v1841, %v1890
  %v1940 = vmax.f32 %v1842, %v1891
  %v1941 = vmax.f32 %v1843, %v1892
  %v1942 = vmax.f32 %v1844, %v1893
  %v1943 = vmax.f32 %v1845, %v1894
  %v1944 = vmax.f32 %v1846, %v1895
  %v1945 = vmax.f32 %v1847, %v1896
  %v1946 = vmax.f32 %v1848, %v1897
  %v1947 = vmax.f32 %v1849, %v1898
  %v1948 = vmax.f32 %v1850, %v1899
  %v1949 = vmax.f32 %v1851, %v1900
  %v1950 = vmax.f32 %v1852, %v1901
  %v1951 = vmax.f32 %v1853, %v1902
  %v1952 = vmax.f32 %v1854, %v1903
  %v1953 = vmax.f32 %v1855, %v1904
  %v1954 = vmax.f32 %v1856, %v1905
  %v1955 = vmax.f32 %v1857, %v1906
  %v1956 = vmax.f32 %v1858, %v1907
  %v1957 = vmax.f32 %v1859, %v1908
  %v1958 = vmax.f32 %v1860, %v1909
  %v1959 = vmax.f32 %v1861, %v1910
  %v1960 = vmax.f32 %v1862, %v1911
  %v1961 = vmax.f32 %v1863, %v1912
  %v1962 = vmax.f32 %v1864, %v1913
  %v1963 = vmax.f32 %v1865, %v1914
  %v1964 = vmax.f32 %v1866, %v1915
  %v1965 = vmax.f32 %v1867, %v1916
  %v1966 = vmax.f32 %v1868, %v1917
  %v1967 = vmax.f32 %v1869, %v1918
  %v1968 = vmax.f32 %v1870, %v1919
  %v1969 = vmax.f32 %v1871, %v1920
  %v1970 = vmax.f32 %v1872, %v1921
  %v1971 = vmax.f32 %v1873, %v1922
  %v1972 = vmax.f32 %v1874, %v1923
  %v1973 = vmax.f32 %v1875, %v1924
  %v1974 = vmax.f32 %v1876, %v1925
  %v1975 = vmax.f32 %v1877, %v1926
  %v1976 = vmax.f32 %v1878, %v1927
  %v1977 = vmax.f32 %v1879, %v1928
  %v1978 = vmax.f32 %v1880, %v1929
  %v1979 = vmax.f32 %v1881, %v1930
  %v1980 = vmax.f32 %v1882, %v1931
  %v1981 = vmax.f32 %v1883, %v1932
  %v1982 = vld [vmem:[%s2] sm:$0x1]
  %v1984 = vlaneseq
  %v1985 = vshrl.u32 %v1984, 7
  %v1986 = vsub.s32 0, %v1985
  %v1987 = vrot.slane %v1982, %v1986
  %v1989 = vadd.f32 %v1933, %v1987
  %v1990 = vadd.f32 %v1934, %v1987
  %v1991 = vadd.f32 %v1935, %v1987
  %v1992 = vadd.f32 %v1936, %v1987
  %v1993 = vadd.f32 %v1937, %v1987
  %v1994 = vadd.f32 %v1938, %v1987
  %v1995 = vadd.f32 %v1939, %v1987
  %v1996 = vadd.f32 %v1940, %v1987
  %v1997 = vadd.f32 %v1941, %v1987
  %v1998 = vadd.f32 %v1942, %v1987
  %v1999 = vadd.f32 %v1943, %v1987
  %v2000 = vadd.f32 %v1944, %v1987
  %v2001 = vadd.f32 %v1945, %v1987
  %v2002 = vadd.f32 %v1946, %v1987
  %v2003 = vadd.f32 %v1947, %v1987
  %v2004 = vadd.f32 %v1948, %v1987
  %v2005 = vadd.f32 %v1949, %v1987
  %v2006 = vadd.f32 %v1950, %v1987
  %v2007 = vadd.f32 %v1951, %v1987
  %v2008 = vadd.f32 %v1952, %v1987
  %v2009 = vadd.f32 %v1953, %v1987
  %v2010 = vadd.f32 %v1954, %v1987
  %v2011 = vadd.f32 %v1955, %v1987
  %v2012 = vadd.f32 %v1956, %v1987
  %v2013 = vadd.f32 %v1957, %v1987
  %v2014 = vadd.f32 %v1958, %v1987
  %v2015 = vadd.f32 %v1959, %v1987
  %v2016 = vadd.f32 %v1960, %v1987
  %v2017 = vadd.f32 %v1961, %v1987
  %v2018 = vadd.f32 %v1962, %v1987
  %v2019 = vadd.f32 %v1963, %v1987
  %v2020 = vadd.f32 %v1964, %v1987
  %v2021 = vadd.f32 %v1965, %v1987
  %v2022 = vadd.f32 %v1966, %v1987
  %v2023 = vadd.f32 %v1967, %v1987
  %v2024 = vadd.f32 %v1968, %v1987
  %v2025 = vadd.f32 %v1969, %v1987
  %v2026 = vadd.f32 %v1970, %v1987
  %v2027 = vadd.f32 %v1971, %v1987
  %v2028 = vadd.f32 %v1972, %v1987
  %v2029 = vadd.f32 %v1973, %v1987
  %v2030 = vadd.f32 %v1974, %v1987
  %v2031 = vadd.f32 %v1975, %v1987
  %v2032 = vadd.f32 %v1976, %v1987
  %v2033 = vadd.f32 %v1977, %v1987
  %v2034 = vadd.f32 %v1978, %v1987
  %v2035 = vadd.f32 %v1979, %v1987
  %v2036 = vadd.f32 %v1980, %v1987
  %v2037 = vadd.f32 %v1981, %v1987
  %v2038 = vmax.f32 %v1989, 0.0
  %v2039 = vmax.f32 %v1990, 0.0
  %v2040 = vmax.f32 %v1991, 0.0
  %v2041 = vmax.f32 %v1992, 0.0
  %v2042 = vmax.f32 %v1993, 0.0
  %v2043 = vmax.f32 %v1994, 0.0
  %v2044 = vmax.f32 %v1995, 0.0
  %v2045 = vmax.f32 %v1996, 0.0
  %v2046 = vmax.f32 %v1997, 0.0
  %v2047 = vmax.f32 %v1998, 0.0
  %v2048 = vmax.f32 %v1999, 0.0
  %v2049 = vmax.f32 %v2000, 0.0
  %v2050 = vmax.f32 %v2001, 0.0
  %v2051 = vmax.f32 %v2002, 0.0
  %v2052 = vmax.f32 %v2003, 0.0
  %v2053 = vmax.f32 %v2004, 0.0
  %v2054 = vmax.f32 %v2005, 0.0
  %v2055 = vmax.f32 %v2006, 0.0
  %v2056 = vmax.f32 %v2007, 0.0
  %v2057 = vmax.f32 %v2008, 0.0
  %v2058 = vmax.f32 %v2009, 0.0
  %v2059 = vmax.f32 %v2010, 0.0
  %v2060 = vmax.f32 %v2011, 0.0
  %v2061 = vmax.f32 %v2012, 0.0
  %v2062 = vmax.f32 %v2013, 0.0
  %v2063 = vmax.f32 %v2014, 0.0
  %v2064 = vmax.f32 %v2015, 0.0
  %v2065 = vmax.f32 %v2016, 0.0
  %v2066 = vmax.f32 %v2017, 0.0
  %v2067 = vmax.f32 %v2018, 0.0
  %v2068 = vmax.f32 %v2019, 0.0
  %v2069 = vmax.f32 %v2020, 0.0
  %v2070 = vmax.f32 %v2021, 0.0
  %v2071 = vmax.f32 %v2022, 0.0
  %v2072 = vmax.f32 %v2023, 0.0
  %v2073 = vmax.f32 %v2024, 0.0
  %v2074 = vmax.f32 %v2025, 0.0
  %v2075 = vmax.f32 %v2026, 0.0
  %v2076 = vmax.f32 %v2027, 0.0
  %v2077 = vmax.f32 %v2028, 0.0
  %v2078 = vmax.f32 %v2029, 0.0
  %v2079 = vmax.f32 %v2030, 0.0
  %v2080 = vmax.f32 %v2031, 0.0
  %v2081 = vmax.f32 %v2032, 0.0
  %v2082 = vmax.f32 %v2033, 0.0
  %v2083 = vmax.f32 %v2034, 0.0
  %v2084 = vmax.f32 %v2035, 0.0
  %v2085 = vmax.f32 %v2036, 0.0
  %v2086 = vmax.f32 %v2037, 0.0
  %2087 = vst [vmem:[%s3] sm:$0xff] %v2038
  %2088 = vst [vmem:[%s3 + $0x8] sm:$0xff] %v2039
  %2089 = vst [vmem:[%s3 + $0x10] sm:$0xff] %v2040
  %2090 = vst [vmem:[%s3 + $0x18] sm:$0xff] %v2041
  %2091 = vst [vmem:[%s3 + $0x20] sm:$0xff] %v2042
  %2092 = vst [vmem:[%s3 + $0x28] sm:$0xff] %v2043
  %2093 = vst [vmem:[%s3 + $0x30] sm:$0xff] %v2044
  %2094 = vst [vmem:[%s3 + $0x38] sm:$0xff] %v2045
  %2095 = vst [vmem:[%s3 + $0x40] sm:$0xff] %v2046
  %2096 = vst [vmem:[%s3 + $0x48] sm:$0xff] %v2047
  %2097 = vst [vmem:[%s3 + $0x50] sm:$0xff] %v2048
  %2098 = vst [vmem:[%s3 + $0x58] sm:$0xff] %v2049
  %2099 = vst [vmem:[%s3 + $0x60] sm:$0xff] %v2050
  %2100 = vst [vmem:[%s3 + $0x68] sm:$0xff] %v2051
  %2101 = vst [vmem:[%s3 + $0x70] sm:$0xff] %v2052
  %2102 = vst [vmem:[%s3 + $0x78] sm:$0xff] %v2053
  %2103 = vst [vmem:[%s3 + $0x80] sm:$0xff] %v2054
  %2104 = vst [vmem:[%s3 + $0x88] sm:$0xff] %v2055
  %2105 = vst [vmem:[%s3 + $0x90] sm:$0xff] %v2056
  %2106 = vst [vmem:[%s3 + $0x98] sm:$0xff] %v2057
  %2107 = vst [vmem:[%s3 + $0xa0] sm:$0xff] %v2058
  %2108 = vst [vmem:[%s3 + $0xa8] sm:$0xff] %v2059
  %2109 = vst [vmem:[%s3 + $0xb0] sm:$0xff] %v2060
  %2110 = vst [vmem:[%s3 + $0xb8] sm:$0xff] %v2061
  %2111 = vst [vmem:[%s3 + $0xc0] sm:$0xff] %v2062
  %2112 = vst [vmem:[%s3 + $0xc8] sm:$0xff] %v2063
  %2113 = vst [vmem:[%s3 + $0xd0] sm:$0xff] %v2064
  %2114 = vst [vmem:[%s3 + $0xd8] sm:$0xff] %v2065
  %2115 = vst [vmem:[%s3 + $0xe0] sm:$0xff] %v2066
  %2116 = vst [vmem:[%s3 + $0xe8] sm:$0xff] %v2067
  %2117 = vst [vmem:[%s3 + $0xf0] sm:$0xff] %v2068
  %2118 = vst [vmem:[%s3 + $0xf8] sm:$0xff] %v2069
  %2119 = vst [vmem:[%s3 + $0x100] sm:$0xff] %v2070
  %2120 = vst [vmem:[%s3 + $0x108] sm:$0xff] %v2071
  %2121 = vst [vmem:[%s3 + $0x110] sm:$0xff] %v2072
  %2122 = vst [vmem:[%s3 + $0x118] sm:$0xff] %v2073
  %2123 = vst [vmem:[%s3 + $0x120] sm:$0xff] %v2074
  %2124 = vst [vmem:[%s3 + $0x128] sm:$0xff] %v2075
  %2125 = vst [vmem:[%s3 + $0x130] sm:$0xff] %v2076
  %2126 = vst [vmem:[%s3 + $0x138] sm:$0xff] %v2077
  %2127 = vst [vmem:[%s3 + $0x140] sm:$0xff] %v2078
  %2128 = vst [vmem:[%s3 + $0x148] sm:$0xff] %v2079
  %2129 = vst [vmem:[%s3 + $0x150] sm:$0xff] %v2080
  %2130 = vst [vmem:[%s3 + $0x158] sm:$0xff] %v2081
  %2131 = vst [vmem:[%s3 + $0x160] sm:$0xff] %v2082
  %2132 = vst [vmem:[%s3 + $0x168] sm:$0xff] %v2083
  %2133 = vst [vmem:[%s3 + $0x170] sm:$0xff] %v2084
  %2134 = vst [vmem:[%s3 + $0x178] sm:$0xff] %v2085
  %2135 = vst [vmem:[%s3 + $0x180] sm:$0xff] %v2086
  // Predicated region
  $region14: #{net_forward.2} parent=0 // pred_check
    _
  $region15: #{net_forward.2} parent=0 // pred_check_branch
    %2137 = sbr.rel (0) target = $region17
  $region16: #{net_forward.2} parent=0 // pred_region
    _
  $region17: #{net_forward.2} parent=0 // pred_fallthru
    _
  // Predicated region
  $region18: #{net_forward.2} parent=0 // pred_check
    _
  $region19: #{net_forward.2} parent=0 // pred_check_branch
    %2139 = sbr.rel (0) target = $region21
  $region20: #{net_forward.2} parent=0 // pred_region
    _
  $region21: #{net_forward.2} parent=0 // pred_fallthru
    _

// kernel: net_forward.3
$region0: #{net_forward.3}
  #allocation0 [shape = 'u32[]', space=smem, size = 0x4, offset = 0x4, fixed_abs, tag = 'smem constant byte address 0x4 - core index']
  #allocation1 [shape = 'u32[144,128]{1,0:T(1,128)}', space=vmem, size = 0x12000, scoped, tag = 'internal scratch']
  %s0 = inlined_call_operand.vmem [shape: bf16[200,250], index: 0, kind: input, shape index: {}]
  %s1 = inlined_call_operand.vmem [shape: bf16[250,128], index: 1, kind: input, shape index: {}]
  %s2 = inlined_call_operand.vmem [shape: f32[1,128], index: 2, kind: input, shape index: {}]
  %s3 = inlined_call_operand.vmem [shape: bf16[3200,128], index: 3, kind: input, shape index: {}]
  %s4 = inlined_call_operand.vmem [shape: f32[1,128], index: 4, kind: input, shape index: {}]
  %s5 = inlined_call_operand.vmem [shape: bf16[128,128], index: 5, kind: input, shape index: {}]
  %s6 = inlined_call_operand.vmem [shape: f32[1,128], index: 6, kind: input, shape index: {}]
  %s7 = inlined_call_operand.hbm [shape: f32[2,128], index: 7, kind: output, shape index: {0}]
  %s8 = inlined_call_operand.hbm [shape: f32[2,128], index: 8, kind: output, shape index: {1}]
  %9 = xla_tuple %s7, %s8
  %s10 = sld [smem:[#allocation0]]
  $region46: #{net_forward.3} parent=0
    _
  %s12 = ssub.s32 1, %s10
  %s13 = scalar_select 0, %s12, %s10
  $region1: #{net_forward.3} parent=0
    #allocation2 [shape = 'u8[1024]{0}', space=vmem, size = 0x400, scoped, tag = 'output window, operand 0, single buffered']
    #allocation3 [shape = 's32[1]{0}', space=sflag, size = 0x4, scoped, tag = 'scoped memory for net_forward.3']
    #allocation4 [shape = 'u8[1024]{0}', space=vmem, size = 0x400, scoped, tag = 'output window, operand 1, single buffered']
    #allocation5 [shape = 's32[1]{0}', space=sflag, size = 0x4, scoped, tag = 'scoped memory for net_forward.3']
    %14 = vsyncpa [#allocation3], 0
    %15 = vsyncpa [#allocation5], 0
    // Predicated region
    $region2: #{net_forward.3} parent=1 // pred_check
      _
    $region3: #{net_forward.3} parent=1 // pred_check_branch
      %17 = sbr.rel (0) target = $region5
    $region4: #{net_forward.3} parent=1 // pred_region
      _
    $region5: #{net_forward.3} parent=1 // pred_fallthru
      _
    // Predicated region
    $region6: #{net_forward.3} parent=1 // pred_check
      _
    $region7: #{net_forward.3} parent=1 // pred_check_branch
      %19 = sbr.rel (0) target = $region9
    $region8: #{net_forward.3} parent=1 // pred_region
      _
    $region9: #{net_forward.3} parent=1 // pred_fallthru
      _
    // Predicated region
    $region10: #{net_forward.3} parent=1 // pred_check
      _
    $region11: #{net_forward.3} parent=1 // pred_check_branch
      %21 = sbr.rel (0) target = $region13
    $region12: #{net_forward.3} parent=1 // pred_region
      _
    $region13: #{net_forward.3} parent=1 // pred_fallthru
      _
    // Predicated region
    $region14: #{net_forward.3} parent=1 // pred_check
      _
    $region15: #{net_forward.3} parent=1 // pred_check_branch
      %23 = sbr.rel (0) target = $region17
    $region16: #{net_forward.3} parent=1 // pred_region
      _
    $region17: #{net_forward.3} parent=1 // pred_fallthru
      _
    // Predicated region
    $region18: #{net_forward.3} parent=1 // pred_check
      _
    $region19: #{net_forward.3} parent=1 // pred_check_branch
      %25 = sbr.rel (0) target = $region21
    $region20: #{net_forward.3} parent=1 // pred_region
      _
    $region21: #{net_forward.3} parent=1 // pred_fallthru
      _
    // Predicated region
    $region22: #{net_forward.3} parent=1 // pred_check
      _
    $region23: #{net_forward.3} parent=1 // pred_check_branch
      %27 = sbr.rel (0) target = $region25
    $region24: #{net_forward.3} parent=1 // pred_region
      _
    $region25: #{net_forward.3} parent=1 // pred_fallthru
      _
    // Predicated region
    $region26: #{net_forward.3} parent=1 // pred_check
      _
    $region27: #{net_forward.3} parent=1 // pred_check_branch
      %29 = sbr.rel (0) target = $region29
    $region28: #{net_forward.3} parent=1 // pred_region
      _
    $region29: #{net_forward.3} parent=1 // pred_fallthru
      _
    %v31 = vld [vmem:[%s0] sm:$0xff]
    %v32 = vld [vmem:[%s0 + $0x8] sm:$0xff]
    %v33 = vld [vmem:[%s0 + $0x10] sm:$0xff]
    %v34 = vld [vmem:[%s0 + $0x18] sm:$0xff]
    %v35 = vld [vmem:[%s0 + $0x20] sm:$0xff]
    %v36 = vld [vmem:[%s0 + $0x28] sm:$0xff]
    %v37 = vld [vmem:[%s0 + $0x30] sm:$0xff]
    %v38 = vld [vmem:[%s0 + $0x38] sm:$0xff]
    %v39 = vld [vmem:[%s0 + $0x40] sm:$0xff]
    %v40 = vld [vmem:[%s0 + $0x48] sm:$0xff]
    %v41 = vld [vmem:[%s0 + $0x50] sm:$0xff]
    %v42 = vld [vmem:[%s0 + $0x58] sm:$0xff]
    %v43 = vld [vmem:[%s0 + $0x60] sm:$0xff]
    %v44 = vld [vmem:[%s0 + $0x68] sm:$0xff]
    %v45 = vld [vmem:[%s0 + $0x70] sm:$0xff]
    %v46 = vld [vmem:[%s0 + $0x78] sm:$0xff]
    %v47 = vld [vmem:[%s0 + $0x80] sm:$0xff]
    %v48 = vld [vmem:[%s0 + $0x88] sm:$0xff]
    %v49 = vld [vmem:[%s0 + $0x90] sm:$0xff]
    %v50 = vld [vmem:[%s0 + $0x98] sm:$0xff]
    %v51 = vld [vmem:[%s0 + $0xa0] sm:$0xff]
    %v52 = vld [vmem:[%s0 + $0xa8] sm:$0xff]
    %v53 = vld [vmem:[%s0 + $0xb0] sm:$0xff]
    %v54 = vld [vmem:[%s0 + $0xb8] sm:$0xff]
    %v55 = vld [vmem:[%s0 + $0xc0] sm:$0xff]
    %v56 = vld [vmem:[%s1] sm:$0xf]
    %v57 = vld [vmem:[%s1 + $0x4] sm:$0xf]
    %v58 = vld [vmem:[%s1 + $0x8] sm:$0xf]
    %v59 = vld [vmem:[%s1 + $0xc] sm:$0xf]
    %v60 = vld [vmem:[%s1 + $0x10] sm:$0xf]
    %v61 = vld [vmem:[%s1 + $0x14] sm:$0xf]
    %v62 = vld [vmem:[%s1 + $0x18] sm:$0xf]
    %v63 = vld [vmem:[%s1 + $0x1c] sm:$0xf]
    %v64 = vld [vmem:[%s1 + $0x20] sm:$0xf]
    %v65 = vld [vmem:[%s1 + $0x24] sm:$0xf]
    %v66 = vld [vmem:[%s1 + $0x28] sm:$0xf]
    %v67 = vld [vmem:[%s1 + $0x2c] sm:$0xf]
    %v68 = vld [vmem:[%s1 + $0x30] sm:$0xf]
    %v69 = vld [vmem:[%s1 + $0x34] sm:$0xf]
    %v70 = vld [vmem:[%s1 + $0x38] sm:$0xf]
    %v71 = vld [vmem:[%s1 + $0x3c] sm:$0xf]
    %v72 = vld [vmem:[%s1 + $0x40] sm:$0xf]
    %v73 = vld [vmem:[%s1 + $0x44] sm:$0xf]
    %v74 = vld [vmem:[%s1 + $0x48] sm:$0xf]
    %v75 = vld [vmem:[%s1 + $0x4c] sm:$0xf]
    %v76 = vld [vmem:[%s1 + $0x50] sm:$0xf]
    %v77 = vld [vmem:[%s1 + $0x54] sm:$0xf]
    %v78 = vld [vmem:[%s1 + $0x58] sm:$0xf]
    %v79 = vld [vmem:[%s1 + $0x5c] sm:$0xf]
    %v80 = vld [vmem:[%s1 + $0x60] sm:$0xf]
    %v81 = vld [vmem:[%s1 + $0x64] sm:$0xf]
    %v82 = vld [vmem:[%s1 + $0x68] sm:$0xf]
    %v83 = vld [vmem:[%s1 + $0x6c] sm:$0xf]
    %v84 = vld [vmem:[%s1 + $0x70] sm:$0xf]
    %v85 = vld [vmem:[%s1 + $0x74] sm:$0xf]
    %v86 = vld [vmem:[%s1 + $0x78] sm:$0xf]
    %v87 = vld [vmem:[%s1 + $0x7c] sm:$0x1]
    %v113 = vunpack.c.l.b16 %v31
    %v114 = vunpack.c.h.b16 %v31
    %v115 = vunpack.c.l.b16 %v32
    %v116 = vunpack.c.h.b16 %v32
    %v117 = vunpack.c.l.b16 %v33
    %v118 = vunpack.c.h.b16 %v33
    %v119 = vunpack.c.l.b16 %v34
    %v120 = vunpack.c.h.b16 %v34
    %v121 = vunpack.c.l.b16 %v35
    %v122 = vunpack.c.h.b16 %v35
    %v123 = vunpack.c.l.b16 %v36
    %v124 = vunpack.c.h.b16 %v36
    %v125 = vunpack.c.l.b16 %v37
    %v126 = vunpack.c.h.b16 %v37
    %v127 = vunpack.c.l.b16 %v38
    %v128 = vunpack.c.h.b16 %v38
    %v129 = vunpack.c.l.b16 %v39
    %v130 = vunpack.c.h.b16 %v39
    %v131 = vunpack.c.l.b16 %v40
    %v132 = vunpack.c.h.b16 %v40
    %v133 = vunpack.c.l.b16 %v41
    %v134 = vunpack.c.h.b16 %v41
    %v135 = vunpack.c.l.b16 %v42
    %v136 = vunpack.c.h.b16 %v42
    %v137 = vunpack.c.l.b16 %v43
    %v138 = vunpack.c.h.b16 %v43
    %v139 = vunpack.c.l.b16 %v44
    %v140 = vunpack.c.h.b16 %v44
    %v141 = vunpack.c.l.b16 %v45
    %v142 = vunpack.c.h.b16 %v45
    %v143 = vunpack.c.l.b16 %v46
    %v144 = vunpack.c.h.b16 %v46
    %v145 = vunpack.c.l.b16 %v47
    %v146 = vunpack.c.h.b16 %v47
    %v147 = vunpack.c.l.b16 %v48
    %v148 = vunpack.c.h.b16 %v48
    %v149 = vunpack.c.l.b16 %v49
    %v150 = vunpack.c.h.b16 %v49
    %v151 = vunpack.c.l.b16 %v50
    %v152 = vunpack.c.h.b16 %v50
    %v153 = vunpack.c.l.b16 %v51
    %v154 = vunpack.c.h.b16 %v51
    %v155 = vunpack.c.l.b16 %v52
    %v156 = vunpack.c.h.b16 %v52
    %v157 = vunpack.c.l.b16 %v53
    %v158 = vunpack.c.h.b16 %v53
    %v159 = vunpack.c.l.b16 %v54
    %v160 = vunpack.c.h.b16 %v54
    %v161 = vunpack.c.l.b16 %v55
    %v162 = vunpack.c.h.b16 %v55
    %v163 = vpack.c.b16 %v115, %v113
    %v164 = vpack.c.b16 %v116, %v114
    %v165 = vpack.c.b16 %v119, %v117
    %v166 = vpack.c.b16 %v120, %v118
    %v167 = vpack.c.b16 %v123, %v121
    %v168 = vpack.c.b16 %v124, %v122
    %v169 = vpack.c.b16 %v127, %v125
    %v170 = vpack.c.b16 %v128, %v126
    %v171 = vpack.c.b16 %v131, %v129
    %v172 = vpack.c.b16 %v132, %v130
    %v173 = vpack.c.b16 %v135, %v133
    %v174 = vpack.c.b16 %v136, %v134
    %v175 = vpack.c.b16 %v139, %v137
    %v176 = vpack.c.b16 %v140, %v138
    %v177 = vpack.c.b16 %v143, %v141
    %v178 = vpack.c.b16 %v144, %v142
    %v179 = vpack.c.b16 %v147, %v145
    %v180 = vpack.c.b16 %v148, %v146
    %v181 = vpack.c.b16 %v151, %v149
    %v182 = vpack.c.b16 %v152, %v150
    %v183 = vpack.c.b16 %v155, %v153
    %v184 = vpack.c.b16 %v156, %v154
    %v185 = vpack.c.b16 %v159, %v157
    %v186 = vpack.c.b16 %v160, %v158
    %v187 = vpack.c.b16 %v161, %v161
    %v188 = vpack.c.b16 %v162, %v162
    %v234 = vunpack.c.l.b16 %v56
    %v235 = vunpack.c.l.b16 %v57
    %v236 = vunpack.c.l.b16 %v58
    %v237 = vunpack.c.l.b16 %v59
    %v238 = vunpack.c.l.b16 %v60
    %v239 = vunpack.c.l.b16 %v61
    %v240 = vunpack.c.l.b16 %v62
    %v241 = vunpack.c.l.b16 %v63
    %v242 = vunpack.c.l.b16 %v64
    %v243 = vunpack.c.l.b16 %v65
    %v244 = vunpack.c.l.b16 %v66
    %v245 = vunpack.c.l.b16 %v67
    %v246 = vunpack.c.l.b16 %v68
    %v247 = vunpack.c.l.b16 %v69
    %v248 = vunpack.c.l.b16 %v70
    %v249 = vunpack.c.l.b16 %v71
    %v250 = vunpack.c.l.b16 %v72
    %v251 = vunpack.c.l.b16 %v73
    %v252 = vunpack.c.l.b16 %v74
    %v253 = vunpack.c.l.b16 %v75
    %v254 = vunpack.c.l.b16 %v76
    %v255 = vunpack.c.l.b16 %v77
    %v256 = vunpack.c.l.b16 %v78
    %v257 = vunpack.c.l.b16 %v79
    %v258 = vunpack.c.l.b16 %v80
    %v259 = vunpack.c.l.b16 %v81
    %v260 = vunpack.c.l.b16 %v82
    %v261 = vunpack.c.l.b16 %v83
    %v262 = vunpack.c.l.b16 %v84
    %v263 = vunpack.c.l.b16 %v85
    %v264 = vunpack.c.l.b16 %v86
    %v265 = vunpack.c.l.b16 %v87
    %v266 = vpack.c.b16 %v235, %v234
    %v267 = vpack.c.b16 %v237, %v236
    %v268 = vpack.c.b16 %v239, %v238
    %v269 = vpack.c.b16 %v241, %v240
    %v270 = vpack.c.b16 %v243, %v242
    %v271 = vpack.c.b16 %v245, %v244
    %v272 = vpack.c.b16 %v247, %v246
    %v273 = vpack.c.b16 %v249, %v248
    %v274 = vpack.c.b16 %v251, %v250
    %v275 = vpack.c.b16 %v253, %v252
    %v276 = vpack.c.b16 %v255, %v254
    %v277 = vpack.c.b16 %v257, %v256
    %v278 = vpack.c.b16 %v259, %v258
    %v279 = vpack.c.b16 %v261, %v260
    %v280 = vpack.c.b16 %v263, %v262
    %v281 = vpack.c.b16 %v265, %v264
    %vm297 = vcmask 998400
    %v299 = vsel %vm297, %v164, 0
    %v302 = vsel %vm297, %v166, 0
    %v305 = vsel %vm297, %v168, 0
    %v308 = vsel %vm297, %v170, 0
    %v311 = vsel %vm297, %v172, 0
    %v314 = vsel %vm297, %v174, 0
    %v317 = vsel %vm297, %v176, 0
    %v320 = vsel %vm297, %v178, 0
    %v323 = vsel %vm297, %v180, 0
    %v326 = vsel %vm297, %v182, 0
    %v329 = vsel %vm297, %v184, 0
    %v332 = vsel %vm297, %v186, 0
    %v335 = vsel %vm297, %v188, 0
    %vm337 = vcmask 1044480
    %v339 = vsel %vm337, %v281, 0
    %341 = vmatprep.subr.bf16.mxu0 0
    %342 = vmatpush1.bf16.msra.mxu0 %v266
    %343 = vmatprep.subr.bf16.mxu0 0
    %344 = vmatpush1.bf16.msra.mxu0 %v267
    %345 = vmatprep.subr.bf16.mxu0 0
    %346 = vmatpush1.bf16.msra.mxu0 %v268
    %347 = vmatprep.subr.bf16.mxu0 0
    %348 = vmatpush1.bf16.msra.mxu0 %v269
    %349 = vmatprep.subr.bf16.mxu0 0
    %350 = vmatpush1.bf16.msra.mxu0 %v270
    %351 = vmatprep.subr.bf16.mxu0 0
    %352 = vmatpush1.bf16.msra.mxu0 %v271
    %353 = vmatprep.subr.bf16.mxu0 0
    %354 = vmatpush1.bf16.msra.mxu0 %v272
    %355 = vmatprep.subr.bf16.mxu0 0
    %356 = vmatpush1.bf16.msra.mxu0 %v273
    %357 = vmatprep.subr.bf16.mxu0 0
    %358 = vmatpush1.bf16.msra.mxu0 %v274
    %359 = vmatprep.subr.bf16.mxu0 0
    %360 = vmatpush1.bf16.msra.mxu0 %v275
    %361 = vmatprep.subr.bf16.mxu0 0
    %362 = vmatpush1.bf16.msra.mxu0 %v276
    %363 = vmatprep.subr.bf16.mxu0 0
    %364 = vmatpush1.bf16.msra.mxu0 %v277
    %365 = vmatprep.subr.bf16.mxu0 0
    %366 = vmatpush1.bf16.msra.mxu0 %v278
    %367 = vmatprep.subr.bf16.mxu0 0
    %368 = vmatpush1.bf16.msra.mxu0 %v279
    %369 = vmatprep.subr.bf16.mxu0 0
    %370 = vmatpush1.bf16.msra.mxu0 %v280
    %371 = vmatprep.subr.bf16.mxu0 0
    %372 = vmatpush1.bf16.msra.mxu0 %v339
    %373 = vmatprep.mubr.bf16.mxu0 %v299
    %374 = vmatmul.mubr.bf16.gmra.mrb[0].mxu0 %v163
    %v375 = vpop.f32.mrb[0].mxu0
    %v376 = vadd.f32 0.0, %v375
    %v377 = vpop.f32.mrb[0].mxu0
    %v378 = vpop.f32.mrb[0].mxu0
    %v379 = vadd.f32 0.0, %v378
    %v380 = vpop.f32.mrb[0].mxu0
    %381 = vmatprep.mubr.bf16.mxu0 %v302
    %382 = vmatmul.mubr.bf16.gmra.mrb[0].mxu0 %v165
    %v383 = vpop.f32.mrb[0].mxu0
    %v384 = vadd.f32 0.0, %v383
    %v385 = vpop.f32.mrb[0].mxu0
    %v386 = vpop.f32.mrb[0].mxu0
    %v387 = vadd.f32 0.0, %v386
    %v388 = vpop.f32.mrb[0].mxu0
    %389 = vmatprep.mubr.bf16.mxu0 %v305
    %390 = vmatmul.mubr.bf16.gmra.mrb[0].mxu0 %v167
    %v391 = vpop.f32.mrb[0].mxu0
    %v392 = vadd.f32 0.0, %v391
    %v393 = vpop.f32.mrb[0].mxu0
    %v394 = vpop.f32.mrb[0].mxu0
    %v395 = vadd.f32 0.0, %v394
    %v396 = vpop.f32.mrb[0].mxu0
    %397 = vmatprep.mubr.bf16.mxu0 %v308
    %398 = vmatmul.mubr.bf16.gmra.mrb[0].mxu0 %v169
    %v399 = vpop.f32.mrb[0].mxu0
    %v400 = vadd.f32 0.0, %v399
    %v401 = vpop.f32.mrb[0].mxu0
    %v402 = vpop.f32.mrb[0].mxu0
    %v403 = vadd.f32 0.0, %v402
    %v404 = vpop.f32.mrb[0].mxu0
    %405 = vmatprep.mubr.bf16.mxu0 %v311
    %406 = vmatmul.mubr.bf16.gmra.mrb[0].mxu0 %v171
    %v407 = vpop.f32.mrb[0].mxu0
    %v408 = vadd.f32 0.0, %v407
    %v409 = vpop.f32.mrb[0].mxu0
    %v410 = vpop.f32.mrb[0].mxu0
    %v411 = vadd.f32 0.0, %v410
    %v412 = vpop.f32.mrb[0].mxu0
    %413 = vmatprep.mubr.bf16.mxu0 %v314
    %414 = vmatmul.mubr.bf16.gmra.mrb[0].mxu0 %v173
    %v415 = vpop.f32.mrb[0].mxu0
    %v416 = vadd.f32 0.0, %v415
    %v417 = vpop.f32.mrb[0].mxu0
    %v418 = vpop.f32.mrb[0].mxu0
    %v419 = vadd.f32 0.0, %v418
    %v420 = vpop.f32.mrb[0].mxu0
    %421 = vmatprep.mubr.bf16.mxu0 %v317
    %422 = vmatmul.mubr.bf16.gmra.mrb[0].mxu0 %v175
    %v423 = vpop.f32.mrb[0].mxu0
    %v424 = vadd.f32 0.0, %v423
    %v425 = vpop.f32.mrb[0].mxu0
    %v426 = vpop.f32.mrb[0].mxu0
    %v427 = vadd.f32 0.0, %v426
    %v428 = vpop.f32.mrb[0].mxu0
    %429 = vmatprep.mubr.bf16.mxu0 %v320
    %430 = vmatmul.mubr.bf16.gmra.mrb[0].mxu0 %v177
    %v431 = vpop.f32.mrb[0].mxu0
    %v432 = vadd.f32 0.0, %v431
    %v433 = vpop.f32.mrb[0].mxu0
    %v434 = vpop.f32.mrb[0].mxu0
    %v435 = vadd.f32 0.0, %v434
    %v436 = vpop.f32.mrb[0].mxu0
    %437 = vmatprep.mubr.bf16.mxu0 %v323
    %438 = vmatmul.mubr.bf16.gmra.mrb[0].mxu0 %v179
    %v439 = vpop.f32.mrb[0].mxu0
    %v440 = vadd.f32 0.0, %v439
    %v441 = vpop.f32.mrb[0].mxu0
    %v442 = vpop.f32.mrb[0].mxu0
    %v443 = vadd.f32 0.0, %v442
    %v444 = vpop.f32.mrb[0].mxu0
    %445 = vmatprep.mubr.bf16.mxu0 %v326
    %446 = vmatmul.mubr.bf16.gmra.mrb[0].mxu0 %v181
    %v447 = vpop.f32.mrb[0].mxu0
    %v448 = vadd.f32 0.0, %v447
    %v449 = vpop.f32.mrb[0].mxu0
    %v450 = vpop.f32.mrb[0].mxu0
    %v451 = vadd.f32 0.0, %v450
    %v452 = vpop.f32.mrb[0].mxu0
    %453 = vmatprep.mubr.bf16.mxu0 %v329
    %454 = vmatmul.mubr.bf16.gmra.mrb[0].mxu0 %v183
    %v455 = vpop.f32.mrb[0].mxu0
    %v456 = vadd.f32 0.0, %v455
    %v457 = vpop.f32.mrb[0].mxu0
    %v458 = vpop.f32.mrb[0].mxu0
    %v459 = vadd.f32 0.0, %v458
    %v460 = vpop.f32.mrb[0].mxu0
    %461 = vmatprep.mubr.bf16.mxu0 %v332
    %462 = vmatmul.mubr.bf16.gmra.mrb[0].mxu0 %v185
    %v463 = vpop.f32.mrb[0].mxu0
    %v464 = vadd.f32 0.0, %v463
    %v465 = vpop.f32.mrb[0].mxu0
    %v466 = vpop.f32.mrb[0].mxu0
    %v467 = vadd.f32 0.0, %v466
    %v468 = vpop.f32.mrb[0].mxu0
    %469 = vmatprep.mubr.bf16.mxu0 %v335
    %470 = vmatmul.mubr.bf16.gmra.mrb[0].mxu0 %v187
    %v471 = vpop.f32.mrb[0].mxu0
    %v472 = vadd.f32 0.0, %v471
    %v473 = vpop.f32.mrb[0].mxu0
    %v474 = vpop.f32.mrb[0].mxu0
    %v475 = vpop.f32.mrb[0].mxu0
    %476 = vdwg.mxu0
    %vm484 = vcmask 1045504
    %v485 = vrot.slane %v400, 2
    %v486 = vrot.slane %v403, 2
    %v487 = vsel %vm484, %v485, %v486
    %v488 = vrot.slane %v408, 2
    %v489 = vsel %vm484, %v486, %v488
    %v490 = vrot.slane %v411, 2
    %v491 = vsel %vm484, %v488, %v490
    %v492 = vrot.slane %v416, 2
    %v493 = vsel %vm484, %v490, %v492
    %v494 = vrot.slane %v419, 2
    %v495 = vsel %vm484, %v492, %v494
    %v496 = vrot.slane %v424, 2
    %v497 = vsel %vm484, %v494, %v496
    %v505 = vmax.f32 %v376, %v487
    %v506 = vmax.f32 %v379, %v489
    %v507 = vmax.f32 %v384, %v491
    %v508 = vmax.f32 %v387, %v493
    %v509 = vmax.f32 %v392, %v495
    %v510 = vmax.f32 %v395, %v497
    %v511 = vmax.f32 %v400, %v496
    %v519 = vrot.slane %v448, 2
    %v520 = vrot.slane %v451, 2
    %v521 = vsel %vm484, %v519, %v520
    %v522 = vrot.slane %v456, 2
    %v523 = vsel %vm484, %v520, %v522
    %v524 = vrot.slane %v459, 2
    %v525 = vsel %vm484, %v522, %v524
    %v526 = vrot.slane %v464, 2
    %v527 = vsel %vm484, %v524, %v526
    %v528 = vrot.slane %v467, 2
    %v529 = vsel %vm484, %v526, %v528
    %v530 = vrot.slane %v472, 2
    %v531 = vsel %vm484, %v528, %v530
    %v539 = vmax.f32 %v424, %v521
    %v540 = vmax.f32 %v427, %v523
    %v541 = vmax.f32 %v432, %v525
    %v542 = vmax.f32 %v435, %v527
    %v543 = vmax.f32 %v440, %v529
    %v544 = vmax.f32 %v443, %v531
    %v545 = vmax.f32 %v448, %v530
    %vm553 = vcmask 1043456
    %v554 = vrot.slane %v539, 4
    %v555 = vrot.slane %v540, 4
    %v556 = vsel %vm553, %v554, %v555
    %v557 = vrot.slane %v541, 4
    %v558 = vsel %vm553, %v555, %v557
    %v559 = vrot.slane %v542, 4
    %v560 = vsel %vm553, %v557, %v559
    %v561 = vrot.slane %v543, 4
    %v562 = vsel %vm553, %v559, %v561
    %v563 = vrot.slane %v544, 4
    %v564 = vsel %vm553, %v561, %v563
    %v565 = vrot.slane %v545, 4
    %v566 = vsel %vm553, %v563, %v565
    %v574 = vmax.f32 %v505, %v556
    %v575 = vmax.f32 %v506, %v558
    %v576 = vmax.f32 %v507, %v560
    %v577 = vmax.f32 %v508, %v562
    %v578 = vmax.f32 %v509, %v564
    %v579 = vmax.f32 %v510, %v566
    %v580 = vmax.f32 %v511, %v565
    %v581 = vld [vmem:[%s2] sm:$0x1]
    %v583 = vlaneseq
    %v584 = vshrl.u32 %v583, 7
    %v585 = vsub.s32 0, %v584
    %v586 = vrot.slane %v581, %v585
    %v588 = vadd.f32 %v574, %v586
    %v589 = vadd.f32 %v575, %v586
    %v590 = vadd.f32 %v576, %v586
    %v591 = vadd.f32 %v577, %v586
    %v592 = vadd.f32 %v578, %v586
    %v593 = vadd.f32 %v579, %v586
    %v594 = vadd.f32 %v580, %v586
    %v595 = vmax.f32 %v588, 0.0
    %v596 = vmax.f32 %v589, 0.0
    %v597 = vmax.f32 %v590, 0.0
    %v598 = vmax.f32 %v591, 0.0
    %v599 = vmax.f32 %v592, 0.0
    %v600 = vmax.f32 %v593, 0.0
    %v601 = vmax.f32 %v594, 0.0
    %v603 = vrot.slane %v595, 2
    %v605 = vrot.slane %v595, 4
    %v607 = vrot.slane %v595, 6
    %v610 = vrot.slane %v596, 2
    %v612 = vrot.slane %v596, 4
    %v614 = vrot.slane %v596, 6
    %v617 = vrot.slane %v597, 2
    %v619 = vrot.slane %v597, 4
    %v621 = vrot.slane %v597, 6
    %v624 = vrot.slane %v598, 2
    %v626 = vrot.slane %v598, 4
    %v628 = vrot.slane %v598, 6
    %v631 = vrot.slane %v599, 2
    %v633 = vrot.slane %v599, 4
    %v635 = vrot.slane %v599, 6
    %v638 = vrot.slane %v600, 2
    %v640 = vrot.slane %v600, 4
    %v642 = vrot.slane %v600, 6
    %v644 = vpack.c.bf16 %v595, %v595
    %v645 = vpack.c.bf16 %v603, %v603
    %v646 = vpack.c.bf16 %v605, %v605
    %v647 = vpack.c.bf16 %v607, %v607
    %v648 = vpack.c.bf16 %v596, %v596
    %v649 = vpack.c.bf16 %v610, %v610
    %v650 = vpack.c.bf16 %v612, %v612
    %v651 = vpack.c.bf16 %v614, %v614
    %v652 = vpack.c.bf16 %v597, %v597
    %v653 = vpack.c.bf16 %v617, %v617
    %v654 = vpack.c.bf16 %v619, %v619
    %v655 = vpack.c.bf16 %v621, %v621
    %v656 = vpack.c.bf16 %v598, %v598
    %v657 = vpack.c.bf16 %v624, %v624
    %v658 = vpack.c.bf16 %v626, %v626
    %v659 = vpack.c.bf16 %v628, %v628
    %v660 = vpack.c.bf16 %v599, %v599
    %v661 = vpack.c.bf16 %v631, %v631
    %v662 = vpack.c.bf16 %v633, %v633
    %v663 = vpack.c.bf16 %v635, %v635
    %v664 = vpack.c.bf16 %v600, %v600
    %v665 = vpack.c.bf16 %v638, %v638
    %v666 = vpack.c.bf16 %v640, %v640
    %v667 = vpack.c.bf16 %v642, %v642
    %v668 = vpack.c.bf16 %v601, %v601
    %v669 = vld [vmem:[%s3] sm:$0xf]
    %v670 = vld [vmem:[%s3 + $0x4] sm:$0xf]
    %v671 = vld [vmem:[%s3 + $0x8] sm:$0xf]
    %v672 = vld [vmem:[%s3 + $0xc] sm:$0xf]
    %v673 = vld [vmem:[%s3 + $0x10] sm:$0xf]
    %v674 = vld [vmem:[%s3 + $0x14] sm:$0xf]
    %v675 = vld [vmem:[%s3 + $0x18] sm:$0xf]
    %v676 = vld [vmem:[%s3 + $0x1c] sm:$0xf]
    %v677 = vld [vmem:[%s3 + $0x20] sm:$0xf]
    %v678 = vld [vmem:[%s3 + $0x24] sm:$0xf]
    %v679 = vld [vmem:[%s3 + $0x28] sm:$0xf]
    %v680 = vld [vmem:[%s3 + $0x2c] sm:$0xf]
    %v681 = vld [vmem:[%s3 + $0x30] sm:$0xf]
    %v682 = vld [vmem:[%s3 + $0x34] sm:$0xf]
    %v683 = vld [vmem:[%s3 + $0x38] sm:$0xf]
    %v684 = vld [vmem:[%s3 + $0x3c] sm:$0xf]
    %v685 = vld [vmem:[%s3 + $0x40] sm:$0xf]
    %v686 = vld [vmem:[%s3 + $0x44] sm:$0xf]
    %v687 = vld [vmem:[%s3 + $0x48] sm:$0xf]
    %v688 = vld [vmem:[%s3 + $0x4c] sm:$0xf]
    %v689 = vld [vmem:[%s3 + $0x50] sm:$0xf]
    %v690 = vld [vmem:[%s3 + $0x54] sm:$0xf]
    %v691 = vld [vmem:[%s3 + $0x58] sm:$0xf]
    %v692 = vld [vmem:[%s3 + $0x5c] sm:$0xf]
    %v693 = vld [vmem:[%s3 + $0x60] sm:$0xf]
    %v694 = vld [vmem:[%s3 + $0x64] sm:$0xf]
    %v695 = vld [vmem:[%s3 + $0x68] sm:$0xf]
    %v696 = vld [vmem:[%s3 + $0x6c] sm:$0xf]
    %v697 = vld [vmem:[%s3 + $0x70] sm:$0xf]
    %v698 = vld [vmem:[%s3 + $0x74] sm:$0xf]
    %v699 = vld [vmem:[%s3 + $0x78] sm:$0xf]
    %v700 = vld [vmem:[%s3 + $0x7c] sm:$0xf]
    %v701 = vld [vmem:[%s3 + $0x80] sm:$0xf]
    %v702 = vld [vmem:[%s3 + $0x84] sm:$0xf]
    %v703 = vld [vmem:[%s3 + $0x88] sm:$0xf]
    %v704 = vld [vmem:[%s3 + $0x8c] sm:$0xf]
    %v705 = vld [vmem:[%s3 + $0x90] sm:$0xf]
    %v706 = vld [vmem:[%s3 + $0x94] sm:$0xf]
    %v707 = vld [vmem:[%s3 + $0x98] sm:$0xf]
    %v708 = vld [vmem:[%s3 + $0x9c] sm:$0xf]
    %v709 = vld [vmem:[%s3 + $0xa0] sm:$0xf]
    %v710 = vld [vmem:[%s3 + $0xa4] sm:$0xf]
    %v711 = vld [vmem:[%s3 + $0xa8] sm:$0xf]
    %v712 = vld [vmem:[%s3 + $0xac] sm:$0xf]
    %v713 = vld [vmem:[%s3 + $0xb0] sm:$0xf]
    %v714 = vld [vmem:[%s3 + $0xb4] sm:$0xf]
    %v715 = vld [vmem:[%s3 + $0xb8] sm:$0xf]
    %v716 = vld [vmem:[%s3 + $0xbc] sm:$0xf]
    %v717 = vld [vmem:[%s3 + $0xc0] sm:$0xf]
    %v718 = vld [vmem:[%s3 + $0xc4] sm:$0xf]
    %v719 = vld [vmem:[%s3 + $0xc8] sm:$0xf]
    %v720 = vld [vmem:[%s3 + $0xcc] sm:$0xf]
    %v721 = vld [vmem:[%s3 + $0xd0] sm:$0xf]
    %v722 = vld [vmem:[%s3 + $0xd4] sm:$0xf]
    %v723 = vld [vmem:[%s3 + $0xd8] sm:$0xf]
    %v724 = vld [vmem:[%s3 + $0xdc] sm:$0xf]
    %v725 = vld [vmem:[%s3 + $0xe0] sm:$0xf]
    %v726 = vld [vmem:[%s3 + $0xe4] sm:$0xf]
    %v727 = vld [vmem:[%s3 + $0xe8] sm:$0xf]
    %v728 = vld [vmem:[%s3 + $0xec] sm:$0xf]
    %v729 = vld [vmem:[%s3 + $0xf0] sm:$0xf]
    %v730 = vld [vmem:[%s3 + $0xf4] sm:$0xf]
    %v731 = vld [vmem:[%s3 + $0xf8] sm:$0xf]
    %v732 = vld [vmem:[%s3 + $0xfc] sm:$0xf]
    %v733 = vld [vmem:[%s3 + $0x100] sm:$0xf]
    %v734 = vld [vmem:[%s3 + $0x104] sm:$0xf]
    %v735 = vld [vmem:[%s3 + $0x108] sm:$0xf]
    %v736 = vld [vmem:[%s3 + $0x10c] sm:$0xf]
    %v737 = vld [vmem:[%s3 + $0x110] sm:$0xf]
    %v738 = vld [vmem:[%s3 + $0x114] sm:$0xf]
    %v739 = vld [vmem:[%s3 + $0x118] sm:$0xf]
    %v740 = vld [vmem:[%s3 + $0x11c] sm:$0xf]
    %v741 = vld [vmem:[%s3 + $0x120] sm:$0xf]
    %v742 = vld [vmem:[%s3 + $0x124] sm:$0xf]
    %v743 = vld [vmem:[%s3 + $0x128] sm:$0xf]
    %v744 = vld [vmem:[%s3 + $0x12c] sm:$0xf]
    %v745 = vld [vmem:[%s3 + $0x130] sm:$0xf]
    %v746 = vld [vmem:[%s3 + $0x134] sm:$0xf]
    %v747 = vld [vmem:[%s3 + $0x138] sm:$0xf]
    %v748 = vld [vmem:[%s3 + $0x13c] sm:$0xf]
    %v749 = vld [vmem:[%s3 + $0x140] sm:$0xf]
    %v750 = vld [vmem:[%s3 + $0x144] sm:$0xf]
    %v751 = vld [vmem:[%s3 + $0x148] sm:$0xf]
    %v752 = vld [vmem:[%s3 + $0x14c] sm:$0xf]
    %v753 = vld [vmem:[%s3 + $0x150] sm:$0xf]
    %v754 = vld [vmem:[%s3 + $0x154] sm:$0xf]
    %v755 = vld [vmem:[%s3 + $0x158] sm:$0xf]
    %v756 = vld [vmem:[%s3 + $0x15c] sm:$0xf]
    %v757 = vld [vmem:[%s3 + $0x160] sm:$0xf]
    %v758 = vld [vmem:[%s3 + $0x164] sm:$0xf]
    %v759 = vld [vmem:[%s3 + $0x168] sm:$0xf]
    %v760 = vld [vmem:[%s3 + $0x16c] sm:$0xf]
    %v761 = vld [vmem:[%s3 + $0x170] sm:$0xf]
    %v762 = vld [vmem:[%s3 + $0x174] sm:$0xf]
    %v763 = vld [vmem:[%s3 + $0x178] sm:$0xf]
    %v764 = vld [vmem:[%s3 + $0x17c] sm:$0xf]
    %v765 = vld [vmem:[%s3 + $0x180] sm:$0xf]
    %v766 = vld [vmem:[%s3 + $0x184] sm:$0xf]
    %v767 = vld [vmem:[%s3 + $0x188] sm:$0xf]
    %v768 = vld [vmem:[%s3 + $0x18c] sm:$0xf]
    %v769 = vld [vmem:[%s3 + $0x190] sm:$0xf]
    %v770 = vld [vmem:[%s3 + $0x194] sm:$0xf]
    %v771 = vld [vmem:[%s3 + $0x198] sm:$0xf]
    %v772 = vld [vmem:[%s3 + $0x19c] sm:$0xf]
    %v773 = vld [vmem:[%s3 + $0x1a0] sm:$0xf]
    %v774 = vld [vmem:[%s3 + $0x1a4] sm:$0xf]
    %v775 = vld [vmem:[%s3 + $0x1a8] sm:$0xf]
    %v776 = vld [vmem:[%s3 + $0x1ac] sm:$0xf]
    %v777 = vld [vmem:[%s3 + $0x1b0] sm:$0xf]
    %v778 = vld [vmem:[%s3 + $0x1b4] sm:$0xf]
    %v779 = vld [vmem:[%s3 + $0x1b8] sm:$0xf]
    %v780 = vld [vmem:[%s3 + $0x1bc] sm:$0xf]
    %v781 = vld [vmem:[%s3 + $0x1c0] sm:$0xf]
    %v782 = vld [vmem:[%s3 + $0x1c4] sm:$0xf]
    %v783 = vld [vmem:[%s3 + $0x1c8] sm:$0xf]
    %v784 = vld [vmem:[%s3 + $0x1cc] sm:$0xf]
    %v785 = vld [vmem:[%s3 + $0x1d0] sm:$0xf]
    %v786 = vld [vmem:[%s3 + $0x1d4] sm:$0xf]
    %v787 = vld [vmem:[%s3 + $0x1d8] sm:$0xf]
    %v788 = vld [vmem:[%s3 + $0x1dc] sm:$0xf]
    %v789 = vld [vmem:[%s3 + $0x1e0] sm:$0xf]
    %v790 = vld [vmem:[%s3 + $0x1e4] sm:$0xf]
    %v791 = vld [vmem:[%s3 + $0x1e8] sm:$0xf]
    %v792 = vld [vmem:[%s3 + $0x1ec] sm:$0xf]
    %v793 = vld [vmem:[%s3 + $0x1f0] sm:$0xf]
    %v794 = vld [vmem:[%s3 + $0x1f4] sm:$0xf]
    %v795 = vld [vmem:[%s3 + $0x1f8] sm:$0xf]
    %v796 = vld [vmem:[%s3 + $0x1fc] sm:$0xf]
    %v797 = vld [vmem:[%s3 + $0x200] sm:$0xf]
    %v798 = vld [vmem:[%s3 + $0x204] sm:$0xf]
    %v799 = vld [vmem:[%s3 + $0x208] sm:$0xf]
    %v800 = vld [vmem:[%s3 + $0x20c] sm:$0xf]
    %v801 = vld [vmem:[%s3 + $0x210] sm:$0xf]
    %v802 = vld [vmem:[%s3 + $0x214] sm:$0xf]
    %v803 = vld [vmem:[%s3 + $0x218] sm:$0xf]
    %v804 = vld [vmem:[%s3 + $0x21c] sm:$0xf]
    %v805 = vld [vmem:[%s3 + $0x220] sm:$0xf]
    %v806 = vld [vmem:[%s3 + $0x224] sm:$0xf]
    %v807 = vld [vmem:[%s3 + $0x228] sm:$0xf]
    %v808 = vld [vmem:[%s3 + $0x22c] sm:$0xf]
    %v809 = vld [vmem:[%s3 + $0x230] sm:$0xf]
    %v810 = vld [vmem:[%s3 + $0x234] sm:$0xf]
    %v811 = vld [vmem:[%s3 + $0x238] sm:$0xf]
    %v812 = vld [vmem:[%s3 + $0x23c] sm:$0xf]
    %v813 = vld [vmem:[%s3 + $0x240] sm:$0xf]
    %v814 = vld [vmem:[%s3 + $0x244] sm:$0xf]
    %v815 = vld [vmem:[%s3 + $0x248] sm:$0xf]
    %v816 = vld [vmem:[%s3 + $0x24c] sm:$0xf]
    %v817 = vld [vmem:[%s3 + $0x250] sm:$0xf]
    %v818 = vld [vmem:[%s3 + $0x254] sm:$0xf]
    %v819 = vld [vmem:[%s3 + $0x258] sm:$0xf]
    %v820 = vld [vmem:[%s3 + $0x25c] sm:$0xf]
    %v821 = vld [vmem:[%s3 + $0x260] sm:$0xf]
    %v822 = vld [vmem:[%s3 + $0x264] sm:$0xf]
    %v823 = vld [vmem:[%s3 + $0x268] sm:$0xf]
    %v824 = vld [vmem:[%s3 + $0x26c] sm:$0xf]
    %v825 = vld [vmem:[%s3 + $0x270] sm:$0xf]
    %v826 = vld [vmem:[%s3 + $0x274] sm:$0xf]
    %v827 = vld [vmem:[%s3 + $0x278] sm:$0xf]
    %v828 = vld [vmem:[%s3 + $0x27c] sm:$0xf]
    %v829 = vld [vmem:[%s3 + $0x280] sm:$0xf]
    %v830 = vld [vmem:[%s3 + $0x284] sm:$0xf]
    %v831 = vld [vmem:[%s3 + $0x288] sm:$0xf]
    %v832 = vld [vmem:[%s3 + $0x28c] sm:$0xf]
    %v833 = vld [vmem:[%s3 + $0x290] sm:$0xf]
    %v834 = vld [vmem:[%s3 + $0x294] sm:$0xf]
    %v835 = vld [vmem:[%s3 + $0x298] sm:$0xf]
    %v836 = vld [vmem:[%s3 + $0x29c] sm:$0xf]
    %v837 = vld [vmem:[%s3 + $0x2a0] sm:$0xf]
    %v838 = vld [vmem:[%s3 + $0x2a4] sm:$0xf]
    %v839 = vld [vmem:[%s3 + $0x2a8] sm:$0xf]
    %v840 = vld [vmem:[%s3 + $0x2ac] sm:$0xf]
    %v841 = vld [vmem:[%s3 + $0x2b0] sm:$0xf]
    %v842 = vld [vmem:[%s3 + $0x2b4] sm:$0xf]
    %v843 = vld [vmem:[%s3 + $0x2b8] sm:$0xf]
    %v844 = vld [vmem:[%s3 + $0x2bc] sm:$0xf]
    %v845 = vld [vmem:[%s3 + $0x2c0] sm:$0xf]
    %v846 = vld [vmem:[%s3 + $0x2c4] sm:$0xf]
    %v847 = vld [vmem:[%s3 + $0x2c8] sm:$0xf]
    %v848 = vld [vmem:[%s3 + $0x2cc] sm:$0xf]
    %v849 = vld [vmem:[%s3 + $0x2d0] sm:$0xf]
    %v850 = vld [vmem:[%s3 + $0x2d4] sm:$0xf]
    %v851 = vld [vmem:[%s3 + $0x2d8] sm:$0xf]
    %v852 = vld [vmem:[%s3 + $0x2dc] sm:$0xf]
    %v853 = vld [vmem:[%s3 + $0x2e0] sm:$0xf]
    %v854 = vld [vmem:[%s3 + $0x2e4] sm:$0xf]
    %v855 = vld [vmem:[%s3 + $0x2e8] sm:$0xf]
    %v856 = vld [vmem:[%s3 + $0x2ec] sm:$0xf]
    %v857 = vld [vmem:[%s3 + $0x2f0] sm:$0xf]
    %v858 = vld [vmem:[%s3 + $0x2f4] sm:$0xf]
    %v859 = vld [vmem:[%s3 + $0x2f8] sm:$0xf]
    %v860 = vld [vmem:[%s3 + $0x2fc] sm:$0xf]
    %v861 = vld [vmem:[%s3 + $0x300] sm:$0xf]
    %v862 = vld [vmem:[%s3 + $0x304] sm:$0xf]
    %v863 = vld [vmem:[%s3 + $0x308] sm:$0xf]
    %v864 = vld [vmem:[%s3 + $0x30c] sm:$0xf]
    %v865 = vld [vmem:[%s3 + $0x310] sm:$0xf]
    %v866 = vld [vmem:[%s3 + $0x314] sm:$0xf]
    %v867 = vld [vmem:[%s3 + $0x318] sm:$0xf]
    %v868 = vld [vmem:[%s3 + $0x31c] sm:$0xf]
    %v869 = vld [vmem:[%s3 + $0x320] sm:$0xf]
    %v870 = vld [vmem:[%s3 + $0x324] sm:$0xf]
    %v871 = vld [vmem:[%s3 + $0x328] sm:$0xf]
    %v872 = vld [vmem:[%s3 + $0x32c] sm:$0xf]
    %v873 = vld [vmem:[%s3 + $0x330] sm:$0xf]
    %v874 = vld [vmem:[%s3 + $0x334] sm:$0xf]
    %v875 = vld [vmem:[%s3 + $0x338] sm:$0xf]
    %v876 = vld [vmem:[%s3 + $0x33c] sm:$0xf]
    %v877 = vld [vmem:[%s3 + $0x340] sm:$0xf]
    %v878 = vld [vmem:[%s3 + $0x344] sm:$0xf]
    %v879 = vld [vmem:[%s3 + $0x348] sm:$0xf]
    %v880 = vld [vmem:[%s3 + $0x34c] sm:$0xf]
    %v881 = vld [vmem:[%s3 + $0x350] sm:$0xf]
    %v882 = vld [vmem:[%s3 + $0x354] sm:$0xf]
    %v883 = vld [vmem:[%s3 + $0x358] sm:$0xf]
    %v884 = vld [vmem:[%s3 + $0x35c] sm:$0xf]
    %v885 = vld [vmem:[%s3 + $0x360] sm:$0xf]
    %v886 = vld [vmem:[%s3 + $0x364] sm:$0xf]
    %v887 = vld [vmem:[%s3 + $0x368] sm:$0xf]
    %v888 = vld [vmem:[%s3 + $0x36c] sm:$0xf]
    %v889 = vld [vmem:[%s3 + $0x370] sm:$0xf]
    %v890 = vld [vmem:[%s3 + $0x374] sm:$0xf]
    %v891 = vld [vmem:[%s3 + $0x378] sm:$0xf]
    %v892 = vld [vmem:[%s3 + $0x37c] sm:$0xf]
    %v893 = vld [vmem:[%s3 + $0x380] sm:$0xf]
    %v894 = vld [vmem:[%s3 + $0x384] sm:$0xf]
    %v895 = vld [vmem:[%s3 + $0x388] sm:$0xf]
    %v896 = vld [vmem:[%s3 + $0x38c] sm:$0xf]
    %v897 = vld [vmem:[%s3 + $0x390] sm:$0xf]
    %v898 = vld [vmem:[%s3 + $0x394] sm:$0xf]
    %v899 = vld [vmem:[%s3 + $0x398] sm:$0xf]
    %v900 = vld [vmem:[%s3 + $0x39c] sm:$0xf]
    %v901 = vld [vmem:[%s3 + $0x3a0] sm:$0xf]
    %v902 = vld [vmem:[%s3 + $0x3a4] sm:$0xf]
    %v903 = vld [vmem:[%s3 + $0x3a8] sm:$0xf]
    %v904 = vld [vmem:[%s3 + $0x3ac] sm:$0xf]
    %v905 = vld [vmem:[%s3 + $0x3b0] sm:$0xf]
    %v906 = vld [vmem:[%s3 + $0x3b4] sm:$0xf]
    %v907 = vld [vmem:[%s3 + $0x3b8] sm:$0xf]
    %v908 = vld [vmem:[%s3 + $0x3bc] sm:$0xf]
    %v909 = vld [vmem:[%s3 + $0x3c0] sm:$0xf]
    %v910 = vld [vmem:[%s3 + $0x3c4] sm:$0xf]
    %v911 = vld [vmem:[%s3 + $0x3c8] sm:$0xf]
    %v912 = vld [vmem:[%s3 + $0x3cc] sm:$0xf]
    %v913 = vld [vmem:[%s3 + $0x3d0] sm:$0xf]
    %v914 = vld [vmem:[%s3 + $0x3d4] sm:$0xf]
    %v915 = vld [vmem:[%s3 + $0x3d8] sm:$0xf]
    %v916 = vld [vmem:[%s3 + $0x3dc] sm:$0xf]
    %v917 = vld [vmem:[%s3 + $0x3e0] sm:$0xf]
    %v918 = vld [vmem:[%s3 + $0x3e4] sm:$0xf]
    %v919 = vld [vmem:[%s3 + $0x3e8] sm:$0xf]
    %v920 = vld [vmem:[%s3 + $0x3ec] sm:$0xf]
    %v921 = vld [vmem:[%s3 + $0x3f0] sm:$0xf]
    %v922 = vld [vmem:[%s3 + $0x3f4] sm:$0xf]
    %v923 = vld [vmem:[%s3 + $0x3f8] sm:$0xf]
    %v924 = vld [vmem:[%s3 + $0x3fc] sm:$0xf]
    %v925 = vld [vmem:[%s3 + $0x400] sm:$0xf]
    %v926 = vld [vmem:[%s3 + $0x404] sm:$0xf]
    %v927 = vld [vmem:[%s3 + $0x408] sm:$0xf]
    %v928 = vld [vmem:[%s3 + $0x40c] sm:$0xf]
    %v929 = vld [vmem:[%s3 + $0x410] sm:$0xf]
    %v930 = vld [vmem:[%s3 + $0x414] sm:$0xf]
    %v931 = vld [vmem:[%s3 + $0x418] sm:$0xf]
    %v932 = vld [vmem:[%s3 + $0x41c] sm:$0xf]
    %v933 = vld [vmem:[%s3 + $0x420] sm:$0xf]
    %v934 = vld [vmem:[%s3 + $0x424] sm:$0xf]
    %v935 = vld [vmem:[%s3 + $0x428] sm:$0xf]
    %v936 = vld [vmem:[%s3 + $0x42c] sm:$0xf]
    %v937 = vld [vmem:[%s3 + $0x430] sm:$0xf]
    %v938 = vld [vmem:[%s3 + $0x434] sm:$0xf]
    %v939 = vld [vmem:[%s3 + $0x438] sm:$0xf]
    %v940 = vld [vmem:[%s3 + $0x43c] sm:$0xf]
    %v941 = vld [vmem:[%s3 + $0x440] sm:$0xf]
    %v942 = vld [vmem:[%s3 + $0x444] sm:$0xf]
    %v943 = vld [vmem:[%s3 + $0x448] sm:$0xf]
    %v944 = vld [vmem:[%s3 + $0x44c] sm:$0xf]
    %v945 = vld [vmem:[%s3 + $0x450] sm:$0xf]
    %v946 = vld [vmem:[%s3 + $0x454] sm:$0xf]
    %v947 = vld [vmem:[%s3 + $0x458] sm:$0xf]
    %v948 = vld [vmem:[%s3 + $0x45c] sm:$0xf]
    %v949 = vld [vmem:[%s3 + $0x460] sm:$0xf]
    %v950 = vld [vmem:[%s3 + $0x464] sm:$0xf]
    %v951 = vld [vmem:[%s3 + $0x468] sm:$0xf]
    %v952 = vld [vmem:[%s3 + $0x46c] sm:$0xf]
    %v953 = vld [vmem:[%s3 + $0x470] sm:$0xf]
    %v954 = vld [vmem:[%s3 + $0x474] sm:$0xf]
    %v955 = vld [vmem:[%s3 + $0x478] sm:$0xf]
    %v956 = vld [vmem:[%s3 + $0x47c] sm:$0xf]
    %v957 = vld [vmem:[%s3 + $0x480] sm:$0xf]
    %v958 = vld [vmem:[%s3 + $0x484] sm:$0xf]
    %v959 = vld [vmem:[%s3 + $0x488] sm:$0xf]
    %v960 = vld [vmem:[%s3 + $0x48c] sm:$0xf]
    %v961 = vld [vmem:[%s3 + $0x490] sm:$0xf]
    %v962 = vld [vmem:[%s3 + $0x494] sm:$0xf]
    %v963 = vld [vmem:[%s3 + $0x498] sm:$0xf]
    %v964 = vld [vmem:[%s3 + $0x49c] sm:$0xf]
    %v965 = vld [vmem:[%s3 + $0x4a0] sm:$0xf]
    %v966 = vld [vmem:[%s3 + $0x4a4] sm:$0xf]
    %v967 = vld [vmem:[%s3 + $0x4a8] sm:$0xf]
    %v968 = vld [vmem:[%s3 + $0x4ac] sm:$0xf]
    %v969 = vld [vmem:[%s3 + $0x4b0] sm:$0xf]
    %v970 = vld [vmem:[%s3 + $0x4b4] sm:$0xf]
    %v971 = vld [vmem:[%s3 + $0x4b8] sm:$0xf]
    %v972 = vld [vmem:[%s3 + $0x4bc] sm:$0xf]
    %v973 = vld [vmem:[%s3 + $0x4c0] sm:$0xf]
    %v974 = vld [vmem:[%s3 + $0x4c4] sm:$0xf]
    %v975 = vld [vmem:[%s3 + $0x4c8] sm:$0xf]
    %v976 = vld [vmem:[%s3 + $0x4cc] sm:$0xf]
    %v977 = vld [vmem:[%s3 + $0x4d0] sm:$0xf]
    %v978 = vld [vmem:[%s3 + $0x4d4] sm:$0xf]
    %v979 = vld [vmem:[%s3 + $0x4d8] sm:$0xf]
    %v980 = vld [vmem:[%s3 + $0x4dc] sm:$0xf]
    %v981 = vld [vmem:[%s3 + $0x4e0] sm:$0xf]
    %v982 = vld [vmem:[%s3 + $0x4e4] sm:$0xf]
    %v983 = vld [vmem:[%s3 + $0x4e8] sm:$0xf]
    %v984 = vld [vmem:[%s3 + $0x4ec] sm:$0xf]
    %v985 = vld [vmem:[%s3 + $0x4f0] sm:$0xf]
    %v986 = vld [vmem:[%s3 + $0x4f4] sm:$0xf]
    %v987 = vld [vmem:[%s3 + $0x4f8] sm:$0xf]
    %v988 = vld [vmem:[%s3 + $0x4fc] sm:$0xf]
    %v989 = vld [vmem:[%s3 + $0x500] sm:$0xf]
    %v990 = vld [vmem:[%s3 + $0x504] sm:$0xf]
    %v991 = vld [vmem:[%s3 + $0x508] sm:$0xf]
    %v992 = vld [vmem:[%s3 + $0x50c] sm:$0xf]
    %v993 = vld [vmem:[%s3 + $0x510] sm:$0xf]
    %v994 = vld [vmem:[%s3 + $0x514] sm:$0xf]
    %v995 = vld [vmem:[%s3 + $0x518] sm:$0xf]
    %v996 = vld [vmem:[%s3 + $0x51c] sm:$0xf]
    %v997 = vld [vmem:[%s3 + $0x520] sm:$0xf]
    %v998 = vld [vmem:[%s3 + $0x524] sm:$0xf]
    %v999 = vld [vmem:[%s3 + $0x528] sm:$0xf]
    %v1000 = vld [vmem:[%s3 + $0x52c] sm:$0xf]
    %v1001 = vld [vmem:[%s3 + $0x530] sm:$0xf]
    %v1002 = vld [vmem:[%s3 + $0x534] sm:$0xf]
    %v1003 = vld [vmem:[%s3 + $0x538] sm:$0xf]
    %v1004 = vld [vmem:[%s3 + $0x53c] sm:$0xf]
    %v1005 = vld [vmem:[%s3 + $0x540] sm:$0xf]
    %v1006 = vld [vmem:[%s3 + $0x544] sm:$0xf]
    %v1007 = vld [vmem:[%s3 + $0x548] sm:$0xf]
    %v1008 = vld [vmem:[%s3 + $0x54c] sm:$0xf]
    %v1009 = vld [vmem:[%s3 + $0x550] sm:$0xf]
    %v1010 = vld [vmem:[%s3 + $0x554] sm:$0xf]
    %v1011 = vld [vmem:[%s3 + $0x558] sm:$0xf]
    %v1012 = vld [vmem:[%s3 + $0x55c] sm:$0xf]
    %v1013 = vld [vmem:[%s3 + $0x560] sm:$0xf]
    %v1014 = vld [vmem:[%s3 + $0x564] sm:$0xf]
    %v1015 = vld [vmem:[%s3 + $0x568] sm:$0xf]
    %v1016 = vld [vmem:[%s3 + $0x56c] sm:$0xf]
    %v1017 = vld [vmem:[%s3 + $0x570] sm:$0xf]
    %v1018 = vld [vmem:[%s3 + $0x574] sm:$0xf]
    %v1019 = vld [vmem:[%s3 + $0x578] sm:$0xf]
    %v1020 = vld [vmem:[%s3 + $0x57c] sm:$0xf]
    %v1021 = vld [vmem:[%s3 + $0x580] sm:$0xf]
    %v1022 = vld [vmem:[%s3 + $0x584] sm:$0xf]
    %v1023 = vld [vmem:[%s3 + $0x588] sm:$0xf]
    %v1024 = vld [vmem:[%s3 + $0x58c] sm:$0xf]
    %v1025 = vld [vmem:[%s3 + $0x590] sm:$0xf]
    %v1026 = vld [vmem:[%s3 + $0x594] sm:$0xf]
    %v1027 = vld [vmem:[%s3 + $0x598] sm:$0xf]
    %v1028 = vld [vmem:[%s3 + $0x59c] sm:$0xf]
    %v1029 = vld [vmem:[%s3 + $0x5a0] sm:$0xf]
    %v1030 = vld [vmem:[%s3 + $0x5a4] sm:$0xf]
    %v1031 = vld [vmem:[%s3 + $0x5a8] sm:$0xf]
    %v1032 = vld [vmem:[%s3 + $0x5ac] sm:$0xf]
    %v1033 = vld [vmem:[%s3 + $0x5b0] sm:$0xf]
    %v1034 = vld [vmem:[%s3 + $0x5b4] sm:$0xf]
    %v1035 = vld [vmem:[%s3 + $0x5b8] sm:$0xf]
    %v1036 = vld [vmem:[%s3 + $0x5bc] sm:$0xf]
    %v1037 = vld [vmem:[%s3 + $0x5c0] sm:$0xf]
    %v1038 = vld [vmem:[%s3 + $0x5c4] sm:$0xf]
    %v1039 = vld [vmem:[%s3 + $0x5c8] sm:$0xf]
    %v1040 = vld [vmem:[%s3 + $0x5cc] sm:$0xf]
    %v1041 = vld [vmem:[%s3 + $0x5d0] sm:$0xf]
    %v1042 = vld [vmem:[%s3 + $0x5d4] sm:$0xf]
    %v1043 = vld [vmem:[%s3 + $0x5d8] sm:$0xf]
    %v1044 = vld [vmem:[%s3 + $0x5dc] sm:$0xf]
    %v1045 = vld [vmem:[%s3 + $0x5e0] sm:$0xf]
    %v1046 = vld [vmem:[%s3 + $0x5e4] sm:$0xf]
    %v1047 = vld [vmem:[%s3 + $0x5e8] sm:$0xf]
    %v1048 = vld [vmem:[%s3 + $0x5ec] sm:$0xf]
    %v1049 = vld [vmem:[%s3 + $0x5f0] sm:$0xf]
    %v1050 = vld [vmem:[%s3 + $0x5f4] sm:$0xf]
    %v1051 = vld [vmem:[%s3 + $0x5f8] sm:$0xf]
    %v1052 = vld [vmem:[%s3 + $0x5fc] sm:$0xf]
    %v1053 = vld [vmem:[%s3 + $0x600] sm:$0xf]
    %v1054 = vld [vmem:[%s3 + $0x604] sm:$0xf]
    %v1055 = vld [vmem:[%s3 + $0x608] sm:$0xf]
    %v1056 = vld [vmem:[%s3 + $0x60c] sm:$0xf]
    %v1057 = vld [vmem:[%s3 + $0x610] sm:$0xf]
    %v1058 = vld [vmem:[%s3 + $0x614] sm:$0xf]
    %v1059 = vld [vmem:[%s3 + $0x618] sm:$0xf]
    %v1060 = vld [vmem:[%s3 + $0x61c] sm:$0xf]
    %v1061 = vld [vmem:[%s3 + $0x620] sm:$0xf]
    %v1062 = vld [vmem:[%s3 + $0x624] sm:$0xf]
    %v1063 = vld [vmem:[%s3 + $0x628] sm:$0xf]
    %v1064 = vld [vmem:[%s3 + $0x62c] sm:$0xf]
    %v1065 = vld [vmem:[%s3 + $0x630] sm:$0xf]
    %v1066 = vld [vmem:[%s3 + $0x634] sm:$0xf]
    %v1067 = vld [vmem:[%s3 + $0x638] sm:$0xf]
    %v1068 = vld [vmem:[%s3 + $0x63c] sm:$0xf]
    %v1069 = vld [vmem:[%s4] sm:$0x1]
    %v1071 = vlaneseq
    %v1072 = vshrl.u32 %v1071, 7
    %v1073 = vsub.s32 0, %v1072
    %v1074 = vrot.slane %v1069, %v1073
    %v1476 = vunpack.c.l.b16 %v669
    %v1477 = vunpack.c.l.b16 %v670
    %v1478 = vunpack.c.l.b16 %v671
    %v1479 = vunpack.c.l.b16 %v672
    %v1480 = vunpack.c.l.b16 %v673
    %v1481 = vunpack.c.l.b16 %v674
    %v1482 = vunpack.c.l.b16 %v675
    %v1483 = vunpack.c.l.b16 %v676
    %v1484 = vunpack.c.l.b16 %v677
    %v1485 = vunpack.c.l.b16 %v678
    %v1486 = vunpack.c.l.b16 %v679
    %v1487 = vunpack.c.l.b16 %v680
    %v1488 = vunpack.c.l.b16 %v681
    %v1489 = vunpack.c.l.b16 %v682
    %v1490 = vunpack.c.l.b16 %v683
    %v1491 = vunpack.c.l.b16 %v684
    %v1492 = vunpack.c.l.b16 %v685
    %v1493 = vunpack.c.l.b16 %v686
    %v1494 = vunpack.c.l.b16 %v687
    %v1495 = vunpack.c.l.b16 %v688
    %v1496 = vunpack.c.l.b16 %v689
    %v1497 = vunpack.c.l.b16 %v690
    %v1498 = vunpack.c.l.b16 %v691
    %v1499 = vunpack.c.l.b16 %v692
    %v1500 = vunpack.c.l.b16 %v693
    %v1501 = vunpack.c.l.b16 %v694
    %v1502 = vunpack.c.l.b16 %v695
    %v1503 = vunpack.c.l.b16 %v696
    %v1504 = vunpack.c.l.b16 %v697
    %v1505 = vunpack.c.l.b16 %v698
    %v1506 = vunpack.c.l.b16 %v699
    %v1507 = vunpack.c.l.b16 %v700
    %v1508 = vunpack.c.l.b16 %v701
    %v1509 = vunpack.c.l.b16 %v702
    %v1510 = vunpack.c.l.b16 %v703
    %v1511 = vunpack.c.l.b16 %v704
    %v1512 = vunpack.c.l.b16 %v705
    %v1513 = vunpack.c.l.b16 %v706
    %v1514 = vunpack.c.l.b16 %v707
    %v1515 = vunpack.c.l.b16 %v708
    %v1516 = vunpack.c.l.b16 %v709
    %v1517 = vunpack.c.l.b16 %v710
    %v1518 = vunpack.c.l.b16 %v711
    %v1519 = vunpack.c.l.b16 %v712
    %v1520 = vunpack.c.l.b16 %v713
    %v1521 = vunpack.c.l.b16 %v714
    %v1522 = vunpack.c.l.b16 %v715
    %v1523 = vunpack.c.l.b16 %v716
    %v1524 = vunpack.c.l.b16 %v717
    %v1525 = vunpack.c.l.b16 %v718
    %v1526 = vunpack.c.l.b16 %v719
    %v1527 = vunpack.c.l.b16 %v720
    %v1528 = vunpack.c.l.b16 %v721
    %v1529 = vunpack.c.l.b16 %v722
    %v1530 = vunpack.c.l.b16 %v723
    %v1531 = vunpack.c.l.b16 %v724
    %v1532 = vunpack.c.l.b16 %v725
    %v1533 = vunpack.c.l.b16 %v726
    %v1534 = vunpack.c.l.b16 %v727
    %v1535 = vunpack.c.l.b16 %v728
    %v1536 = vunpack.c.l.b16 %v729
    %v1537 = vunpack.c.l.b16 %v730
    %v1538 = vunpack.c.l.b16 %v731
    %v1539 = vunpack.c.l.b16 %v732
    %v1540 = vunpack.c.l.b16 %v733
    %v1541 = vunpack.c.l.b16 %v734
    %v1542 = vunpack.c.l.b16 %v735
    %v1543 = vunpack.c.l.b16 %v736
    %v1544 = vunpack.c.l.b16 %v737
    %v1545 = vunpack.c.l.b16 %v738
    %v1546 = vunpack.c.l.b16 %v739
    %v1547 = vunpack.c.l.b16 %v740
    %v1548 = vunpack.c.l.b16 %v741
    %v1549 = vunpack.c.l.b16 %v742
    %v1550 = vunpack.c.l.b16 %v743
    %v1551 = vunpack.c.l.b16 %v744
    %v1552 = vunpack.c.l.b16 %v745
    %v1553 = vunpack.c.l.b16 %v746
    %v1554 = vunpack.c.l.b16 %v747
    %v1555 = vunpack.c.l.b16 %v748
    %v1556 = vunpack.c.l.b16 %v749
    %v1557 = vunpack.c.l.b16 %v750
    %v1558 = vunpack.c.l.b16 %v751
    %v1559 = vunpack.c.l.b16 %v752
    %v1560 = vunpack.c.l.b16 %v753
    %v1561 = vunpack.c.l.b16 %v754
    %v1562 = vunpack.c.l.b16 %v755
    %v1563 = vunpack.c.l.b16 %v756
    %v1564 = vunpack.c.l.b16 %v757
    %v1565 = vunpack.c.l.b16 %v758
    %v1566 = vunpack.c.l.b16 %v759
    %v1567 = vunpack.c.l.b16 %v760
    %v1568 = vunpack.c.l.b16 %v761
    %v1569 = vunpack.c.l.b16 %v762
    %v1570 = vunpack.c.l.b16 %v763
    %v1571 = vunpack.c.l.b16 %v764
    %v1572 = vunpack.c.l.b16 %v765
    %v1573 = vunpack.c.l.b16 %v766
    %v1574 = vunpack.c.l.b16 %v767
    %v1575 = vunpack.c.l.b16 %v768
    %v1576 = vunpack.c.l.b16 %v769
    %v1577 = vunpack.c.l.b16 %v770
    %v1578 = vunpack.c.l.b16 %v771
    %v1579 = vunpack.c.l.b16 %v772
    %v1580 = vunpack.c.l.b16 %v773
    %v1581 = vunpack.c.l.b16 %v774
    %v1582 = vunpack.c.l.b16 %v775
    %v1583 = vunpack.c.l.b16 %v776
    %v1584 = vunpack.c.l.b16 %v777
    %v1585 = vunpack.c.l.b16 %v778
    %v1586 = vunpack.c.l.b16 %v779
    %v1587 = vunpack.c.l.b16 %v780
    %v1588 = vunpack.c.l.b16 %v781
    %v1589 = vunpack.c.l.b16 %v782
    %v1590 = vunpack.c.l.b16 %v783
    %v1591 = vunpack.c.l.b16 %v784
    %v1592 = vunpack.c.l.b16 %v785
    %v1593 = vunpack.c.l.b16 %v786
    %v1594 = vunpack.c.l.b16 %v787
    %v1595 = vunpack.c.l.b16 %v788
    %v1596 = vunpack.c.l.b16 %v789
    %v1597 = vunpack.c.l.b16 %v790
    %v1598 = vunpack.c.l.b16 %v791
    %v1599 = vunpack.c.l.b16 %v792
    %v1600 = vunpack.c.l.b16 %v793
    %v1601 = vunpack.c.l.b16 %v794
    %v1602 = vunpack.c.l.b16 %v795
    %v1603 = vunpack.c.l.b16 %v796
    %v1604 = vunpack.c.l.b16 %v797
    %v1605 = vunpack.c.l.b16 %v798
    %v1606 = vunpack.c.l.b16 %v799
    %v1607 = vunpack.c.l.b16 %v800
    %v1608 = vunpack.c.l.b16 %v801
    %v1609 = vunpack.c.l.b16 %v802
    %v1610 = vunpack.c.l.b16 %v803
    %v1611 = vunpack.c.l.b16 %v804
    %v1612 = vunpack.c.l.b16 %v805
    %v1613 = vunpack.c.l.b16 %v806
    %v1614 = vunpack.c.l.b16 %v807
    %v1615 = vunpack.c.l.b16 %v808
    %v1616 = vunpack.c.l.b16 %v809
    %v1617 = vunpack.c.l.b16 %v810
    %v1618 = vunpack.c.l.b16 %v811
    %v1619 = vunpack.c.l.b16 %v812
    %v1620 = vunpack.c.l.b16 %v813
    %v1621 = vunpack.c.l.b16 %v814
    %v1622 = vunpack.c.l.b16 %v815
    %v1623 = vunpack.c.l.b16 %v816
    %v1624 = vunpack.c.l.b16 %v817
    %v1625 = vunpack.c.l.b16 %v818
    %v1626 = vunpack.c.l.b16 %v819
    %v1627 = vunpack.c.l.b16 %v820
    %v1628 = vunpack.c.l.b16 %v821
    %v1629 = vunpack.c.l.b16 %v822
    %v1630 = vunpack.c.l.b16 %v823
    %v1631 = vunpack.c.l.b16 %v824
    %v1632 = vunpack.c.l.b16 %v825
    %v1633 = vunpack.c.l.b16 %v826
    %v1634 = vunpack.c.l.b16 %v827
    %v1635 = vunpack.c.l.b16 %v828
    %v1636 = vunpack.c.l.b16 %v829
    %v1637 = vunpack.c.l.b16 %v830
    %v1638 = vunpack.c.l.b16 %v831
    %v1639 = vunpack.c.l.b16 %v832
    %v1640 = vunpack.c.l.b16 %v833
    %v1641 = vunpack.c.l.b16 %v834
    %v1642 = vunpack.c.l.b16 %v835
    %v1643 = vunpack.c.l.b16 %v836
    %v1644 = vunpack.c.l.b16 %v837
    %v1645 = vunpack.c.l.b16 %v838
    %v1646 = vunpack.c.l.b16 %v839
    %v1647 = vunpack.c.l.b16 %v840
    %v1648 = vunpack.c.l.b16 %v841
    %v1649 = vunpack.c.l.b16 %v842
    %v1650 = vunpack.c.l.b16 %v843
    %v1651 = vunpack.c.l.b16 %v844
    %v1652 = vunpack.c.l.b16 %v845
    %v1653 = vunpack.c.l.b16 %v846
    %v1654 = vunpack.c.l.b16 %v847
    %v1655 = vunpack.c.l.b16 %v848
    %v1656 = vunpack.c.l.b16 %v849
    %v1657 = vunpack.c.l.b16 %v850
    %v1658 = vunpack.c.l.b16 %v851
    %v1659 = vunpack.c.l.b16 %v852
    %v1660 = vunpack.c.l.b16 %v853
    %v1661 = vunpack.c.l.b16 %v854
    %v1662 = vunpack.c.l.b16 %v855
    %v1663 = vunpack.c.l.b16 %v856
    %v1664 = vunpack.c.l.b16 %v857
    %v1665 = vunpack.c.l.b16 %v858
    %v1666 = vunpack.c.l.b16 %v859
    %v1667 = vunpack.c.l.b16 %v860
    %v1668 = vunpack.c.l.b16 %v861
    %v1669 = vunpack.c.l.b16 %v862
    %v1670 = vunpack.c.l.b16 %v863
    %v1671 = vunpack.c.l.b16 %v864
    %v1672 = vunpack.c.l.b16 %v865
    %v1673 = vunpack.c.l.b16 %v866
    %v1674 = vunpack.c.l.b16 %v867
    %v1675 = vunpack.c.l.b16 %v868
    %v1676 = vunpack.c.l.b16 %v869
    %v1677 = vunpack.c.l.b16 %v870
    %v1678 = vunpack.c.l.b16 %v871
    %v1679 = vunpack.c.l.b16 %v872
    %v1680 = vunpack.c.l.b16 %v873
    %v1681 = vunpack.c.l.b16 %v874
    %v1682 = vunpack.c.l.b16 %v875
    %v1683 = vunpack.c.l.b16 %v876
    %v1684 = vunpack.c.l.b16 %v877
    %v1685 = vunpack.c.l.b16 %v878
    %v1686 = vunpack.c.l.b16 %v879
    %v1687 = vunpack.c.l.b16 %v880
    %v1688 = vunpack.c.l.b16 %v881
    %v1689 = vunpack.c.l.b16 %v882
    %v1690 = vunpack.c.l.b16 %v883
    %v1691 = vunpack.c.l.b16 %v884
    %v1692 = vunpack.c.l.b16 %v885
    %v1693 = vunpack.c.l.b16 %v886
    %v1694 = vunpack.c.l.b16 %v887
    %v1695 = vunpack.c.l.b16 %v888
    %v1696 = vunpack.c.l.b16 %v889
    %v1697 = vunpack.c.l.b16 %v890
    %v1698 = vunpack.c.l.b16 %v891
    %v1699 = vunpack.c.l.b16 %v892
    %v1700 = vunpack.c.l.b16 %v893
    %v1701 = vunpack.c.l.b16 %v894
    %v1702 = vunpack.c.l.b16 %v895
    %v1703 = vunpack.c.l.b16 %v896
    %v1704 = vunpack.c.l.b16 %v897
    %v1705 = vunpack.c.l.b16 %v898
    %v1706 = vunpack.c.l.b16 %v899
    %v1707 = vunpack.c.l.b16 %v900
    %v1708 = vunpack.c.l.b16 %v901
    %v1709 = vunpack.c.l.b16 %v902
    %v1710 = vunpack.c.l.b16 %v903
    %v1711 = vunpack.c.l.b16 %v904
    %v1712 = vunpack.c.l.b16 %v905
    %v1713 = vunpack.c.l.b16 %v906
    %v1714 = vunpack.c.l.b16 %v907
    %v1715 = vunpack.c.l.b16 %v908
    %v1716 = vunpack.c.l.b16 %v909
    %v1717 = vunpack.c.l.b16 %v910
    %v1718 = vunpack.c.l.b16 %v911
    %v1719 = vunpack.c.l.b16 %v912
    %v1720 = vunpack.c.l.b16 %v913
    %v1721 = vunpack.c.l.b16 %v914
    %v1722 = vunpack.c.l.b16 %v915
    %v1723 = vunpack.c.l.b16 %v916
    %v1724 = vunpack.c.l.b16 %v917
    %v1725 = vunpack.c.l.b16 %v918
    %v1726 = vunpack.c.l.b16 %v919
    %v1727 = vunpack.c.l.b16 %v920
    %v1728 = vunpack.c.l.b16 %v921
    %v1729 = vunpack.c.l.b16 %v922
    %v1730 = vunpack.c.l.b16 %v923
    %v1731 = vunpack.c.l.b16 %v924
    %v1732 = vunpack.c.l.b16 %v925
    %v1733 = vunpack.c.l.b16 %v926
    %v1734 = vunpack.c.l.b16 %v927
    %v1735 = vunpack.c.l.b16 %v928
    %v1736 = vunpack.c.l.b16 %v929
    %v1737 = vunpack.c.l.b16 %v930
    %v1738 = vunpack.c.l.b16 %v931
    %v1739 = vunpack.c.l.b16 %v932
    %v1740 = vunpack.c.l.b16 %v933
    %v1741 = vunpack.c.l.b16 %v934
    %v1742 = vunpack.c.l.b16 %v935
    %v1743 = vunpack.c.l.b16 %v936
    %v1744 = vunpack.c.l.b16 %v937
    %v1745 = vunpack.c.l.b16 %v938
    %v1746 = vunpack.c.l.b16 %v939
    %v1747 = vunpack.c.l.b16 %v940
    %v1748 = vunpack.c.l.b16 %v941
    %v1749 = vunpack.c.l.b16 %v942
    %v1750 = vunpack.c.l.b16 %v943
    %v1751 = vunpack.c.l.b16 %v944
    %v1752 = vunpack.c.l.b16 %v945
    %v1753 = vunpack.c.l.b16 %v946
    %v1754 = vunpack.c.l.b16 %v947
    %v1755 = vunpack.c.l.b16 %v948
    %v1756 = vunpack.c.l.b16 %v949
    %v1757 = vunpack.c.l.b16 %v950
    %v1758 = vunpack.c.l.b16 %v951
    %v1759 = vunpack.c.l.b16 %v952
    %v1760 = vunpack.c.l.b16 %v953
    %v1761 = vunpack.c.l.b16 %v954
    %v1762 = vunpack.c.l.b16 %v955
    %v1763 = vunpack.c.l.b16 %v956
    %v1764 = vunpack.c.l.b16 %v957
    %v1765 = vunpack.c.l.b16 %v958
    %v1766 = vunpack.c.l.b16 %v959
    %v1767 = vunpack.c.l.b16 %v960
    %v1768 = vunpack.c.l.b16 %v961
    %v1769 = vunpack.c.l.b16 %v962
    %v1770 = vunpack.c.l.b16 %v963
    %v1771 = vunpack.c.l.b16 %v964
    %v1772 = vunpack.c.l.b16 %v965
    %v1773 = vunpack.c.l.b16 %v966
    %v1774 = vunpack.c.l.b16 %v967
    %v1775 = vunpack.c.l.b16 %v968
    %v1776 = vunpack.c.l.b16 %v969
    %v1777 = vunpack.c.l.b16 %v970
    %v1778 = vunpack.c.l.b16 %v971
    %v1779 = vunpack.c.l.b16 %v972
    %v1780 = vunpack.c.l.b16 %v973
    %v1781 = vunpack.c.l.b16 %v974
    %v1782 = vunpack.c.l.b16 %v975
    %v1783 = vunpack.c.l.b16 %v976
    %v1784 = vunpack.c.l.b16 %v977
    %v1785 = vunpack.c.l.b16 %v978
    %v1786 = vunpack.c.l.b16 %v979
    %v1787 = vunpack.c.l.b16 %v980
    %v1788 = vunpack.c.l.b16 %v981
    %v1789 = vunpack.c.l.b16 %v982
    %v1790 = vunpack.c.l.b16 %v983
    %v1791 = vunpack.c.l.b16 %v984
    %v1792 = vunpack.c.l.b16 %v985
    %v1793 = vunpack.c.l.b16 %v986
    %v1794 = vunpack.c.l.b16 %v987
    %v1795 = vunpack.c.l.b16 %v988
    %v1796 = vunpack.c.l.b16 %v989
    %v1797 = vunpack.c.l.b16 %v990
    %v1798 = vunpack.c.l.b16 %v991
    %v1799 = vunpack.c.l.b16 %v992
    %v1800 = vunpack.c.l.b16 %v993
    %v1801 = vunpack.c.l.b16 %v994
    %v1802 = vunpack.c.l.b16 %v995
    %v1803 = vunpack.c.l.b16 %v996
    %v1804 = vunpack.c.l.b16 %v997
    %v1805 = vunpack.c.l.b16 %v998
    %v1806 = vunpack.c.l.b16 %v999
    %v1807 = vunpack.c.l.b16 %v1000
    %v1808 = vunpack.c.l.b16 %v1001
    %v1809 = vunpack.c.l.b16 %v1002
    %v1810 = vunpack.c.l.b16 %v1003
    %v1811 = vunpack.c.l.b16 %v1004
    %v1812 = vunpack.c.l.b16 %v1005
    %v1813 = vunpack.c.l.b16 %v1006
    %v1814 = vunpack.c.l.b16 %v1007
    %v1815 = vunpack.c.l.b16 %v1008
    %v1816 = vunpack.c.l.b16 %v1009
    %v1817 = vunpack.c.l.b16 %v1010
    %v1818 = vunpack.c.l.b16 %v1011
    %v1819 = vunpack.c.l.b16 %v1012
    %v1820 = vunpack.c.l.b16 %v1013
    %v1821 = vunpack.c.l.b16 %v1014
    %v1822 = vunpack.c.l.b16 %v1015
    %v1823 = vunpack.c.l.b16 %v1016
    %v1824 = vunpack.c.l.b16 %v1017
    %v1825 = vunpack.c.l.b16 %v1018
    %v1826 = vunpack.c.l.b16 %v1019
    %v1827 = vunpack.c.l.b16 %v1020
    %v1828 = vunpack.c.l.b16 %v1021
    %v1829 = vunpack.c.l.b16 %v1022
    %v1830 = vunpack.c.l.b16 %v1023
    %v1831 = vunpack.c.l.b16 %v1024
    %v1832 = vunpack.c.l.b16 %v1025
    %v1833 = vunpack.c.l.b16 %v1026
    %v1834 = vunpack.c.l.b16 %v1027
    %v1835 = vunpack.c.l.b16 %v1028
    %v1836 = vunpack.c.l.b16 %v1029
    %v1837 = vunpack.c.l.b16 %v1030
    %v1838 = vunpack.c.l.b16 %v1031
    %v1839 = vunpack.c.l.b16 %v1032
    %v1840 = vunpack.c.l.b16 %v1033
    %v1841 = vunpack.c.l.b16 %v1034
    %v1842 = vunpack.c.l.b16 %v1035
    %v1843 = vunpack.c.l.b16 %v1036
    %v1844 = vunpack.c.l.b16 %v1037
    %v1845 = vunpack.c.l.b16 %v1038
    %v1846 = vunpack.c.l.b16 %v1039
    %v1847 = vunpack.c.l.b16 %v1040
    %v1848 = vunpack.c.l.b16 %v1041
    %v1849 = vunpack.c.l.b16 %v1042
    %v1850 = vunpack.c.l.b16 %v1043
    %v1851 = vunpack.c.l.b16 %v1044
    %v1852 = vunpack.c.l.b16 %v1045
    %v1853 = vunpack.c.l.b16 %v1046
    %v1854 = vunpack.c.l.b16 %v1047
    %v1855 = vunpack.c.l.b16 %v1048
    %v1856 = vunpack.c.l.b16 %v1049
    %v1857 = vunpack.c.l.b16 %v1050
    %v1858 = vunpack.c.l.b16 %v1051
    %v1859 = vunpack.c.l.b16 %v1052
    %v1860 = vunpack.c.l.b16 %v1053
    %v1861 = vunpack.c.l.b16 %v1054
    %v1862 = vunpack.c.l.b16 %v1055
    %v1863 = vunpack.c.l.b16 %v1056
    %v1864 = vunpack.c.l.b16 %v1057
    %v1865 = vunpack.c.l.b16 %v1058
    %v1866 = vunpack.c.l.b16 %v1059
    %v1867 = vunpack.c.l.b16 %v1060
    %v1868 = vunpack.c.l.b16 %v1061
    %v1869 = vunpack.c.l.b16 %v1062
    %v1870 = vunpack.c.l.b16 %v1063
    %v1871 = vunpack.c.l.b16 %v1064
    %v1872 = vunpack.c.l.b16 %v1065
    %v1873 = vunpack.c.l.b16 %v1066
    %v1874 = vunpack.c.l.b16 %v1067
    %v1875 = vunpack.c.l.b16 %v1068
    %v1876 = vpack.c.b16 %v1477, %v1476
    %v1877 = vpack.c.b16 %v1479, %v1478
    %v1878 = vpack.c.b16 %v1481, %v1480
    %v1879 = vpack.c.b16 %v1483, %v1482
    %v1880 = vpack.c.b16 %v1485, %v1484
    %v1881 = vpack.c.b16 %v1487, %v1486
    %v1882 = vpack.c.b16 %v1489, %v1488
    %v1883 = vpack.c.b16 %v1491, %v1490
    %v1884 = vpack.c.b16 %v1493, %v1492
    %v1885 = vpack.c.b16 %v1495, %v1494
    %v1886 = vpack.c.b16 %v1497, %v1496
    %v1887 = vpack.c.b16 %v1499, %v1498
    %v1888 = vpack.c.b16 %v1501, %v1500
    %v1889 = vpack.c.b16 %v1503, %v1502
    %v1890 = vpack.c.b16 %v1505, %v1504
    %v1891 = vpack.c.b16 %v1507, %v1506
    %v1892 = vpack.c.b16 %v1509, %v1508
    %v1893 = vpack.c.b16 %v1511, %v1510
    %v1894 = vpack.c.b16 %v1513, %v1512
    %v1895 = vpack.c.b16 %v1515, %v1514
    %v1896 = vpack.c.b16 %v1517, %v1516
    %v1897 = vpack.c.b16 %v1519, %v1518
    %v1898 = vpack.c.b16 %v1521, %v1520
    %v1899 = vpack.c.b16 %v1523, %v1522
    %v1900 = vpack.c.b16 %v1525, %v1524
    %v1901 = vpack.c.b16 %v1527, %v1526
    %v1902 = vpack.c.b16 %v1529, %v1528
    %v1903 = vpack.c.b16 %v1531, %v1530
    %v1904 = vpack.c.b16 %v1533, %v1532
    %v1905 = vpack.c.b16 %v1535, %v1534
    %v1906 = vpack.c.b16 %v1537, %v1536
    %v1907 = vpack.c.b16 %v1539, %v1538
    %v1908 = vpack.c.b16 %v1541, %v1540
    %v1909 = vpack.c.b16 %v1543, %v1542
    %v1910 = vpack.c.b16 %v1545, %v1544
    %v1911 = vpack.c.b16 %v1547, %v1546
    %v1912 = vpack.c.b16 %v1549, %v1548
    %v1913 = vpack.c.b16 %v1551, %v1550
    %v1914 = vpack.c.b16 %v1553, %v1552
    %v1915 = vpack.c.b16 %v1555, %v1554
    %v1916 = vpack.c.b16 %v1557, %v1556
    %v1917 = vpack.c.b16 %v1559, %v1558
    %v1918 = vpack.c.b16 %v1561, %v1560
    %v1919 = vpack.c.b16 %v1563, %v1562
    %v1920 = vpack.c.b16 %v1565, %v1564
    %v1921 = vpack.c.b16 %v1567, %v1566
    %v1922 = vpack.c.b16 %v1569, %v1568
    %v1923 = vpack.c.b16 %v1571, %v1570
    %v1924 = vpack.c.b16 %v1573, %v1572
    %v1925 = vpack.c.b16 %v1575, %v1574
    %v1926 = vpack.c.b16 %v1577, %v1576
    %v1927 = vpack.c.b16 %v1579, %v1578
    %v1928 = vpack.c.b16 %v1581, %v1580
    %v1929 = vpack.c.b16 %v1583, %v1582
    %v1930 = vpack.c.b16 %v1585, %v1584
    %v1931 = vpack.c.b16 %v1587, %v1586
    %v1932 = vpack.c.b16 %v1589, %v1588
    %v1933 = vpack.c.b16 %v1591, %v1590
    %v1934 = vpack.c.b16 %v1593, %v1592
    %v1935 = vpack.c.b16 %v1595, %v1594
    %v1936 = vpack.c.b16 %v1597, %v1596
    %v1937 = vpack.c.b16 %v1599, %v1598
    %v1938 = vpack.c.b16 %v1601, %v1600
    %v1939 = vpack.c.b16 %v1603, %v1602
    %v1940 = vpack.c.b16 %v1605, %v1604
    %v1941 = vpack.c.b16 %v1607, %v1606
    %v1942 = vpack.c.b16 %v1609, %v1608
    %v1943 = vpack.c.b16 %v1611, %v1610
    %v1944 = vpack.c.b16 %v1613, %v1612
    %v1945 = vpack.c.b16 %v1615, %v1614
    %v1946 = vpack.c.b16 %v1617, %v1616
    %v1947 = vpack.c.b16 %v1619, %v1618
    %v1948 = vpack.c.b16 %v1621, %v1620
    %v1949 = vpack.c.b16 %v1623, %v1622
    %v1950 = vpack.c.b16 %v1625, %v1624
    %v1951 = vpack.c.b16 %v1627, %v1626
    %v1952 = vpack.c.b16 %v1629, %v1628
    %v1953 = vpack.c.b16 %v1631, %v1630
    %v1954 = vpack.c.b16 %v1633, %v1632
    %v1955 = vpack.c.b16 %v1635, %v1634
    %v1956 = vpack.c.b16 %v1637, %v1636
    %v1957 = vpack.c.b16 %v1639, %v1638
    %v1958 = vpack.c.b16 %v1641, %v1640
    %v1959 = vpack.c.b16 %v1643, %v1642
    %v1960 = vpack.c.b16 %v1645, %v1644
    %v1961 = vpack.c.b16 %v1647, %v1646
    %v1962 = vpack.c.b16 %v1649, %v1648
    %v1963 = vpack.c.b16 %v1651, %v1650
    %v1964 = vpack.c.b16 %v1653, %v1652
    %v1965 = vpack.c.b16 %v1655, %v1654
    %v1966 = vpack.c.b16 %v1657, %v1656
    %v1967 = vpack.c.b16 %v1659, %v1658
    %v1968 = vpack.c.b16 %v1661, %v1660
    %v1969 = vpack.c.b16 %v1663, %v1662
    %v1970 = vpack.c.b16 %v1665, %v1664
    %v1971 = vpack.c.b16 %v1667, %v1666
    %v1972 = vpack.c.b16 %v1669, %v1668
    %v1973 = vpack.c.b16 %v1671, %v1670
    %v1974 = vpack.c.b16 %v1673, %v1672
    %v1975 = vpack.c.b16 %v1675, %v1674
    %v1976 = vpack.c.b16 %v1677, %v1676
    %v1977 = vpack.c.b16 %v1679, %v1678
    %v1978 = vpack.c.b16 %v1681, %v1680
    %v1979 = vpack.c.b16 %v1683, %v1682
    %v1980 = vpack.c.b16 %v1685, %v1684
    %v1981 = vpack.c.b16 %v1687, %v1686
    %v1982 = vpack.c.b16 %v1689, %v1688
    %v1983 = vpack.c.b16 %v1691, %v1690
    %v1984 = vpack.c.b16 %v1693, %v1692
    %v1985 = vpack.c.b16 %v1695, %v1694
    %v1986 = vpack.c.b16 %v1697, %v1696
    %v1987 = vpack.c.b16 %v1699, %v1698
    %v1988 = vpack.c.b16 %v1701, %v1700
    %v1989 = vpack.c.b16 %v1703, %v1702
    %v1990 = vpack.c.b16 %v1705, %v1704
    %v1991 = vpack.c.b16 %v1707, %v1706
    %v1992 = vpack.c.b16 %v1709, %v1708
    %v1993 = vpack.c.b16 %v1711, %v1710
    %v1994 = vpack.c.b16 %v1713, %v1712
    %v1995 = vpack.c.b16 %v1715, %v1714
    %v1996 = vpack.c.b16 %v1717, %v1716
    %v1997 = vpack.c.b16 %v1719, %v1718
    %v1998 = vpack.c.b16 %v1721, %v1720
    %v1999 = vpack.c.b16 %v1723, %v1722
    %v2000 = vpack.c.b16 %v1725, %v1724
    %v2001 = vpack.c.b16 %v1727, %v1726
    %v2002 = vpack.c.b16 %v1729, %v1728
    %v2003 = vpack.c.b16 %v1731, %v1730
    %v2004 = vpack.c.b16 %v1733, %v1732
    %v2005 = vpack.c.b16 %v1735, %v1734
    %v2006 = vpack.c.b16 %v1737, %v1736
    %v2007 = vpack.c.b16 %v1739, %v1738
    %v2008 = vpack.c.b16 %v1741, %v1740
    %v2009 = vpack.c.b16 %v1743, %v1742
    %v2010 = vpack.c.b16 %v1745, %v1744
    %v2011 = vpack.c.b16 %v1747, %v1746
    %v2012 = vpack.c.b16 %v1749, %v1748
    %v2013 = vpack.c.b16 %v1751, %v1750
    %v2014 = vpack.c.b16 %v1753, %v1752
    %v2015 = vpack.c.b16 %v1755, %v1754
    %v2016 = vpack.c.b16 %v1757, %v1756
    %v2017 = vpack.c.b16 %v1759, %v1758
    %v2018 = vpack.c.b16 %v1761, %v1760
    %v2019 = vpack.c.b16 %v1763, %v1762
    %v2020 = vpack.c.b16 %v1765, %v1764
    %v2021 = vpack.c.b16 %v1767, %v1766
    %v2022 = vpack.c.b16 %v1769, %v1768
    %v2023 = vpack.c.b16 %v1771, %v1770
    %v2024 = vpack.c.b16 %v1773, %v1772
    %v2025 = vpack.c.b16 %v1775, %v1774
    %v2026 = vpack.c.b16 %v1777, %v1776
    %v2027 = vpack.c.b16 %v1779, %v1778
    %v2028 = vpack.c.b16 %v1781, %v1780
    %v2029 = vpack.c.b16 %v1783, %v1782
    %v2030 = vpack.c.b16 %v1785, %v1784
    %v2031 = vpack.c.b16 %v1787, %v1786
    %v2032 = vpack.c.b16 %v1789, %v1788
    %v2033 = vpack.c.b16 %v1791, %v1790
    %v2034 = vpack.c.b16 %v1793, %v1792
    %v2035 = vpack.c.b16 %v1795, %v1794
    %v2036 = vpack.c.b16 %v1797, %v1796
    %v2037 = vpack.c.b16 %v1799, %v1798
    %v2038 = vpack.c.b16 %v1801, %v1800
    %v2039 = vpack.c.b16 %v1803, %v1802
    %v2040 = vpack.c.b16 %v1805, %v1804
    %v2041 = vpack.c.b16 %v1807, %v1806
    %v2042 = vpack.c.b16 %v1809, %v1808
    %v2043 = vpack.c.b16 %v1811, %v1810
    %v2044 = vpack.c.b16 %v1813, %v1812
    %v2045 = vpack.c.b16 %v1815, %v1814
    %v2046 = vpack.c.b16 %v1817, %v1816
    %v2047 = vpack.c.b16 %v1819, %v1818
    %v2048 = vpack.c.b16 %v1821, %v1820
    %v2049 = vpack.c.b16 %v1823, %v1822
    %v2050 = vpack.c.b16 %v1825, %v1824
    %v2051 = vpack.c.b16 %v1827, %v1826
    %v2052 = vpack.c.b16 %v1829, %v1828
    %v2053 = vpack.c.b16 %v1831, %v1830
    %v2054 = vpack.c.b16 %v1833, %v1832
    %v2055 = vpack.c.b16 %v1835, %v1834
    %v2056 = vpack.c.b16 %v1837, %v1836
    %v2057 = vpack.c.b16 %v1839, %v1838
    %v2058 = vpack.c.b16 %v1841, %v1840
    %v2059 = vpack.c.b16 %v1843, %v1842
    %v2060 = vpack.c.b16 %v1845, %v1844
    %v2061 = vpack.c.b16 %v1847, %v1846
    %v2062 = vpack.c.b16 %v1849, %v1848
    %v2063 = vpack.c.b16 %v1851, %v1850
    %v2064 = vpack.c.b16 %v1853, %v1852
    %v2065 = vpack.c.b16 %v1855, %v1854
    %v2066 = vpack.c.b16 %v1857, %v1856
    %v2067 = vpack.c.b16 %v1859, %v1858
    %v2068 = vpack.c.b16 %v1861, %v1860
    %v2069 = vpack.c.b16 %v1863, %v1862
    %v2070 = vpack.c.b16 %v1865, %v1864
    %v2071 = vpack.c.b16 %v1867, %v1866
    %v2072 = vpack.c.b16 %v1869, %v1868
    %v2073 = vpack.c.b16 %v1871, %v1870
    %v2074 = vpack.c.b16 %v1873, %v1872
    %v2075 = vpack.c.b16 %v1875, %v1874
    %2276 = vmatprep.subr.bf16.mxu0 0
    %2277 = vmatpush1.bf16.msra.mxu0 %v1876
    %2278 = vmatprep.subr.bf16.mxu0 0
    %2279 = vmatpush1.bf16.msra.mxu0 %v1877
    %2280 = vmatprep.subr.bf16.mxu0 0
    %2281 = vmatpush1.bf16.msra.mxu0 %v1878
    %2282 = vmatprep.subr.bf16.mxu0 0
    %2283 = vmatpush1.bf16.msra.mxu0 %v1879
    %2284 = vmatprep.subr.bf16.mxu0 0
    %2285 = vmatpush1.bf16.msra.mxu0 %v1880
    %2286 = vmatprep.subr.bf16.mxu0 0
    %2287 = vmatpush1.bf16.msra.mxu0 %v1881
    %2288 = vmatprep.subr.bf16.mxu0 0
    %2289 = vmatpush1.bf16.msra.mxu0 %v1882
    %2290 = vmatprep.subr.bf16.mxu0 0
    %2291 = vmatpush1.bf16.msra.mxu0 %v1883
    %2292 = vmatprep.subr.bf16.mxu0 0
    %2293 = vmatpush1.bf16.msra.mxu0 %v1884
    %2294 = vmatprep.subr.bf16.mxu0 0
    %2295 = vmatpush1.bf16.msra.mxu0 %v1885
    %2296 = vmatprep.subr.bf16.mxu0 0
    %2297 = vmatpush1.bf16.msra.mxu0 %v1886
    %2298 = vmatprep.subr.bf16.mxu0 0
    %2299 = vmatpush1.bf16.msra.mxu0 %v1887
    %2300 = vmatprep.subr.bf16.mxu0 0
    %2301 = vmatpush1.bf16.msra.mxu0 %v1888
    %2302 = vmatprep.subr.bf16.mxu0 0
    %2303 = vmatpush1.bf16.msra.mxu0 %v1889
    %2304 = vmatprep.subr.bf16.mxu0 0
    %2305 = vmatpush1.bf16.msra.mxu0 %v1890
    %2306 = vmatprep.subr.bf16.mxu0 0
    %2307 = vmatpush1.bf16.msra.mxu0 %v1891
    %2308 = vmatprep.mubr.bf16.mxu0 %v645
    %2309 = vmatmul.mubr.bf16.gmra.mrb[0].mxu0 %v644
    %v2310 = vpop.f32.mrb[0].mxu0
    %v2311 = vadd.f32 %v1074, %v2310
    %v2312 = vpop.f32.mrb[0].mxu0
    %v2313 = vpop.f32.mrb[0].mxu0
    %v2314 = vpop.f32.mrb[0].mxu0
    %2315 = vdwg.mxu0
    %2316 = vmatprep.subr.bf16.mxu0 0
    %2317 = vmatpush1.bf16.msra.mxu0 %v1892
    %2318 = vmatprep.subr.bf16.mxu0 0
    %2319 = vmatpush1.bf16.msra.mxu0 %v1893
    %2320 = vmatprep.subr.bf16.mxu0 0
    %2321 = vmatpush1.bf16.msra.mxu0 %v1894
    %2322 = vmatprep.subr.bf16.mxu0 0
    %2323 = vmatpush1.bf16.msra.mxu0 %v1895
    %2324 = vmatprep.subr.bf16.mxu0 0
    %2325 = vmatpush1.bf16.msra.mxu0 %v1896
    %2326 = vmatprep.subr.bf16.mxu0 0
    %2327 = vmatpush1.bf16.msra.mxu0 %v1897
    %2328 = vmatprep.subr.bf16.mxu0 0
    %2329 = vmatpush1.bf16.msra.mxu0 %v1898
    %2330 = vmatprep.subr.bf16.mxu0 0
    %2331 = vmatpush1.bf16.msra.mxu0 %v1899
    %2332 = vmatprep.subr.bf16.mxu0 0
    %2333 = vmatpush1.bf16.msra.mxu0 %v1900
    %2334 = vmatprep.subr.bf16.mxu0 0
    %2335 = vmatpush1.bf16.msra.mxu0 %v1901
    %2336 = vmatprep.subr.bf16.mxu0 0
    %2337 = vmatpush1.bf16.msra.mxu0 %v1902
    %2338 = vmatprep.subr.bf16.mxu0 0
    %2339 = vmatpush1.bf16.msra.mxu0 %v1903
    %2340 = vmatprep.subr.bf16.mxu0 0
    %2341 = vmatpush1.bf16.msra.mxu0 %v1904
    %2342 = vmatprep.subr.bf16.mxu0 0
    %2343 = vmatpush1.bf16.msra.mxu0 %v1905
    %2344 = vmatprep.subr.bf16.mxu0 0
    %2345 = vmatpush1.bf16.msra.mxu0 %v1906
    %2346 = vmatprep.subr.bf16.mxu0 0
    %2347 = vmatpush1.bf16.msra.mxu0 %v1907
    %2348 = vmatprep.mubr.bf16.mxu0 %v647
    %2349 = vmatmul.mubr.bf16.gmra.mrb[0].mxu0 %v646
    %v2350 = vpop.f32.mrb[0].mxu0
    %v2351 = vadd.f32 %v2311, %v2350
    %v2352 = vpop.f32.mrb[0].mxu0
    %v2353 = vpop.f32.mrb[0].mxu0
    %v2354 = vpop.f32.mrb[0].mxu0
    %2355 = vdwg.mxu0
    %2356 = vmatprep.subr.bf16.mxu0 0
    %2357 = vmatpush1.bf16.msra.mxu0 %v1908
    %2358 = vmatprep.subr.bf16.mxu0 0
    %2359 = vmatpush1.bf16.msra.mxu0 %v1909
    %2360 = vmatprep.subr.bf16.mxu0 0
    %2361 = vmatpush1.bf16.msra.mxu0 %v1910
    %2362 = vmatprep.subr.bf16.mxu0 0
    %2363 = vmatpush1.bf16.msra.mxu0 %v1911
    %2364 = vmatprep.subr.bf16.mxu0 0
    %2365 = vmatpush1.bf16.msra.mxu0 %v1912
    %2366 = vmatprep.subr.bf16.mxu0 0
    %2367 = vmatpush1.bf16.msra.mxu0 %v1913
    %2368 = vmatprep.subr.bf16.mxu0 0
    %2369 = vmatpush1.bf16.msra.mxu0 %v1914
    %2370 = vmatprep.subr.bf16.mxu0 0
    %2371 = vmatpush1.bf16.msra.mxu0 %v1915
    %2372 = vmatprep.subr.bf16.mxu0 0
    %2373 = vmatpush1.bf16.msra.mxu0 %v1916
    %2374 = vmatprep.subr.bf16.mxu0 0
    %2375 = vmatpush1.bf16.msra.mxu0 %v1917
    %2376 = vmatprep.subr.bf16.mxu0 0
    %2377 = vmatpush1.bf16.msra.mxu0 %v1918
    %2378 = vmatprep.subr.bf16.mxu0 0
    %2379 = vmatpush1.bf16.msra.mxu0 %v1919
    %2380 = vmatprep.subr.bf16.mxu0 0
    %2381 = vmatpush1.bf16.msra.mxu0 %v1920
    %2382 = vmatprep.subr.bf16.mxu0 0
    %2383 = vmatpush1.bf16.msra.mxu0 %v1921
    %2384 = vmatprep.subr.bf16.mxu0 0
    %2385 = vmatpush1.bf16.msra.mxu0 %v1922
    %2386 = vmatprep.subr.bf16.mxu0 0
    %2387 = vmatpush1.bf16.msra.mxu0 %v1923
    %2388 = vmatprep.mubr.bf16.mxu0 %v649
    %2389 = vmatmul.mubr.bf16.gmra.mrb[0].mxu0 %v648
    %v2390 = vpop.f32.mrb[0].mxu0
    %v2391 = vadd.f32 %v2351, %v2390
    %v2392 = vpop.f32.mrb[0].mxu0
    %v2393 = vpop.f32.mrb[0].mxu0
    %v2394 = vpop.f32.mrb[0].mxu0
    %2395 = vdwg.mxu0
    %2396 = vmatprep.subr.bf16.mxu0 0
    %2397 = vmatpush1.bf16.msra.mxu0 %v1924
    %2398 = vmatprep.subr.bf16.mxu0 0
    %2399 = vmatpush1.bf16.msra.mxu0 %v1925
    %2400 = vmatprep.subr.bf16.mxu0 0
    %2401 = vmatpush1.bf16.msra.mxu0 %v1926
    %2402 = vmatprep.subr.bf16.mxu0 0
    %2403 = vmatpush1.bf16.msra.mxu0 %v1927
    %2404 = vmatprep.subr.bf16.mxu0 0
    %2405 = vmatpush1.bf16.msra.mxu0 %v1928
    %2406 = vmatprep.subr.bf16.mxu0 0
    %2407 = vmatpush1.bf16.msra.mxu0 %v1929
    %2408 = vmatprep.subr.bf16.mxu0 0
    %2409 = vmatpush1.bf16.msra.mxu0 %v1930
    %2410 = vmatprep.subr.bf16.mxu0 0
    %2411 = vmatpush1.bf16.msra.mxu0 %v1931
    %2412 = vmatprep.subr.bf16.mxu0 0
    %2413 = vmatpush1.bf16.msra.mxu0 %v1932
    %2414 = vmatprep.subr.bf16.mxu0 0
    %2415 = vmatpush1.bf16.msra.mxu0 %v1933
    %2416 = vmatprep.subr.bf16.mxu0 0
    %2417 = vmatpush1.bf16.msra.mxu0 %v1934
    %2418 = vmatprep.subr.bf16.mxu0 0
    %2419 = vmatpush1.bf16.msra.mxu0 %v1935
    %2420 = vmatprep.subr.bf16.mxu0 0
    %2421 = vmatpush1.bf16.msra.mxu0 %v1936
    %2422 = vmatprep.subr.bf16.mxu0 0
    %2423 = vmatpush1.bf16.msra.mxu0 %v1937
    %2424 = vmatprep.subr.bf16.mxu0 0
    %2425 = vmatpush1.bf16.msra.mxu0 %v1938
    %2426 = vmatprep.subr.bf16.mxu0 0
    %2427 = vmatpush1.bf16.msra.mxu0 %v1939
    %2428 = vmatprep.mubr.bf16.mxu0 %v651
    %2429 = vmatmul.mubr.bf16.gmra.mrb[0].mxu0 %v650
    %v2430 = vpop.f32.mrb[0].mxu0
    %v2431 = vadd.f32 %v2391, %v2430
    %v2432 = vpop.f32.mrb[0].mxu0
    %v2433 = vpop.f32.mrb[0].mxu0
    %v2434 = vpop.f32.mrb[0].mxu0
    %2435 = vdwg.mxu0
    %2436 = vmatprep.subr.bf16.mxu0 0
    %2437 = vmatpush1.bf16.msra.mxu0 %v1940
    %2438 = vmatprep.subr.bf16.mxu0 0
    %2439 = vmatpush1.bf16.msra.mxu0 %v1941
    %2440 = vmatprep.subr.bf16.mxu0 0
    %2441 = vmatpush1.bf16.msra.mxu0 %v1942
    %2442 = vmatprep.subr.bf16.mxu0 0
    %2443 = vmatpush1.bf16.msra.mxu0 %v1943
    %2444 = vmatprep.subr.bf16.mxu0 0
    %2445 = vmatpush1.bf16.msra.mxu0 %v1944
    %2446 = vmatprep.subr.bf16.mxu0 0
    %2447 = vmatpush1.bf16.msra.mxu0 %v1945
    %2448 = vmatprep.subr.bf16.mxu0 0
    %2449 = vmatpush1.bf16.msra.mxu0 %v1946
    %2450 = vmatprep.subr.bf16.mxu0 0
    %2451 = vmatpush1.bf16.msra.mxu0 %v1947
    %2452 = vmatprep.subr.bf16.mxu0 0
    %2453 = vmatpush1.bf16.msra.mxu0 %v1948
    %2454 = vmatprep.subr.bf16.mxu0 0
    %2455 = vmatpush1.bf16.msra.mxu0 %v1949
    %2456 = vmatprep.subr.bf16.mxu0 0
    %2457 = vmatpush1.bf16.msra.mxu0 %v1950
    %2458 = vmatprep.subr.bf16.mxu0 0
    %2459 = vmatpush1.bf16.msra.mxu0 %v1951
    %2460 = vmatprep.subr.bf16.mxu0 0
    %2461 = vmatpush1.bf16.msra.mxu0 %v1952
    %2462 = vmatprep.subr.bf16.mxu0 0
    %2463 = vmatpush1.bf16.msra.mxu0 %v1953
    %2464 = vmatprep.subr.bf16.mxu0 0
    %2465 = vmatpush1.bf16.msra.mxu0 %v1954
    %2466 = vmatprep.subr.bf16.mxu0 0
    %2467 = vmatpush1.bf16.msra.mxu0 %v1955
    %2468 = vmatprep.mubr.bf16.mxu0 %v653
    %2469 = vmatmul.mubr.bf16.gmra.mrb[0].mxu0 %v652
    %v2470 = vpop.f32.mrb[0].mxu0
    %v2471 = vadd.f32 %v2431, %v2470
    %v2472 = vpop.f32.mrb[0].mxu0
    %v2473 = vpop.f32.mrb[0].mxu0
    %v2474 = vpop.f32.mrb[0].mxu0
    %2475 = vdwg.mxu0
    %2476 = vmatprep.subr.bf16.mxu0 0
    %2477 = vmatpush1.bf16.msra.mxu0 %v1956
    %2478 = vmatprep.subr.bf16.mxu0 0
    %2479 = vmatpush1.bf16.msra.mxu0 %v1957
    %2480 = vmatprep.subr.bf16.mxu0 0
    %2481 = vmatpush1.bf16.msra.mxu0 %v1958
    %2482 = vmatprep.subr.bf16.mxu0 0
    %2483 = vmatpush1.bf16.msra.mxu0 %v1959
    %2484 = vmatprep.subr.bf16.mxu0 0
    %2485 = vmatpush1.bf16.msra.mxu0 %v1960
    %2486 = vmatprep.subr.bf16.mxu0 0
    %2487 = vmatpush1.bf16.msra.mxu0 %v1961
    %2488 = vmatprep.subr.bf16.mxu0 0
    %2489 = vmatpush1.bf16.msra.mxu0 %v1962
    %2490 = vmatprep.subr.bf16.mxu0 0
    %2491 = vmatpush1.bf16.msra.mxu0 %v1963
    %2492 = vmatprep.subr.bf16.mxu0 0
    %2493 = vmatpush1.bf16.msra.mxu0 %v1964
    %2494 = vmatprep.subr.bf16.mxu0 0
    %2495 = vmatpush1.bf16.msra.mxu0 %v1965
    %2496 = vmatprep.subr.bf16.mxu0 0
    %2497 = vmatpush1.bf16.msra.mxu0 %v1966
    %2498 = vmatprep.subr.bf16.mxu0 0
    %2499 = vmatpush1.bf16.msra.mxu0 %v1967
    %2500 = vmatprep.subr.bf16.mxu0 0
    %2501 = vmatpush1.bf16.msra.mxu0 %v1968
    %2502 = vmatprep.subr.bf16.mxu0 0
    %2503 = vmatpush1.bf16.msra.mxu0 %v1969
    %2504 = vmatprep.subr.bf16.mxu0 0
    %2505 = vmatpush1.bf16.msra.mxu0 %v1970
    %2506 = vmatprep.subr.bf16.mxu0 0
    %2507 = vmatpush1.bf16.msra.mxu0 %v1971
    %2508 = vmatprep.mubr.bf16.mxu0 %v655
    %2509 = vmatmul.mubr.bf16.gmra.mrb[0].mxu0 %v654
    %v2510 = vpop.f32.mrb[0].mxu0
    %v2511 = vadd.f32 %v2471, %v2510
    %v2512 = vpop.f32.mrb[0].mxu0
    %v2513 = vpop.f32.mrb[0].mxu0
    %v2514 = vpop.f32.mrb[0].mxu0
    %2515 = vdwg.mxu0
    %2516 = vmatprep.subr.bf16.mxu0 0
    %2517 = vmatpush1.bf16.msra.mxu0 %v1972
    %2518 = vmatprep.subr.bf16.mxu0 0
    %2519 = vmatpush1.bf16.msra.mxu0 %v1973
    %2520 = vmatprep.subr.bf16.mxu0 0
    %2521 = vmatpush1.bf16.msra.mxu0 %v1974
    %2522 = vmatprep.subr.bf16.mxu0 0
    %2523 = vmatpush1.bf16.msra.mxu0 %v1975
    %2524 = vmatprep.subr.bf16.mxu0 0
    %2525 = vmatpush1.bf16.msra.mxu0 %v1976
    %2526 = vmatprep.subr.bf16.mxu0 0
    %2527 = vmatpush1.bf16.msra.mxu0 %v1977
    %2528 = vmatprep.subr.bf16.mxu0 0
    %2529 = vmatpush1.bf16.msra.mxu0 %v1978
    %2530 = vmatprep.subr.bf16.mxu0 0
    %2531 = vmatpush1.bf16.msra.mxu0 %v1979
    %2532 = vmatprep.subr.bf16.mxu0 0
    %2533 = vmatpush1.bf16.msra.mxu0 %v1980
    %2534 = vmatprep.subr.bf16.mxu0 0
    %2535 = vmatpush1.bf16.msra.mxu0 %v1981
    %2536 = vmatprep.subr.bf16.mxu0 0
    %2537 = vmatpush1.bf16.msra.mxu0 %v1982
    %2538 = vmatprep.subr.bf16.mxu0 0
    %2539 = vmatpush1.bf16.msra.mxu0 %v1983
    %2540 = vmatprep.subr.bf16.mxu0 0
    %2541 = vmatpush1.bf16.msra.mxu0 %v1984
    %2542 = vmatprep.subr.bf16.mxu0 0
    %2543 = vmatpush1.bf16.msra.mxu0 %v1985
    %2544 = vmatprep.subr.bf16.mxu0 0
    %2545 = vmatpush1.bf16.msra.mxu0 %v1986
    %2546 = vmatprep.subr.bf16.mxu0 0
    %2547 = vmatpush1.bf16.msra.mxu0 %v1987
    %2548 = vmatprep.mubr.bf16.mxu0 %v657
    %2549 = vmatmul.mubr.bf16.gmra.mrb[0].mxu0 %v656
    %v2550 = vpop.f32.mrb[0].mxu0
    %v2551 = vadd.f32 %v2511, %v2550
    %v2552 = vpop.f32.mrb[0].mxu0
    %v2553 = vpop.f32.mrb[0].mxu0
    %v2554 = vpop.f32.mrb[0].mxu0
    %2555 = vdwg.mxu0
    %2556 = vmatprep.subr.bf16.mxu0 0
    %2557 = vmatpush1.bf16.msra.mxu0 %v1988
    %2558 = vmatprep.subr.bf16.mxu0 0
    %2559 = vmatpush1.bf16.msra.mxu0 %v1989
    %2560 = vmatprep.subr.bf16.mxu0 0
    %2561 = vmatpush1.bf16.msra.mxu0 %v1990
    %2562 = vmatprep.subr.bf16.mxu0 0
    %2563 = vmatpush1.bf16.msra.mxu0 %v1991
    %2564 = vmatprep.subr.bf16.mxu0 0
    %2565 = vmatpush1.bf16.msra.mxu0 %v1992
    %2566 = vmatprep.subr.bf16.mxu0 0
    %2567 = vmatpush1.bf16.msra.mxu0 %v1993
    %2568 = vmatprep.subr.bf16.mxu0 0
    %2569 = vmatpush1.bf16.msra.mxu0 %v1994
    %2570 = vmatprep.subr.bf16.mxu0 0
    %2571 = vmatpush1.bf16.msra.mxu0 %v1995
    %2572 = vmatprep.subr.bf16.mxu0 0
    %2573 = vmatpush1.bf16.msra.mxu0 %v1996
    %2574 = vmatprep.subr.bf16.mxu0 0
    %2575 = vmatpush1.bf16.msra.mxu0 %v1997
    %2576 = vmatprep.subr.bf16.mxu0 0
    %2577 = vmatpush1.bf16.msra.mxu0 %v1998
    %2578 = vmatprep.subr.bf16.mxu0 0
    %2579 = vmatpush1.bf16.msra.mxu0 %v1999
    %2580 = vmatprep.subr.bf16.mxu0 0
    %2581 = vmatpush1.bf16.msra.mxu0 %v2000
    %2582 = vmatprep.subr.bf16.mxu0 0
    %2583 = vmatpush1.bf16.msra.mxu0 %v2001
    %2584 = vmatprep.subr.bf16.mxu0 0
    %2585 = vmatpush1.bf16.msra.mxu0 %v2002
    %2586 = vmatprep.subr.bf16.mxu0 0
    %2587 = vmatpush1.bf16.msra.mxu0 %v2003
    %2588 = vmatprep.mubr.bf16.mxu0 %v659
    %2589 = vmatmul.mubr.bf16.gmra.mrb[0].mxu0 %v658
    %v2590 = vpop.f32.mrb[0].mxu0
    %v2591 = vadd.f32 %v2551, %v2590
    %v2592 = vpop.f32.mrb[0].mxu0
    %v2593 = vpop.f32.mrb[0].mxu0
    %v2594 = vpop.f32.mrb[0].mxu0
    %2595 = vdwg.mxu0
    %2596 = vmatprep.subr.bf16.mxu0 0
    %2597 = vmatpush1.bf16.msra.mxu0 %v2004
    %2598 = vmatprep.subr.bf16.mxu0 0
    %2599 = vmatpush1.bf16.msra.mxu0 %v2005
    %2600 = vmatprep.subr.bf16.mxu0 0
    %2601 = vmatpush1.bf16.msra.mxu0 %v2006
    %2602 = vmatprep.subr.bf16.mxu0 0
    %2603 = vmatpush1.bf16.msra.mxu0 %v2007
    %2604 = vmatprep.subr.bf16.mxu0 0
    %2605 = vmatpush1.bf16.msra.mxu0 %v2008
    %2606 = vmatprep.subr.bf16.mxu0 0
    %2607 = vmatpush1.bf16.msra.mxu0 %v2009
    %2608 = vmatprep.subr.bf16.mxu0 0
    %2609 = vmatpush1.bf16.msra.mxu0 %v2010
    %2610 = vmatprep.subr.bf16.mxu0 0
    %2611 = vmatpush1.bf16.msra.mxu0 %v2011
    %2612 = vmatprep.subr.bf16.mxu0 0
    %2613 = vmatpush1.bf16.msra.mxu0 %v2012
    %2614 = vmatprep.subr.bf16.mxu0 0
    %2615 = vmatpush1.bf16.msra.mxu0 %v2013
    %2616 = vmatprep.subr.bf16.mxu0 0
    %2617 = vmatpush1.bf16.msra.mxu0 %v2014
    %2618 = vmatprep.subr.bf16.mxu0 0
    %2619 = vmatpush1.bf16.msra.mxu0 %v2015
    %2620 = vmatprep.subr.bf16.mxu0 0
    %2621 = vmatpush1.bf16.msra.mxu0 %v2016
    %2622 = vmatprep.subr.bf16.mxu0 0
    %2623 = vmatpush1.bf16.msra.mxu0 %v2017
    %2624 = vmatprep.subr.bf16.mxu0 0
    %2625 = vmatpush1.bf16.msra.mxu0 %v2018
    %2626 = vmatprep.subr.bf16.mxu0 0
    %2627 = vmatpush1.bf16.msra.mxu0 %v2019
    %2628 = vmatprep.mubr.bf16.mxu0 %v661
    %2629 = vmatmul.mubr.bf16.gmra.mrb[0].mxu0 %v660
    %v2630 = vpop.f32.mrb[0].mxu0
    %v2631 = vadd.f32 %v2591, %v2630
    %v2632 = vpop.f32.mrb[0].mxu0
    %v2633 = vpop.f32.mrb[0].mxu0
    %v2634 = vpop.f32.mrb[0].mxu0
    %2635 = vdwg.mxu0
    %2636 = vmatprep.subr.bf16.mxu0 0
    %2637 = vmatpush1.bf16.msra.mxu0 %v2020
    %2638 = vmatprep.subr.bf16.mxu0 0
    %2639 = vmatpush1.bf16.msra.mxu0 %v2021
    %2640 = vmatprep.subr.bf16.mxu0 0
    %2641 = vmatpush1.bf16.msra.mxu0 %v2022
    %2642 = vmatprep.subr.bf16.mxu0 0
    %2643 = vmatpush1.bf16.msra.mxu0 %v2023
    %2644 = vmatprep.subr.bf16.mxu0 0
    %2645 = vmatpush1.bf16.msra.mxu0 %v2024
    %2646 = vmatprep.subr.bf16.mxu0 0
    %2647 = vmatpush1.bf16.msra.mxu0 %v2025
    %2648 = vmatprep.subr.bf16.mxu0 0
    %2649 = vmatpush1.bf16.msra.mxu0 %v2026
    %2650 = vmatprep.subr.bf16.mxu0 0
    %2651 = vmatpush1.bf16.msra.mxu0 %v2027
    %2652 = vmatprep.subr.bf16.mxu0 0
    %2653 = vmatpush1.bf16.msra.mxu0 %v2028
    %2654 = vmatprep.subr.bf16.mxu0 0
    %2655 = vmatpush1.bf16.msra.mxu0 %v2029
    %2656 = vmatprep.subr.bf16.mxu0 0
    %2657 = vmatpush1.bf16.msra.mxu0 %v2030
    %2658 = vmatprep.subr.bf16.mxu0 0
    %2659 = vmatpush1.bf16.msra.mxu0 %v2031
    %2660 = vmatprep.subr.bf16.mxu0 0
    %2661 = vmatpush1.bf16.msra.mxu0 %v2032
    %2662 = vmatprep.subr.bf16.mxu0 0
    %2663 = vmatpush1.bf16.msra.mxu0 %v2033
    %2664 = vmatprep.subr.bf16.mxu0 0
    %2665 = vmatpush1.bf16.msra.mxu0 %v2034
    %2666 = vmatprep.subr.bf16.mxu0 0
    %2667 = vmatpush1.bf16.msra.mxu0 %v2035
    %2668 = vmatprep.mubr.bf16.mxu0 %v663
    %2669 = vmatmul.mubr.bf16.gmra.mrb[0].mxu0 %v662
    %v2670 = vpop.f32.mrb[0].mxu0
    %v2671 = vadd.f32 %v2631, %v2670
    %v2672 = vpop.f32.mrb[0].mxu0
    %v2673 = vpop.f32.mrb[0].mxu0
    %v2674 = vpop.f32.mrb[0].mxu0
    %2675 = vdwg.mxu0
    %2676 = vmatprep.subr.bf16.mxu0 0
    %2677 = vmatpush1.bf16.msra.mxu0 %v2036
    %2678 = vmatprep.subr.bf16.mxu0 0
    %2679 = vmatpush1.bf16.msra.mxu0 %v2037
    %2680 = vmatprep.subr.bf16.mxu0 0
    %2681 = vmatpush1.bf16.msra.mxu0 %v2038
    %2682 = vmatprep.subr.bf16.mxu0 0
    %2683 = vmatpush1.bf16.msra.mxu0 %v2039
    %2684 = vmatprep.subr.bf16.mxu0 0
    %2685 = vmatpush1.bf16.msra.mxu0 %v2040
    %2686 = vmatprep.subr.bf16.mxu0 0
    %2687 = vmatpush1.bf16.msra.mxu0 %v2041
    %2688 = vmatprep.subr.bf16.mxu0 0
    %2689 = vmatpush1.bf16.msra.mxu0 %v2042
    %2690 = vmatprep.subr.bf16.mxu0 0
    %2691 = vmatpush1.bf16.msra.mxu0 %v2043
    %2692 = vmatprep.subr.bf16.mxu0 0
    %2693 = vmatpush1.bf16.msra.mxu0 %v2044
    %2694 = vmatprep.subr.bf16.mxu0 0
    %2695 = vmatpush1.bf16.msra.mxu0 %v2045
    %2696 = vmatprep.subr.bf16.mxu0 0
    %2697 = vmatpush1.bf16.msra.mxu0 %v2046
    %2698 = vmatprep.subr.bf16.mxu0 0
    %2699 = vmatpush1.bf16.msra.mxu0 %v2047
    %2700 = vmatprep.subr.bf16.mxu0 0
    %2701 = vmatpush1.bf16.msra.mxu0 %v2048
    %2702 = vmatprep.subr.bf16.mxu0 0
    %2703 = vmatpush1.bf16.msra.mxu0 %v2049
    %2704 = vmatprep.subr.bf16.mxu0 0
    %2705 = vmatpush1.bf16.msra.mxu0 %v2050
    %2706 = vmatprep.subr.bf16.mxu0 0
    %2707 = vmatpush1.bf16.msra.mxu0 %v2051
    %2708 = vmatprep.mubr.bf16.mxu0 %v665
    %2709 = vmatmul.mubr.bf16.gmra.mrb[0].mxu0 %v664
    %v2710 = vpop.f32.mrb[0].mxu0
    %v2711 = vadd.f32 %v2671, %v2710
    %v2712 = vpop.f32.mrb[0].mxu0
    %v2713 = vpop.f32.mrb[0].mxu0
    %v2714 = vpop.f32.mrb[0].mxu0
    %2715 = vdwg.mxu0
    %2716 = vmatprep.subr.bf16.mxu0 0
    %2717 = vmatpush1.bf16.msra.mxu0 %v2052
    %2718 = vmatprep.subr.bf16.mxu0 0
    %2719 = vmatpush1.bf16.msra.mxu0 %v2053
    %2720 = vmatprep.subr.bf16.mxu0 0
    %2721 = vmatpush1.bf16.msra.mxu0 %v2054
    %2722 = vmatprep.subr.bf16.mxu0 0
    %2723 = vmatpush1.bf16.msra.mxu0 %v2055
    %2724 = vmatprep.subr.bf16.mxu0 0
    %2725 = vmatpush1.bf16.msra.mxu0 %v2056
    %2726 = vmatprep.subr.bf16.mxu0 0
    %2727 = vmatpush1.bf16.msra.mxu0 %v2057
    %2728 = vmatprep.subr.bf16.mxu0 0
    %2729 = vmatpush1.bf16.msra.mxu0 %v2058
    %2730 = vmatprep.subr.bf16.mxu0 0
    %2731 = vmatpush1.bf16.msra.mxu0 %v2059
    %2732 = vmatprep.subr.bf16.mxu0 0
    %2733 = vmatpush1.bf16.msra.mxu0 %v2060
    %2734 = vmatprep.subr.bf16.mxu0 0
    %2735 = vmatpush1.bf16.msra.mxu0 %v2061
    %2736 = vmatprep.subr.bf16.mxu0 0
    %2737 = vmatpush1.bf16.msra.mxu0 %v2062
    %2738 = vmatprep.subr.bf16.mxu0 0
    %2739 = vmatpush1.bf16.msra.mxu0 %v2063
    %2740 = vmatprep.subr.bf16.mxu0 0
    %2741 = vmatpush1.bf16.msra.mxu0 %v2064
    %2742 = vmatprep.subr.bf16.mxu0 0
    %2743 = vmatpush1.bf16.msra.mxu0 %v2065
    %2744 = vmatprep.subr.bf16.mxu0 0
    %2745 = vmatpush1.bf16.msra.mxu0 %v2066
    %2746 = vmatprep.subr.bf16.mxu0 0
    %2747 = vmatpush1.bf16.msra.mxu0 %v2067
    %2748 = vmatprep.mubr.bf16.mxu0 %v667
    %2749 = vmatmul.mubr.bf16.gmra.mrb[0].mxu0 %v666
    %v2750 = vpop.f32.mrb[0].mxu0
    %v2751 = vadd.f32 %v2711, %v2750
    %v2752 = vpop.f32.mrb[0].mxu0
    %v2753 = vpop.f32.mrb[0].mxu0
    %v2754 = vpop.f32.mrb[0].mxu0
    %2755 = vdwg.mxu0
    %2756 = vmatprep.subr.bf16.mxu0 0
    %2757 = vmatpush1.bf16.msra.mxu0 %v2068
    %2758 = vmatprep.subr.bf16.mxu0 0
    %2759 = vmatpush1.bf16.msra.mxu0 %v2069
    %2760 = vmatprep.subr.bf16.mxu0 0
    %2761 = vmatpush1.bf16.msra.mxu0 %v2070
    %2762 = vmatprep.subr.bf16.mxu0 0
    %2763 = vmatpush1.bf16.msra.mxu0 %v2071
    %2764 = vmatprep.subr.bf16.mxu0 0
    %2765 = vmatpush1.bf16.msra.mxu0 %v2072
    %2766 = vmatprep.subr.bf16.mxu0 0
    %2767 = vmatpush1.bf16.msra.mxu0 %v2073
    %2768 = vmatprep.subr.bf16.mxu0 0
    %2769 = vmatpush1.bf16.msra.mxu0 %v2074
    %2770 = vmatprep.subr.bf16.mxu0 0
    %2771 = vmatpush1.bf16.msra.mxu0 %v2075
    %2772 = vmatprep.subr.bf16.mxu0 0
    %2773 = vmatpush1.bf16.msra.mxu0 0
    %2774 = vmatprep.subr.bf16.mxu0 0
    %2775 = vmatpush1.bf16.msra.mxu0 0
    %2776 = vmatprep.subr.bf16.mxu0 0
    %2777 = vmatpush1.bf16.msra.mxu0 0
    %2778 = vmatprep.subr.bf16.mxu0 0
    %2779 = vmatpush1.bf16.msra.mxu0 0
    %2780 = vmatprep.subr.bf16.mxu0 0
    %2781 = vmatpush1.bf16.msra.mxu0 0
    %2782 = vmatprep.subr.bf16.mxu0 0
    %2783 = vmatpush1.bf16.msra.mxu0 0
    %2784 = vmatprep.subr.bf16.mxu0 0
    %2785 = vmatpush1.bf16.msra.mxu0 0
    %2786 = vmatprep.subr.bf16.mxu0 0
    %2787 = vmatpush1.bf16.msra.mxu0 0
    %2788 = vmatprep.mubr.bf16.mxu0 0
    %2789 = vmatmul.mubr.bf16.gmra.mrb[0].mxu0 %v668
    %v2790 = vpop.f32.mrb[0].mxu0
    %v2791 = vadd.f32 %v2751, %v2790
    %v2792 = vpop.f32.mrb[0].mxu0
    %v2793 = vpop.f32.mrb[0].mxu0
    %v2794 = vpop.f32.mrb[0].mxu0
    %2795 = vdwg.mxu0
    %v2796 = vmax.f32 %v2791, 0.0
    %2797 = vst [vmem:[#allocation4] sm:$0x3] %v2796
    %v2798 = vpack.c.bf16 %v2796, %v2796
    %v2799 = vld [vmem:[%s5] sm:$0xf]
    %v2800 = vld [vmem:[%s5 + $0x4] sm:$0xf]
    %v2801 = vld [vmem:[%s5 + $0x8] sm:$0xf]
    %v2802 = vld [vmem:[%s5 + $0xc] sm:$0xf]
    %v2803 = vld [vmem:[%s5 + $0x10] sm:$0xf]
    %v2804 = vld [vmem:[%s5 + $0x14] sm:$0xf]
    %v2805 = vld [vmem:[%s5 + $0x18] sm:$0xf]
    %v2806 = vld [vmem:[%s5 + $0x1c] sm:$0xf]
    %v2807 = vld [vmem:[%s5 + $0x20] sm:$0xf]
    %v2808 = vld [vmem:[%s5 + $0x24] sm:$0xf]
    %v2809 = vld [vmem:[%s5 + $0x28] sm:$0xf]
    %v2810 = vld [vmem:[%s5 + $0x2c] sm:$0xf]
    %v2811 = vld [vmem:[%s5 + $0x30] sm:$0xf]
    %v2812 = vld [vmem:[%s5 + $0x34] sm:$0xf]
    %v2813 = vld [vmem:[%s5 + $0x38] sm:$0xf]
    %v2814 = vld [vmem:[%s5 + $0x3c] sm:$0xf]
    %v2815 = vld [vmem:[%s6] sm:$0x1]
    %v2817 = vlaneseq
    %v2818 = vshrl.u32 %v2817, 7
    %v2819 = vsub.s32 0, %v2818
    %v2820 = vrot.slane %v2815, %v2819
    %v2838 = vunpack.c.l.b16 %v2799
    %v2839 = vunpack.c.l.b16 %v2800
    %v2840 = vunpack.c.l.b16 %v2801
    %v2841 = vunpack.c.l.b16 %v2802
    %v2842 = vunpack.c.l.b16 %v2803
    %v2843 = vunpack.c.l.b16 %v2804
    %v2844 = vunpack.c.l.b16 %v2805
    %v2845 = vunpack.c.l.b16 %v2806
    %v2846 = vunpack.c.l.b16 %v2807
    %v2847 = vunpack.c.l.b16 %v2808
    %v2848 = vunpack.c.l.b16 %v2809
    %v2849 = vunpack.c.l.b16 %v2810
    %v2850 = vunpack.c.l.b16 %v2811
    %v2851 = vunpack.c.l.b16 %v2812
    %v2852 = vunpack.c.l.b16 %v2813
    %v2853 = vunpack.c.l.b16 %v2814
    %v2854 = vpack.c.b16 %v2839, %v2838
    %v2855 = vpack.c.b16 %v2841, %v2840
    %v2856 = vpack.c.b16 %v2843, %v2842
    %v2857 = vpack.c.b16 %v2845, %v2844
    %v2858 = vpack.c.b16 %v2847, %v2846
    %v2859 = vpack.c.b16 %v2849, %v2848
    %v2860 = vpack.c.b16 %v2851, %v2850
    %v2861 = vpack.c.b16 %v2853, %v2852
    %2870 = vmatprep.subr.bf16.mxu0 0
    %2871 = vmatpush1.bf16.msra.mxu0 %v2854
    %2872 = vmatprep.subr.bf16.mxu0 0
    %2873 = vmatpush1.bf16.msra.mxu0 %v2855
    %2874 = vmatprep.subr.bf16.mxu0 0
    %2875 = vmatpush1.bf16.msra.mxu0 %v2856
    %2876 = vmatprep.subr.bf16.mxu0 0
    %2877 = vmatpush1.bf16.msra.mxu0 %v2857
    %2878 = vmatprep.subr.bf16.mxu0 0
    %2879 = vmatpush1.bf16.msra.mxu0 %v2858
    %2880 = vmatprep.subr.bf16.mxu0 0
    %2881 = vmatpush1.bf16.msra.mxu0 %v2859
    %2882 = vmatprep.subr.bf16.mxu0 0
    %2883 = vmatpush1.bf16.msra.mxu0 %v2860
    %2884 = vmatprep.subr.bf16.mxu0 0
    %2885 = vmatpush1.bf16.msra.mxu0 %v2861
    %2886 = vmatprep.subr.bf16.mxu0 0
    %2887 = vmatpush1.bf16.msra.mxu0 0
    %2888 = vmatprep.subr.bf16.mxu0 0
    %2889 = vmatpush1.bf16.msra.mxu0 0
    %2890 = vmatprep.subr.bf16.mxu0 0
    %2891 = vmatpush1.bf16.msra.mxu0 0
    %2892 = vmatprep.subr.bf16.mxu0 0
    %2893 = vmatpush1.bf16.msra.mxu0 0
    %2894 = vmatprep.subr.bf16.mxu0 0
    %2895 = vmatpush1.bf16.msra.mxu0 0
    %2896 = vmatprep.subr.bf16.mxu0 0
    %2897 = vmatpush1.bf16.msra.mxu0 0
    %2898 = vmatprep.subr.bf16.mxu0 0
    %2899 = vmatpush1.bf16.msra.mxu0 0
    %2900 = vmatprep.subr.bf16.mxu0 0
    %2901 = vmatpush1.bf16.msra.mxu0 0
    %2902 = vmatprep.mubr.bf16.mxu0 0
    %2903 = vmatmul.mubr.bf16.gmra.mrb[0].mxu0 %v2798
    %v2904 = vpop.f32.mrb[0].mxu0
    %v2905 = vadd.f32 %v2820, %v2904
    %v2906 = vpop.f32.mrb[0].mxu0
    %v2907 = vpop.f32.mrb[0].mxu0
    %v2908 = vpop.f32.mrb[0].mxu0
    %2909 = vdwg.mxu0
    %v2910 = vlaneseq
    %v2911 = vand.u32 %v2910, 127
    %vm2912 = vcmp.lt.s32.totalorder %v2911, 10
    %v2913 = vsel %vm2912, %v2905, -1e+30
    %vm2914 = vcmask 1041408
    %v2915 = vsel %vm2914, %v2913, -inf
    %2916 = vmax.xlane.f32.xlu0 %v2915
    %v2917 = vpop.xlane.xlu0 %2916
    %v2918 = vsub.f32 %v2913, %v2917
    %v2919 = vmul.f32 %v2918, 1.442695
    %v2920 = vpow.pop %v2919
    %v2921 = vsel %vm2914, %v2920, 0.0
    %2922 = vadd.xlane.f32.xlu0 %v2921
    %v2923 = vpop.xlane.xlu0 %2922
    %v2924 = vlog2.pop %v2923
    %v2925 = vmul.f32 %v2924, 0.6931472
    %v2926 = vsub.f32 %v2918, %v2925
    %2927 = vst [vmem:[#allocation2] sm:$0x3] %v2926
    // Predicated region
    $region30: #{net_forward.3} parent=1 // pred_check
      _
    $region31: #{net_forward.3} parent=1 // pred_check_branch
      %2929 = sbr.rel (0) target = $region33
    $region32: #{net_forward.3} parent=1 // pred_region
      %s2931 = ssub.s32 32, 32
      %2932 = vsyncadd [#allocation3], %s2931
      %s2934 = sshll.u32 [#allocation2], 4
      %s2935 = int_to_ptr.vmem [resolvable:$true] %s2934
      %2937 = dma.vmem_to_hbm [thread:$0]  %s2935, 32, %s7, [#allocation3]
    $region33: #{net_forward.3} parent=1 // pred_fallthru
      _
    // Predicated region
    $region34: #{net_forward.3} parent=1 // pred_check
      _
    $region35: #{net_forward.3} parent=1 // pred_check_branch
      %2939 = sbr.rel (0) target = $region37
    $region36: #{net_forward.3} parent=1 // pred_region
      %s2941 = ssub.s32 32, 32
      %2942 = vsyncadd [#allocation5], %s2941
      %s2944 = sshll.u32 [#allocation4], 4
      %s2945 = int_to_ptr.vmem [resolvable:$true] %s2944
      %2947 = dma.vmem_to_hbm [thread:$0]  %s2945, 32, %s8, [#allocation5]
    $region37: #{net_forward.3} parent=1 // pred_fallthru
      _
    // Predicated region
    $region38: #{net_forward.3} parent=1 // pred_check
      _
    $region39: #{net_forward.3} parent=1 // pred_check_branch
      %2949 = sbr.rel (0) target = $region41
    $region40: #{net_forward.3} parent=1 // pred_region
      %2950 = dma.done [#allocation3], 32
    $region41: #{net_forward.3} parent=1 // pred_fallthru
      _
    // Predicated region
    $region42: #{net_forward.3} parent=1 // pred_check
      _
    $region43: #{net_forward.3} parent=1 // pred_check_branch
      %2952 = sbr.rel (0) target = $region45
    $region44: #{net_forward.3} parent=1 // pred_region
      %2953 = dma.done [#allocation5], 32
    $region45: #{net_forward.3} parent=1 // pred_fallthru
      _
    %2954 = vsyncpa [#allocation3], 1
    %2955 = vsyncpa [#allocation5], 1

</llo_original>
